<compile_context>
chip_gen: v7x
topology: tpu7x:2x2x1
jax: 0.10.0
libtpu: 0.0.40
codegen_flags: <defaults>
</compile_context>

<pallas_src>
import functools

import jax
import jax.numpy as jnp
from jax.experimental import pallas as pl
from jax.experimental.pallas import tpu as pltpu

IN_FEATURES = 320        # MODEL_PARAMS['features_per_stage'][-1]
HIDDEN_FEATURES = 128
NUM_CLASSES = 3

_TILE_BYTES_TARGET = 10 * 1024 * 1024   # per streamed buffer (~8192 f32 lanes at C=320)
_MAX_BATCH_BLOCK = 64                   # cap on folded batch elements per grid step
_STREAM_BUFFER_DEPTH = 3                # requested pipeline depth for the streamed input
_VMEM_LIMIT_BYTES = 40 * 1024 * 1024    # <= ~48 MiB of v7x's 64 MiB physical VMEM


def _head_kernel(inv_s, rem_last,
                 x_ref, w1_ref, b1_ref, w2_ref, b2_ref, o_ref, acc_ref):
    """Grid = (batch_blocks, spatial_tiles).

    x_ref  : (bB, C, tS)   streamed bottleneck tile
    acc_ref: (bB, C) f32   running per-(batch, channel) spatial sums
    o_ref  : (bB, 1, nc)   logits for this batch block
    """
    s_idx = pl.program_id(1)
    n_s = pl.num_programs(1)
    t_s = x_ref.shape[-1]

    @pl.when(s_idx == 0)
    def _init():
        acc_ref[...] = jnp.zeros_like(acc_ref)

    def _accumulate(xv):
        # VPU lane-axis reduction; no MXU-operand transpose of the big tile.
        acc_ref[...] += jnp.sum(xv.astype(jnp.float32), axis=-1)

    if rem_last == t_s:
        # Spatial extent divides the tile (or single full tile): no masking.
        _accumulate(x_ref[...])
    else:
        is_last = s_idx == n_s - 1

        @pl.when(jnp.logical_not(is_last))
        def _full():
            _accumulate(x_ref[...])

        @pl.when(is_last)
        def _ragged():
            x = x_ref[...]
            lane = jax.lax.broadcasted_iota(jnp.int32, x.shape, 2)
            _accumulate(jnp.where(lane < rem_last, x, jnp.zeros_like(x)))

    @pl.when(s_idx == n_s - 1)
    def _finalize():
        pooled = acc_ref[...] * inv_s                                    # (bB, C)
        w1 = w1_ref[...].astype(jnp.float32)
        b1 = b1_ref[...].astype(jnp.float32)
        w2 = w2_ref[...].astype(jnp.float32)
        b2 = b2_ref[...].astype(jnp.float32)
        h = jnp.dot(pooled, w1, preferred_element_type=jnp.float32) + b1  # (bB, H)
        h = jnp.maximum(h, 0.0)                                           # ReLU
        logits = jnp.dot(h, w2, preferred_element_type=jnp.float32) + b2  # (bB, nc)
        o_ref[...] = logits[:, None, :].astype(o_ref.dtype)


def _choose_tiling(batch, spatial, channels, itemsize, max_spatial_tile):
    """Pick (batch_block, spatial_tile).

    Large-S: stream the spatial axis with ~10 MiB tiles (128-lane aligned),
    one batch element per step.  Small-S: whole spatial extent in one tile and
    several batch elements folded per step (one contiguous DMA)."""
    if max_spatial_tile is None:
        lanes = _TILE_BYTES_TARGET // (channels * itemsize)
        max_spatial_tile = max(128, (lanes // 128) * 128)
    if spatial > max_spatial_tile:
        t_s = max(128, (max_spatial_tile // 128) * 128)   # 128-lane aligned
        b_b = 1
    else:
        t_s = spatial                                      # full-dim block (always legal)
        b_b = min(batch, _MAX_BATCH_BLOCK,
                  max(1, max_spatial_tile // max(spatial, 1)))
    return b_b, t_s


def _stream_spec(block_shape, index_map, num_steps, depth):
    """BlockSpec for the streamed input; request deeper pipelining when the
    spatial loop is long enough for it to matter."""
    if depth is not None and depth > 2 and num_steps >= depth + 1 \
            and hasattr(pl, "Buffered"):
        try:
            return pl.BlockSpec(block_shape, index_map,
                                pipeline_mode=pl.Buffered(depth))
        except TypeError:
            pass
    return pl.BlockSpec(block_shape, index_map)


def uumamba_head(bottleneck_ncdhw, w1, b1, w2, b2, *,
                 max_spatial_tile=None, stream_buffers=_STREAM_BUFFER_DEPTH):
    """Global 3D average pool + fc1/ReLU/fc2 head of UUMambaWrapper.

    bottleneck_ncdhw: (B, C, D, H, W), f32 or bf16 (bf16 halves HBM traffic;
                      accumulation and the MLP stay f32 regardless).
    w1: (C, hidden)   b1: (1, hidden)
    w2: (hidden, nc)  b2: (1, nc)
    Returns (B, nc) float32 logits.
    """
    B, C, D, H, W = bottleneck_ncdhw.shape
    S = D * H * W
    num_classes = w2.shape[1]

    # Free reshape for the default contiguous NCDHW layout -- no HBM copy.
    # TODO(synk): if the backbone emits a non-default layout under jit, read
    # the 5-D tensor directly with a (bB, C, tD, H, W) BlockSpec instead.
    x = bottleneck_ncdhw.reshape(B, C, S)

    b_b, t_s = _choose_tiling(B, S, C, x.dtype.itemsize, max_spatial_tile)
    num_b = pl.cdiv(B, b_b)
    num_s = pl.cdiv(S, t_s)
    rem_last = S - (num_s - 1) * t_s        # valid lanes in the last spatial tile
    inv_s = 1.0 / float(S)

    grid_spec = pltpu.PrefetchScalarGridSpec(
        num_scalar_prefetch=0,
        grid=(num_b, num_s),
        in_specs=[
            # Streamed bottleneck tiles: the only real HBM traffic.
            _stream_spec((b_b, C, t_s), lambda b, s: (b, 0, s),
                         num_s, stream_buffers),
            # Weights / biases: constant block index -> DMA'd once, VMEM-resident.
            pl.BlockSpec(w1.shape, lambda b, s: (0, 0)),
            pl.BlockSpec(b1.shape, lambda b, s: (0, 0)),
            pl.BlockSpec(w2.shape, lambda b, s: (0, 0)),
            pl.BlockSpec(b2.shape, lambda b, s: (0, 0)),
        ],
        out_specs=pl.BlockSpec((b_b, 1, num_classes), lambda b, s: (b, 0, 0)),
        scratch_shapes=[pltpu.VMEM((b_b, C), jnp.float32)],
    )

    out = pl.pallas_call(
        functools.partial(_head_kernel, inv_s, rem_last),
        out_shape=jax.ShapeDtypeStruct((B, 1, num_classes), jnp.float32),
        grid_spec=grid_spec,
        compiler_params=pltpu.CompilerParams(
            # Batch blocks shard across TensorCores (no-op on single-TC chips);
            # the spatial-tile axis carries the accumulator -> arbitrary.
            dimension_semantics=("parallel", "arbitrary"),
            vmem_limit_bytes=_VMEM_LIMIT_BYTES,
        ),
    )(x, w1, b1, w2, b2)
    return out.reshape(B, num_classes)


def _reference_head(bottleneck_ncdhw, w1, b1, w2, b2):
    pooled = jnp.mean(bottleneck_ncdhw.astype(jnp.float32), axis=(2, 3, 4))  # (B, C)
    h = jnp.maximum(pooled @ w1 + b1, 0.0)
    return h @ w2 + b2


if __name__ == "__main__":
    key = jax.random.PRNGKey(0)
    k_x1, k_x2, k_w1, k_b1, k_w2, k_b2 = jax.random.split(key, 6)

    # Deterministic parameters (torch Linear stores (out, in); we keep (in, out)).
    fan1 = IN_FEATURES ** -0.5
    w1 = jax.random.uniform(k_w1, (IN_FEATURES, HIDDEN_FEATURES),
                            minval=-fan1, maxval=fan1, dtype=jnp.float32)
    b1 = jax.random.uniform(k_b1, (1, HIDDEN_FEATURES),
                            minval=-fan1, maxval=fan1, dtype=jnp.float32)
    fan2 = HIDDEN_FEATURES ** -0.5
    w2 = jax.random.uniform(k_w2, (HIDDEN_FEATURES, NUM_CLASSES),
                            minval=-fan2, maxval=fan2, dtype=jnp.float32)
    b2 = jax.random.uniform(k_b2, (1, NUM_CLASSES),
                            minval=-fan2, maxval=fan2, dtype=jnp.float32)

    # Case 1: realistic nnU-Net bottleneck extent (small S, single spatial tile,
    # batch elements folded into one grid step).
    B1, D1, H1, W1 = 2, 4, 4, 4
    x1 = jax.random.normal(k_x1, (B1, IN_FEATURES, D1, H1, W1), dtype=jnp.float32)
    out1 = jax.block_until_ready(uumamba_head(x1, w1, b1, w2, b2))
    ref1 = _reference_head(x1, w1, b1, w2, b2)
    assert out1.shape == (B1, NUM_CLASSES)
    assert jnp.allclose(out1, ref1, atol=1e-4, rtol=1e-4), (out1, ref1)

    # Case 2: force the multi-tile streaming path with a ragged last spatial
    # tile (S = 5*5*13 = 325; 128-lane tiles -> 3 steps, 69 valid lanes last).
    B2, D2, H2, W2 = 2, 5, 5, 13
    x2 = jax.random.normal(k_x2, (B2, IN_FEATURES, D2, H2, W2), dtype=jnp.float32)
    out2 = jax.block_until_ready(
        uumamba_head(x2, w1, b1, w2, b2, max_spatial_tile=128))
    ref2 = _reference_head(x2, w1, b1, w2, b2)
    assert out2.shape == (B2, NUM_CLASSES)
    assert jnp.allclose(out2, ref2, atol=1e-4, rtol=1e-4), (out2, ref2)

    print("KERNEL_OK")
</pallas_src>

<mosaic_0001>
module attributes {stable_mosaic.version = 11 : i64} {
  func.func @_head_kernel(%arg0: i32, %arg1: i32, %arg2: memref<2x320x64xf32, #tpu.memory_space<vmem>>, %arg3: memref<320x128xf32, #tpu.memory_space<vmem>>, %arg4: memref<1x128xf32, #tpu.memory_space<vmem>>, %arg5: memref<128x3xf32, #tpu.memory_space<vmem>>, %arg6: memref<1x3xf32, #tpu.memory_space<vmem>>, %arg7: memref<2x1x3xf32, #tpu.memory_space<vmem>>, %arg8: memref<2x320xf32, #tpu.memory_space<vmem>>) attributes {dimension_semantics = [#tpu.dimension_semantics<parallel>, #tpu.dimension_semantics<arbitrary>], iteration_bounds = array<i64: 1, 1>, scalar_prefetch = 0 : i64, scratch_operands = 1 : i64, tpu.core_type = #tpu.core_type<tc>, window_params = [{transform_indices = @transform_0, window_bounds = array<i64: 2, 320, 64>}, {pipeline_mode = #tpu.pipeline_mode<synchronous>, transform_indices = @transform_1, window_bounds = array<i64: 320, 128>}, {pipeline_mode = #tpu.pipeline_mode<synchronous>, transform_indices = @transform_2, window_bounds = array<i64: 1, 128>}, {pipeline_mode = #tpu.pipeline_mode<synchronous>, transform_indices = @transform_3, window_bounds = array<i64: 128, 3>}, {pipeline_mode = #tpu.pipeline_mode<synchronous>, transform_indices = @transform_4, window_bounds = array<i64: 1, 3>}, {transform_indices = @transform_5, window_bounds = array<i64: 2, 1, 3>}]} {
    %c0_i32 = arith.constant 0 : i32
    %0 = arith.cmpi eq, %arg1, %c0_i32 : i32
    %1 = arith.extui %0 : i1 to i32
    %c0_i32_0 = arith.constant 0 : i32
    %2 = arith.cmpi ne, %1, %c0_i32_0 : i32
    scf.if %2 {
      %cst_9 = arith.constant 0.000000e+00 : f32
      %11 = vector.broadcast %cst_9 : f32 to vector<2x320xf32>
      %c0_10 = arith.constant 0 : index
      %c0_11 = arith.constant 0 : index
      %12 = vector.load %arg8[%c0_10, %c0_11] : memref<2x320xf32, #tpu.memory_space<vmem>>, vector<2x320xf32>
      tpu.vector_store %arg8[%c0_10, %c0_11], %11 {strides = array<i32>} : memref<2x320xf32, #tpu.memory_space<vmem>>, vector<2x320xf32>,
    } else {
    }
    %c0 = arith.constant 0 : index
    %c0_1 = arith.constant 0 : index
    %c0_2 = arith.constant 0 : index
    %3 = vector.load %arg2[%c0, %c0_1, %c0_2] : memref<2x320x64xf32, #tpu.memory_space<vmem>>, vector<2x320x64xf32>
    %c0_3 = arith.constant 0 : index
    %c0_4 = arith.constant 0 : index
    %4 = vector.load %arg8[%c0_3, %c0_4] : memref<2x320xf32, #tpu.memory_space<vmem>>, vector<2x320xf32>
    %cst = arith.constant dense<0.000000e+00> : vector<2x320xf32>
    %5 = vector.multi_reduction <add>, %3, %cst [2] : vector<2x320x64xf32> to vector<2x320xf32>
    %6 = arith.addf %4, %5 : vector<2x320xf32>
    %c0_5 = arith.constant 0 : index
    %c0_6 = arith.constant 0 : index
    %7 = vector.load %arg8[%c0_5, %c0_6] : memref<2x320xf32, #tpu.memory_space<vmem>>, vector<2x320xf32>
    tpu.vector_store %arg8[%c0_5, %c0_6], %6 {strides = array<i32>} : memref<2x320xf32, #tpu.memory_space<vmem>>, vector<2x320xf32>,
    %c0_i32_7 = arith.constant 0 : i32
    %8 = arith.cmpi eq, %arg1, %c0_i32_7 : i32
    %9 = arith.extui %8 : i1 to i32
    %c0_i32_8 = arith.constant 0 : i32
    %10 = arith.cmpi ne, %9, %c0_i32_8 : i32
    scf.if %10 {
      %c0_9 = arith.constant 0 : index
      %c0_10 = arith.constant 0 : index
      %11 = vector.load %arg8[%c0_9, %c0_10] : memref<2x320xf32, #tpu.memory_space<vmem>>, vector<2x320xf32>
      %cst_11 = arith.constant 1.562500e-02 : f32
      %12 = vector.broadcast %cst_11 : f32 to vector<2x320xf32>
      %13 = arith.mulf %11, %12 : vector<2x320xf32>
      %c0_12 = arith.constant 0 : index
      %c0_13 = arith.constant 0 : index
      %14 = vector.load %arg3[%c0_12, %c0_13] : memref<320x128xf32, #tpu.memory_space<vmem>>, vector<320x128xf32>
      %c0_14 = arith.constant 0 : index
      %c0_15 = arith.constant 0 : index
      %15 = vector.load %arg4[%c0_14, %c0_15] : memref<1x128xf32, #tpu.memory_space<vmem>>, vector<1x128xf32>
      %c0_16 = arith.constant 0 : index
      %c0_17 = arith.constant 0 : index
      %16 = vector.load %arg5[%c0_16, %c0_17] : memref<128x3xf32, #tpu.memory_space<vmem>>, vector<128x3xf32>
      %c0_18 = arith.constant 0 : index
      %c0_19 = arith.constant 0 : index
      %17 = vector.load %arg6[%c0_18, %c0_19] : memref<1x3xf32, #tpu.memory_space<vmem>>, vector<1x3xf32>
      %cst_20 = arith.constant dense<0.000000e+00> : vector<2x128xf32>
      %18 = tpu.matmul %13, %14, %cst_20 {dimension_numbers = #tpu.dot_dimension_numbers<[1], [0], [0], [1], [0, 0, 1, 1], [], []>} : vector<2x320xf32>, vector<320x128xf32>, vector<2x128xf32> -> vector<2x128xf32>
      %19 = vector.broadcast %15 : vector<1x128xf32> to vector<2x128xf32>
      %20 = arith.addf %18, %19 : vector<2x128xf32>
      %cst_21 = arith.constant 0.000000e+00 : f32
      %21 = vector.broadcast %cst_21 : f32 to vector<2x128xf32>
      %22 = arith.maximumf %20, %21 : vector<2x128xf32>
      %cst_22 = arith.constant dense<0.000000e+00> : vector<2x3xf32>
      %23 = tpu.matmul %22, %16, %cst_22 {dimension_numbers = #tpu.dot_dimension_numbers<[1], [0], [0], [1], [0, 0, 1, 1], [], []>} : vector<2x128xf32>, vector<128x3xf32>, vector<2x3xf32> -> vector<2x3xf32>
      %24 = vector.broadcast %17 : vector<1x3xf32> to vector<2x3xf32>
      %25 = arith.addf %23, %24 : vector<2x3xf32>
      %26 = vector.shape_cast %25 : vector<2x3xf32> to vector<2x1x3xf32>
      %c0_23 = arith.constant 0 : index
      %c0_24 = arith.constant 0 : index
      %c0_25 = arith.constant 0 : index
      %27 = vector.load %arg7[%c0_23, %c0_24, %c0_25] : memref<2x1x3xf32, #tpu.memory_space<vmem>>, vector<2x1x3xf32>
      tpu.vector_store %arg7[%c0_23, %c0_24, %c0_25], %26 {strides = array<i32>} : memref<2x1x3xf32, #tpu.memory_space<vmem>>, vector<2x1x3xf32>,
    } else {
    }
    return
  }
  func.func @transform_0(%arg0: i32, %arg1: i32) -> (i32, i32, i32) {
    %c0_i32 = arith.constant 0 : i32
    %c0_i32_0 = arith.constant 0 : i32
    return %arg0, %c0_i32, %arg1 : i32, i32, i32
  }
  func.func @transform_1(%arg0: i32, %arg1: i32) -> (i32, i32) {
    %c0_i32 = arith.constant 0 : i32
    %c0_i32_0 = arith.constant 0 : i32
    %c0_i32_1 = arith.constant 0 : i32
    return %c0_i32, %c0_i32_0 : i32, i32
  }
  func.func @transform_2(%arg0: i32, %arg1: i32) -> (i32, i32) {
    %c0_i32 = arith.constant 0 : i32
    %c0_i32_0 = arith.constant 0 : i32
    %c0_i32_1 = arith.constant 0 : i32
    return %c0_i32, %c0_i32_0 : i32, i32
  }
  func.func @transform_3(%arg0: i32, %arg1: i32) -> (i32, i32) {
    %c0_i32 = arith.constant 0 : i32
    %c0_i32_0 = arith.constant 0 : i32
    %c0_i32_1 = arith.constant 0 : i32
    return %c0_i32, %c0_i32_0 : i32, i32
  }
  func.func @transform_4(%arg0: i32, %arg1: i32) -> (i32, i32) {
    %c0_i32 = arith.constant 0 : i32
    %c0_i32_0 = arith.constant 0 : i32
    %c0_i32_1 = arith.constant 0 : i32
    return %c0_i32, %c0_i32_0 : i32, i32
  }
  func.func @transform_5(%arg0: i32, %arg1: i32) -> (i32, i32, i32) {
    %c0_i32 = arith.constant 0 : i32
    %c0_i32_0 = arith.constant 0 : i32
    %c0_i32_1 = arith.constant 0 : i32
    return %arg0, %c0_i32, %c0_i32_0 : i32, i32, i32
  }
}

</mosaic_0001>

<llo_original>
// kernel: tpu_custom_call.1
$region0: #{tpu_custom_call.1}
  #allocation0 [shape = 'u32[]', space=smem, size = 0x4, offset = 0x4, fixed_abs, tag = 'smem constant byte address 0x4 - core index']
  #allocation1 [shape = 'u32[144,128]{1,0:T(1,128)}', space=vmem, size = 0x12000, scoped, tag = 'internal scratch']
  #allocation2 [shape = 'f32[2,320]{1,0:T(2,128)}', space=vmem, size = 0xc00, scoped, tag = 'scratch operand']
  %s0 = inlined_call_operand.vmem [shape: f32[2,320,64], index: 0, kind: input, shape index: {}]
  %s1 = inlined_call_operand.vmem [shape: f32[320,128], index: 1, kind: input, shape index: {}]
  %s2 = inlined_call_operand.vmem [shape: f32[1,128], index: 2, kind: input, shape index: {}]
  %s3 = inlined_call_operand.vmem [shape: f32[128,3], index: 3, kind: input, shape index: {}]
  %s4 = inlined_call_operand.vmem [shape: f32[1,3], index: 4, kind: input, shape index: {}]
  %s5 = inlined_call_operand.hbm [shape: f32[2,1,3], index: 5, kind: output, shape index: {}]
  %s6 = sld [smem:[#allocation0]]
  $region38: #{tpu_custom_call.1} parent=0
    _
  %s8 = ssub.s32 1, %s6
  %s9 = scalar_select 0, %s8, %s6
  $region1: #{tpu_custom_call.1} parent=0
    #allocation3 [shape = 'u8[1024]{0}', space=vmem, size = 0x400, scoped, tag = 'output window, operand 0, single buffered']
    #allocation4 [shape = 's32[1]{0}', space=sflag, size = 0x4, scoped, tag = 'scoped memory for tpu_custom_call.1']
    %10 = vsyncpa [#allocation4], 0
    // Predicated region
    $region2: #{tpu_custom_call.1} parent=1 // pred_check
      _
    $region3: #{tpu_custom_call.1} parent=1 // pred_check_branch
      %12 = sbr.rel (0) target = $region5
    $region4: #{tpu_custom_call.1} parent=1 // pred_region
      _
    $region5: #{tpu_custom_call.1} parent=1 // pred_fallthru
      _
    // Predicated region
    $region6: #{tpu_custom_call.1} parent=1 // pred_check
      _
    $region7: #{tpu_custom_call.1} parent=1 // pred_check_branch
      %14 = sbr.rel (0) target = $region9
    $region8: #{tpu_custom_call.1} parent=1 // pred_region
      _
    $region9: #{tpu_custom_call.1} parent=1 // pred_fallthru
      _
    // Predicated region
    $region10: #{tpu_custom_call.1} parent=1 // pred_check
      _
    $region11: #{tpu_custom_call.1} parent=1 // pred_check_branch
      %16 = sbr.rel (0) target = $region13
    $region12: #{tpu_custom_call.1} parent=1 // pred_region
      _
    $region13: #{tpu_custom_call.1} parent=1 // pred_fallthru
      _
    // Predicated region
    $region14: #{tpu_custom_call.1} parent=1 // pred_check
      _
    $region15: #{tpu_custom_call.1} parent=1 // pred_check_branch
      %18 = sbr.rel (0) target = $region17
    $region16: #{tpu_custom_call.1} parent=1 // pred_region
      _
    $region17: #{tpu_custom_call.1} parent=1 // pred_fallthru
      _
    // Predicated region
    $region18: #{tpu_custom_call.1} parent=1 // pred_check
      _
    $region19: #{tpu_custom_call.1} parent=1 // pred_check_branch
      %20 = sbr.rel (0) target = $region21
    $region20: #{tpu_custom_call.1} parent=1 // pred_region
      _
    $region21: #{tpu_custom_call.1} parent=1 // pred_fallthru
      _
    %p21 = scmp.eq.s32.totalorder 0, 0
    // Predicated region
    $region22: #{tpu_custom_call.1} parent=1 // pred_check
      %p22 = pneg %p21
    $region23: #{tpu_custom_call.1} parent=1 // pred_check_branch
      %24 = sbr.rel (%p22) target = $region25
    $region24: #{tpu_custom_call.1} parent=1 // pred_region
      %vm25 = vcmask 1041408
      %vm26 = vcmask 1043458
      %vm27 = vmor %vm26, %vm25
      %vm28 = vcmask 521220
      %vm29 = vmor %vm28, %vm27
      %30 = vst.msk [vmem:[#allocation2] sm:$0x3f] %vm29, 0.0
    $region25: #{tpu_custom_call.1} parent=1 // pred_fallthru
      _
    %v31 = vld [vmem:[%s0] sm:$0xff]
    %v32 = vld [vmem:[%s0 + $0x8] sm:$0xff]
    %v33 = vld [vmem:[%s0 + $0x10] sm:$0xff]
    %v34 = vld [vmem:[%s0 + $0x18] sm:$0xff]
    %v35 = vld [vmem:[%s0 + $0x20] sm:$0xff]
    %v36 = vld [vmem:[%s0 + $0x28] sm:$0xff]
    %v37 = vld [vmem:[%s0 + $0x30] sm:$0xff]
    %v38 = vld [vmem:[%s0 + $0x38] sm:$0xff]
    %v39 = vld [vmem:[%s0 + $0x40] sm:$0xff]
    %v40 = vld [vmem:[%s0 + $0x48] sm:$0xff]
    %v41 = vld [vmem:[%s0 + $0x50] sm:$0xff]
    %v42 = vld [vmem:[%s0 + $0x58] sm:$0xff]
    %v43 = vld [vmem:[%s0 + $0x60] sm:$0xff]
    %v44 = vld [vmem:[%s0 + $0x68] sm:$0xff]
    %v45 = vld [vmem:[%s0 + $0x70] sm:$0xff]
    %v46 = vld [vmem:[%s0 + $0x78] sm:$0xff]
    %v47 = vld [vmem:[%s0 + $0x80] sm:$0xff]
    %v48 = vld [vmem:[%s0 + $0x88] sm:$0xff]
    %v49 = vld [vmem:[%s0 + $0x90] sm:$0xff]
    %v50 = vld [vmem:[%s0 + $0x98] sm:$0xff]
    %v51 = vld [vmem:[%s0 + $0xa0] sm:$0xff]
    %v52 = vld [vmem:[%s0 + $0xa8] sm:$0xff]
    %v53 = vld [vmem:[%s0 + $0xb0] sm:$0xff]
    %v54 = vld [vmem:[%s0 + $0xb8] sm:$0xff]
    %v55 = vld [vmem:[%s0 + $0xc0] sm:$0xff]
    %v56 = vld [vmem:[%s0 + $0xc8] sm:$0xff]
    %v57 = vld [vmem:[%s0 + $0xd0] sm:$0xff]
    %v58 = vld [vmem:[%s0 + $0xd8] sm:$0xff]
    %v59 = vld [vmem:[%s0 + $0xe0] sm:$0xff]
    %v60 = vld [vmem:[%s0 + $0xe8] sm:$0xff]
    %v61 = vld [vmem:[%s0 + $0xf0] sm:$0xff]
    %v62 = vld [vmem:[%s0 + $0xf8] sm:$0xff]
    %v63 = vld [vmem:[%s0 + $0x100] sm:$0xff]
    %v64 = vld [vmem:[%s0 + $0x108] sm:$0xff]
    %v65 = vld [vmem:[%s0 + $0x110] sm:$0xff]
    %v66 = vld [vmem:[%s0 + $0x118] sm:$0xff]
    %v67 = vld [vmem:[%s0 + $0x120] sm:$0xff]
    %v68 = vld [vmem:[%s0 + $0x128] sm:$0xff]
    %v69 = vld [vmem:[%s0 + $0x130] sm:$0xff]
    %v70 = vld [vmem:[%s0 + $0x138] sm:$0xff]
    %v71 = vld [vmem:[%s0 + $0x140] sm:$0xff]
    %v72 = vld [vmem:[%s0 + $0x148] sm:$0xff]
    %v73 = vld [vmem:[%s0 + $0x150] sm:$0xff]
    %v74 = vld [vmem:[%s0 + $0x158] sm:$0xff]
    %v75 = vld [vmem:[%s0 + $0x160] sm:$0xff]
    %v76 = vld [vmem:[%s0 + $0x168] sm:$0xff]
    %v77 = vld [vmem:[%s0 + $0x170] sm:$0xff]
    %v78 = vld [vmem:[%s0 + $0x178] sm:$0xff]
    %v79 = vld [vmem:[%s0 + $0x180] sm:$0xff]
    %v80 = vld [vmem:[%s0 + $0x188] sm:$0xff]
    %v81 = vld [vmem:[%s0 + $0x190] sm:$0xff]
    %v82 = vld [vmem:[%s0 + $0x198] sm:$0xff]
    %v83 = vld [vmem:[%s0 + $0x1a0] sm:$0xff]
    %v84 = vld [vmem:[%s0 + $0x1a8] sm:$0xff]
    %v85 = vld [vmem:[%s0 + $0x1b0] sm:$0xff]
    %v86 = vld [vmem:[%s0 + $0x1b8] sm:$0xff]
    %v87 = vld [vmem:[%s0 + $0x1c0] sm:$0xff]
    %v88 = vld [vmem:[%s0 + $0x1c8] sm:$0xff]
    %v89 = vld [vmem:[%s0 + $0x1d0] sm:$0xff]
    %v90 = vld [vmem:[%s0 + $0x1d8] sm:$0xff]
    %v91 = vld [vmem:[%s0 + $0x1e0] sm:$0xff]
    %v92 = vld [vmem:[%s0 + $0x1e8] sm:$0xff]
    %v93 = vld [vmem:[%s0 + $0x1f0] sm:$0xff]
    %v94 = vld [vmem:[%s0 + $0x1f8] sm:$0xff]
    %v95 = vld [vmem:[%s0 + $0x200] sm:$0xff]
    %v96 = vld [vmem:[%s0 + $0x208] sm:$0xff]
    %v97 = vld [vmem:[%s0 + $0x210] sm:$0xff]
    %v98 = vld [vmem:[%s0 + $0x218] sm:$0xff]
    %v99 = vld [vmem:[%s0 + $0x220] sm:$0xff]
    %v100 = vld [vmem:[%s0 + $0x228] sm:$0xff]
    %v101 = vld [vmem:[%s0 + $0x230] sm:$0xff]
    %v102 = vld [vmem:[%s0 + $0x238] sm:$0xff]
    %v103 = vld [vmem:[%s0 + $0x240] sm:$0xff]
    %v104 = vld [vmem:[%s0 + $0x248] sm:$0xff]
    %v105 = vld [vmem:[%s0 + $0x250] sm:$0xff]
    %v106 = vld [vmem:[%s0 + $0x258] sm:$0xff]
    %v107 = vld [vmem:[%s0 + $0x260] sm:$0xff]
    %v108 = vld [vmem:[%s0 + $0x268] sm:$0xff]
    %v109 = vld [vmem:[%s0 + $0x270] sm:$0xff]
    %v110 = vld [vmem:[%s0 + $0x278] sm:$0xff]
    %v111 = vld [vmem:[#allocation2] sm:$0x3f]
    %vm112 = vcmask 523264
    %v113 = vsel %vm112, %v31, 0.0
    %114 = vadd.xlane.f32.xlu0 %v113
    %v115 = vpop.xlane.xlu0 %114
    %v116 = vsel %vm112, %v32, 0.0
    %117 = vadd.xlane.f32.xlu0 %v116
    %v118 = vpop.xlane.xlu0 %117
    %v119 = vsel %vm112, %v33, 0.0
    %120 = vadd.xlane.f32.xlu0 %v119
    %v121 = vpop.xlane.xlu0 %120
    %v122 = vsel %vm112, %v34, 0.0
    %123 = vadd.xlane.f32.xlu0 %v122
    %v124 = vpop.xlane.xlu0 %123
    %v125 = vsel %vm112, %v35, 0.0
    %126 = vadd.xlane.f32.xlu0 %v125
    %v127 = vpop.xlane.xlu0 %126
    %v128 = vsel %vm112, %v36, 0.0
    %129 = vadd.xlane.f32.xlu0 %v128
    %v130 = vpop.xlane.xlu0 %129
    %v131 = vsel %vm112, %v37, 0.0
    %132 = vadd.xlane.f32.xlu0 %v131
    %v133 = vpop.xlane.xlu0 %132
    %v134 = vsel %vm112, %v38, 0.0
    %135 = vadd.xlane.f32.xlu0 %v134
    %v136 = vpop.xlane.xlu0 %135
    %v137 = vsel %vm112, %v39, 0.0
    %138 = vadd.xlane.f32.xlu0 %v137
    %v139 = vpop.xlane.xlu0 %138
    %v140 = vsel %vm112, %v40, 0.0
    %141 = vadd.xlane.f32.xlu0 %v140
    %v142 = vpop.xlane.xlu0 %141
    %v143 = vsel %vm112, %v41, 0.0
    %144 = vadd.xlane.f32.xlu0 %v143
    %v145 = vpop.xlane.xlu0 %144
    %v146 = vsel %vm112, %v42, 0.0
    %147 = vadd.xlane.f32.xlu0 %v146
    %v148 = vpop.xlane.xlu0 %147
    %v149 = vsel %vm112, %v43, 0.0
    %150 = vadd.xlane.f32.xlu0 %v149
    %v151 = vpop.xlane.xlu0 %150
    %v152 = vsel %vm112, %v44, 0.0
    %153 = vadd.xlane.f32.xlu0 %v152
    %v154 = vpop.xlane.xlu0 %153
    %v155 = vsel %vm112, %v45, 0.0
    %156 = vadd.xlane.f32.xlu0 %v155
    %v157 = vpop.xlane.xlu0 %156
    %v158 = vsel %vm112, %v46, 0.0
    %159 = vadd.xlane.f32.xlu0 %v158
    %v160 = vpop.xlane.xlu0 %159
    %v161 = vsel %vm112, %v47, 0.0
    %162 = vadd.xlane.f32.xlu0 %v161
    %v163 = vpop.xlane.xlu0 %162
    %v164 = vsel %vm112, %v48, 0.0
    %165 = vadd.xlane.f32.xlu0 %v164
    %v166 = vpop.xlane.xlu0 %165
    %v167 = vsel %vm112, %v49, 0.0
    %168 = vadd.xlane.f32.xlu0 %v167
    %v169 = vpop.xlane.xlu0 %168
    %v170 = vsel %vm112, %v50, 0.0
    %171 = vadd.xlane.f32.xlu0 %v170
    %v172 = vpop.xlane.xlu0 %171
    %v173 = vsel %vm112, %v51, 0.0
    %174 = vadd.xlane.f32.xlu0 %v173
    %v175 = vpop.xlane.xlu0 %174
    %v176 = vsel %vm112, %v52, 0.0
    %177 = vadd.xlane.f32.xlu0 %v176
    %v178 = vpop.xlane.xlu0 %177
    %v179 = vsel %vm112, %v53, 0.0
    %180 = vadd.xlane.f32.xlu0 %v179
    %v181 = vpop.xlane.xlu0 %180
    %v182 = vsel %vm112, %v54, 0.0
    %183 = vadd.xlane.f32.xlu0 %v182
    %v184 = vpop.xlane.xlu0 %183
    %v185 = vsel %vm112, %v55, 0.0
    %186 = vadd.xlane.f32.xlu0 %v185
    %v187 = vpop.xlane.xlu0 %186
    %v188 = vsel %vm112, %v56, 0.0
    %189 = vadd.xlane.f32.xlu0 %v188
    %v190 = vpop.xlane.xlu0 %189
    %v191 = vsel %vm112, %v57, 0.0
    %192 = vadd.xlane.f32.xlu0 %v191
    %v193 = vpop.xlane.xlu0 %192
    %v194 = vsel %vm112, %v58, 0.0
    %195 = vadd.xlane.f32.xlu0 %v194
    %v196 = vpop.xlane.xlu0 %195
    %v197 = vsel %vm112, %v59, 0.0
    %198 = vadd.xlane.f32.xlu0 %v197
    %v199 = vpop.xlane.xlu0 %198
    %v200 = vsel %vm112, %v60, 0.0
    %201 = vadd.xlane.f32.xlu0 %v200
    %v202 = vpop.xlane.xlu0 %201
    %v203 = vsel %vm112, %v61, 0.0
    %204 = vadd.xlane.f32.xlu0 %v203
    %v205 = vpop.xlane.xlu0 %204
    %v206 = vsel %vm112, %v62, 0.0
    %207 = vadd.xlane.f32.xlu0 %v206
    %v208 = vpop.xlane.xlu0 %207
    %v209 = vsel %vm112, %v63, 0.0
    %210 = vadd.xlane.f32.xlu0 %v209
    %v211 = vpop.xlane.xlu0 %210
    %v212 = vsel %vm112, %v64, 0.0
    %213 = vadd.xlane.f32.xlu0 %v212
    %v214 = vpop.xlane.xlu0 %213
    %v215 = vsel %vm112, %v65, 0.0
    %216 = vadd.xlane.f32.xlu0 %v215
    %v217 = vpop.xlane.xlu0 %216
    %v218 = vsel %vm112, %v66, 0.0
    %219 = vadd.xlane.f32.xlu0 %v218
    %v220 = vpop.xlane.xlu0 %219
    %v221 = vsel %vm112, %v67, 0.0
    %222 = vadd.xlane.f32.xlu0 %v221
    %v223 = vpop.xlane.xlu0 %222
    %v224 = vsel %vm112, %v68, 0.0
    %225 = vadd.xlane.f32.xlu0 %v224
    %v226 = vpop.xlane.xlu0 %225
    %v227 = vsel %vm112, %v69, 0.0
    %228 = vadd.xlane.f32.xlu0 %v227
    %v229 = vpop.xlane.xlu0 %228
    %v230 = vsel %vm112, %v70, 0.0
    %231 = vadd.xlane.f32.xlu0 %v230
    %v232 = vpop.xlane.xlu0 %231
    %v233 = vsel %vm112, %v71, 0.0
    %234 = vadd.xlane.f32.xlu0 %v233
    %v235 = vpop.xlane.xlu0 %234
    %v236 = vsel %vm112, %v72, 0.0
    %237 = vadd.xlane.f32.xlu0 %v236
    %v238 = vpop.xlane.xlu0 %237
    %v239 = vsel %vm112, %v73, 0.0
    %240 = vadd.xlane.f32.xlu0 %v239
    %v241 = vpop.xlane.xlu0 %240
    %v242 = vsel %vm112, %v74, 0.0
    %243 = vadd.xlane.f32.xlu0 %v242
    %v244 = vpop.xlane.xlu0 %243
    %v245 = vsel %vm112, %v75, 0.0
    %246 = vadd.xlane.f32.xlu0 %v245
    %v247 = vpop.xlane.xlu0 %246
    %v248 = vsel %vm112, %v76, 0.0
    %249 = vadd.xlane.f32.xlu0 %v248
    %v250 = vpop.xlane.xlu0 %249
    %v251 = vsel %vm112, %v77, 0.0
    %252 = vadd.xlane.f32.xlu0 %v251
    %v253 = vpop.xlane.xlu0 %252
    %v254 = vsel %vm112, %v78, 0.0
    %255 = vadd.xlane.f32.xlu0 %v254
    %v256 = vpop.xlane.xlu0 %255
    %v257 = vsel %vm112, %v79, 0.0
    %258 = vadd.xlane.f32.xlu0 %v257
    %v259 = vpop.xlane.xlu0 %258
    %v260 = vsel %vm112, %v80, 0.0
    %261 = vadd.xlane.f32.xlu0 %v260
    %v262 = vpop.xlane.xlu0 %261
    %v263 = vsel %vm112, %v81, 0.0
    %264 = vadd.xlane.f32.xlu0 %v263
    %v265 = vpop.xlane.xlu0 %264
    %v266 = vsel %vm112, %v82, 0.0
    %267 = vadd.xlane.f32.xlu0 %v266
    %v268 = vpop.xlane.xlu0 %267
    %v269 = vsel %vm112, %v83, 0.0
    %270 = vadd.xlane.f32.xlu0 %v269
    %v271 = vpop.xlane.xlu0 %270
    %v272 = vsel %vm112, %v84, 0.0
    %273 = vadd.xlane.f32.xlu0 %v272
    %v274 = vpop.xlane.xlu0 %273
    %v275 = vsel %vm112, %v85, 0.0
    %276 = vadd.xlane.f32.xlu0 %v275
    %v277 = vpop.xlane.xlu0 %276
    %v278 = vsel %vm112, %v86, 0.0
    %279 = vadd.xlane.f32.xlu0 %v278
    %v280 = vpop.xlane.xlu0 %279
    %v281 = vsel %vm112, %v87, 0.0
    %282 = vadd.xlane.f32.xlu0 %v281
    %v283 = vpop.xlane.xlu0 %282
    %v284 = vsel %vm112, %v88, 0.0
    %285 = vadd.xlane.f32.xlu0 %v284
    %v286 = vpop.xlane.xlu0 %285
    %v287 = vsel %vm112, %v89, 0.0
    %288 = vadd.xlane.f32.xlu0 %v287
    %v289 = vpop.xlane.xlu0 %288
    %v290 = vsel %vm112, %v90, 0.0
    %291 = vadd.xlane.f32.xlu0 %v290
    %v292 = vpop.xlane.xlu0 %291
    %v293 = vsel %vm112, %v91, 0.0
    %294 = vadd.xlane.f32.xlu0 %v293
    %v295 = vpop.xlane.xlu0 %294
    %v296 = vsel %vm112, %v92, 0.0
    %297 = vadd.xlane.f32.xlu0 %v296
    %v298 = vpop.xlane.xlu0 %297
    %v299 = vsel %vm112, %v93, 0.0
    %300 = vadd.xlane.f32.xlu0 %v299
    %v301 = vpop.xlane.xlu0 %300
    %v302 = vsel %vm112, %v94, 0.0
    %303 = vadd.xlane.f32.xlu0 %v302
    %v304 = vpop.xlane.xlu0 %303
    %v305 = vsel %vm112, %v95, 0.0
    %306 = vadd.xlane.f32.xlu0 %v305
    %v307 = vpop.xlane.xlu0 %306
    %v308 = vsel %vm112, %v96, 0.0
    %309 = vadd.xlane.f32.xlu0 %v308
    %v310 = vpop.xlane.xlu0 %309
    %v311 = vsel %vm112, %v97, 0.0
    %312 = vadd.xlane.f32.xlu0 %v311
    %v313 = vpop.xlane.xlu0 %312
    %v314 = vsel %vm112, %v98, 0.0
    %315 = vadd.xlane.f32.xlu0 %v314
    %v316 = vpop.xlane.xlu0 %315
    %v317 = vsel %vm112, %v99, 0.0
    %318 = vadd.xlane.f32.xlu0 %v317
    %v319 = vpop.xlane.xlu0 %318
    %v320 = vsel %vm112, %v100, 0.0
    %321 = vadd.xlane.f32.xlu0 %v320
    %v322 = vpop.xlane.xlu0 %321
    %v323 = vsel %vm112, %v101, 0.0
    %324 = vadd.xlane.f32.xlu0 %v323
    %v325 = vpop.xlane.xlu0 %324
    %v326 = vsel %vm112, %v102, 0.0
    %327 = vadd.xlane.f32.xlu0 %v326
    %v328 = vpop.xlane.xlu0 %327
    %v329 = vsel %vm112, %v103, 0.0
    %330 = vadd.xlane.f32.xlu0 %v329
    %v331 = vpop.xlane.xlu0 %330
    %v332 = vsel %vm112, %v104, 0.0
    %333 = vadd.xlane.f32.xlu0 %v332
    %v334 = vpop.xlane.xlu0 %333
    %v335 = vsel %vm112, %v105, 0.0
    %336 = vadd.xlane.f32.xlu0 %v335
    %v337 = vpop.xlane.xlu0 %336
    %v338 = vsel %vm112, %v106, 0.0
    %339 = vadd.xlane.f32.xlu0 %v338
    %v340 = vpop.xlane.xlu0 %339
    %v341 = vsel %vm112, %v107, 0.0
    %342 = vadd.xlane.f32.xlu0 %v341
    %v343 = vpop.xlane.xlu0 %342
    %v344 = vsel %vm112, %v108, 0.0
    %345 = vadd.xlane.f32.xlu0 %v344
    %v346 = vpop.xlane.xlu0 %345
    %v347 = vsel %vm112, %v109, 0.0
    %348 = vadd.xlane.f32.xlu0 %v347
    %v349 = vpop.xlane.xlu0 %348
    %v350 = vsel %vm112, %v110, 0.0
    %351 = vadd.xlane.f32.xlu0 %v350
    %v352 = vpop.xlane.xlu0 %351
    %v434 = vunpack.c.l.s4 269488144
    %v435 = vunpack.c.0.s8 %v434
    %v436 = vlaneseq
    %v437 = vshrl.u32 %v436, 7
    %v438 = vsub.s32 %v435, %v437
    %v439 = vrot.slane %v115, %v438
    %v441 = vunpack.c.l.s4 842150450
    %v442 = vunpack.c.0.s8 %v441
    %v443 = vlaneseq
    %v444 = vshrl.u32 %v443, 7
    %v445 = vsub.s32 %v442, %v444
    %v446 = vrot.slane %v115, %v445
    %v448 = vunpack.c.l.s4 1414812756
    %v449 = vunpack.c.0.s8 %v448
    %v450 = vlaneseq
    %v451 = vshrl.u32 %v450, 7
    %v452 = vsub.s32 %v449, %v451
    %v453 = vrot.slane %v115, %v452
    %v455 = vunpack.c.l.s4 1987475062
    %v456 = vunpack.c.0.s8 %v455
    %v457 = vlaneseq
    %v458 = vshrl.u32 %v457, 7
    %v459 = vsub.s32 %v456, %v458
    %v460 = vrot.slane %v115, %v459
    %v462 = vunpack.c.l.s4 269488144
    %v463 = vunpack.c.0.s8 %v462
    %v464 = vlaneseq
    %v465 = vshrl.u32 %v464, 7
    %v466 = vsub.s32 %v463, %v465
    %v467 = vrot.slane %v118, %v466
    %v469 = vunpack.c.l.s4 842150450
    %v470 = vunpack.c.0.s8 %v469
    %v471 = vlaneseq
    %v472 = vshrl.u32 %v471, 7
    %v473 = vsub.s32 %v470, %v472
    %v474 = vrot.slane %v118, %v473
    %v476 = vunpack.c.l.s4 1414812756
    %v477 = vunpack.c.0.s8 %v476
    %v478 = vlaneseq
    %v479 = vshrl.u32 %v478, 7
    %v480 = vsub.s32 %v477, %v479
    %v481 = vrot.slane %v118, %v480
    %v483 = vunpack.c.l.s4 1987475062
    %v484 = vunpack.c.0.s8 %v483
    %v485 = vlaneseq
    %v486 = vshrl.u32 %v485, 7
    %v487 = vsub.s32 %v484, %v486
    %v488 = vrot.slane %v118, %v487
    %v490 = vunpack.c.l.s4 269488144
    %v491 = vunpack.c.0.s8 %v490
    %v492 = vlaneseq
    %v493 = vshrl.u32 %v492, 7
    %v494 = vsub.s32 %v491, %v493
    %v495 = vrot.slane %v121, %v494
    %v497 = vunpack.c.l.s4 842150450
    %v498 = vunpack.c.0.s8 %v497
    %v499 = vlaneseq
    %v500 = vshrl.u32 %v499, 7
    %v501 = vsub.s32 %v498, %v500
    %v502 = vrot.slane %v121, %v501
    %v504 = vunpack.c.l.s4 1414812756
    %v505 = vunpack.c.0.s8 %v504
    %v506 = vlaneseq
    %v507 = vshrl.u32 %v506, 7
    %v508 = vsub.s32 %v505, %v507
    %v509 = vrot.slane %v121, %v508
    %v511 = vunpack.c.l.s4 1987475062
    %v512 = vunpack.c.0.s8 %v511
    %v513 = vlaneseq
    %v514 = vshrl.u32 %v513, 7
    %v515 = vsub.s32 %v512, %v514
    %v516 = vrot.slane %v121, %v515
    %v518 = vunpack.c.l.s4 269488144
    %v519 = vunpack.c.0.s8 %v518
    %v520 = vlaneseq
    %v521 = vshrl.u32 %v520, 7
    %v522 = vsub.s32 %v519, %v521
    %v523 = vrot.slane %v124, %v522
    %v525 = vunpack.c.l.s4 842150450
    %v526 = vunpack.c.0.s8 %v525
    %v527 = vlaneseq
    %v528 = vshrl.u32 %v527, 7
    %v529 = vsub.s32 %v526, %v528
    %v530 = vrot.slane %v124, %v529
    %v532 = vunpack.c.l.s4 1414812756
    %v533 = vunpack.c.0.s8 %v532
    %v534 = vlaneseq
    %v535 = vshrl.u32 %v534, 7
    %v536 = vsub.s32 %v533, %v535
    %v537 = vrot.slane %v124, %v536
    %v539 = vunpack.c.l.s4 1987475062
    %v540 = vunpack.c.0.s8 %v539
    %v541 = vlaneseq
    %v542 = vshrl.u32 %v541, 7
    %v543 = vsub.s32 %v540, %v542
    %v544 = vrot.slane %v124, %v543
    %v546 = vunpack.c.l.s4 269488144
    %v547 = vunpack.c.0.s8 %v546
    %v548 = vlaneseq
    %v549 = vshrl.u32 %v548, 7
    %v550 = vsub.s32 %v547, %v549
    %v551 = vrot.slane %v127, %v550
    %v553 = vunpack.c.l.s4 842150450
    %v554 = vunpack.c.0.s8 %v553
    %v555 = vlaneseq
    %v556 = vshrl.u32 %v555, 7
    %v557 = vsub.s32 %v554, %v556
    %v558 = vrot.slane %v127, %v557
    %v560 = vunpack.c.l.s4 1414812756
    %v561 = vunpack.c.0.s8 %v560
    %v562 = vlaneseq
    %v563 = vshrl.u32 %v562, 7
    %v564 = vsub.s32 %v561, %v563
    %v565 = vrot.slane %v127, %v564
    %v567 = vunpack.c.l.s4 1987475062
    %v568 = vunpack.c.0.s8 %v567
    %v569 = vlaneseq
    %v570 = vshrl.u32 %v569, 7
    %v571 = vsub.s32 %v568, %v570
    %v572 = vrot.slane %v127, %v571
    %v574 = vunpack.c.l.s4 269488144
    %v575 = vunpack.c.0.s8 %v574
    %v576 = vlaneseq
    %v577 = vshrl.u32 %v576, 7
    %v578 = vsub.s32 %v575, %v577
    %v579 = vrot.slane %v130, %v578
    %v581 = vunpack.c.l.s4 842150450
    %v582 = vunpack.c.0.s8 %v581
    %v583 = vlaneseq
    %v584 = vshrl.u32 %v583, 7
    %v585 = vsub.s32 %v582, %v584
    %v586 = vrot.slane %v130, %v585
    %v588 = vunpack.c.l.s4 1414812756
    %v589 = vunpack.c.0.s8 %v588
    %v590 = vlaneseq
    %v591 = vshrl.u32 %v590, 7
    %v592 = vsub.s32 %v589, %v591
    %v593 = vrot.slane %v130, %v592
    %v595 = vunpack.c.l.s4 1987475062
    %v596 = vunpack.c.0.s8 %v595
    %v597 = vlaneseq
    %v598 = vshrl.u32 %v597, 7
    %v599 = vsub.s32 %v596, %v598
    %v600 = vrot.slane %v130, %v599
    %v602 = vunpack.c.l.s4 269488144
    %v603 = vunpack.c.0.s8 %v602
    %v604 = vlaneseq
    %v605 = vshrl.u32 %v604, 7
    %v606 = vsub.s32 %v603, %v605
    %v607 = vrot.slane %v133, %v606
    %v609 = vunpack.c.l.s4 842150450
    %v610 = vunpack.c.0.s8 %v609
    %v611 = vlaneseq
    %v612 = vshrl.u32 %v611, 7
    %v613 = vsub.s32 %v610, %v612
    %v614 = vrot.slane %v133, %v613
    %v616 = vunpack.c.l.s4 1414812756
    %v617 = vunpack.c.0.s8 %v616
    %v618 = vlaneseq
    %v619 = vshrl.u32 %v618, 7
    %v620 = vsub.s32 %v617, %v619
    %v621 = vrot.slane %v133, %v620
    %v623 = vunpack.c.l.s4 1987475062
    %v624 = vunpack.c.0.s8 %v623
    %v625 = vlaneseq
    %v626 = vshrl.u32 %v625, 7
    %v627 = vsub.s32 %v624, %v626
    %v628 = vrot.slane %v133, %v627
    %v630 = vunpack.c.l.s4 269488144
    %v631 = vunpack.c.0.s8 %v630
    %v632 = vlaneseq
    %v633 = vshrl.u32 %v632, 7
    %v634 = vsub.s32 %v631, %v633
    %v635 = vrot.slane %v136, %v634
    %v637 = vunpack.c.l.s4 842150450
    %v638 = vunpack.c.0.s8 %v637
    %v639 = vlaneseq
    %v640 = vshrl.u32 %v639, 7
    %v641 = vsub.s32 %v638, %v640
    %v642 = vrot.slane %v136, %v641
    %v644 = vunpack.c.l.s4 1414812756
    %v645 = vunpack.c.0.s8 %v644
    %v646 = vlaneseq
    %v647 = vshrl.u32 %v646, 7
    %v648 = vsub.s32 %v645, %v647
    %v649 = vrot.slane %v136, %v648
    %v651 = vunpack.c.l.s4 1987475062
    %v652 = vunpack.c.0.s8 %v651
    %v653 = vlaneseq
    %v654 = vshrl.u32 %v653, 7
    %v655 = vsub.s32 %v652, %v654
    %v656 = vrot.slane %v136, %v655
    %v658 = vunpack.c.l.s4 269488144
    %v659 = vunpack.c.0.s8 %v658
    %v660 = vlaneseq
    %v661 = vshrl.u32 %v660, 7
    %v662 = vsub.s32 %v659, %v661
    %v663 = vrot.slane %v139, %v662
    %v665 = vunpack.c.l.s4 842150450
    %v666 = vunpack.c.0.s8 %v665
    %v667 = vlaneseq
    %v668 = vshrl.u32 %v667, 7
    %v669 = vsub.s32 %v666, %v668
    %v670 = vrot.slane %v139, %v669
    %v672 = vunpack.c.l.s4 1414812756
    %v673 = vunpack.c.0.s8 %v672
    %v674 = vlaneseq
    %v675 = vshrl.u32 %v674, 7
    %v676 = vsub.s32 %v673, %v675
    %v677 = vrot.slane %v139, %v676
    %v679 = vunpack.c.l.s4 1987475062
    %v680 = vunpack.c.0.s8 %v679
    %v681 = vlaneseq
    %v682 = vshrl.u32 %v681, 7
    %v683 = vsub.s32 %v680, %v682
    %v684 = vrot.slane %v139, %v683
    %v686 = vunpack.c.l.s4 269488144
    %v687 = vunpack.c.0.s8 %v686
    %v688 = vlaneseq
    %v689 = vshrl.u32 %v688, 7
    %v690 = vsub.s32 %v687, %v689
    %v691 = vrot.slane %v142, %v690
    %v693 = vunpack.c.l.s4 842150450
    %v694 = vunpack.c.0.s8 %v693
    %v695 = vlaneseq
    %v696 = vshrl.u32 %v695, 7
    %v697 = vsub.s32 %v694, %v696
    %v698 = vrot.slane %v142, %v697
    %v700 = vunpack.c.l.s4 1414812756
    %v701 = vunpack.c.0.s8 %v700
    %v702 = vlaneseq
    %v703 = vshrl.u32 %v702, 7
    %v704 = vsub.s32 %v701, %v703
    %v705 = vrot.slane %v142, %v704
    %v707 = vunpack.c.l.s4 1987475062
    %v708 = vunpack.c.0.s8 %v707
    %v709 = vlaneseq
    %v710 = vshrl.u32 %v709, 7
    %v711 = vsub.s32 %v708, %v710
    %v712 = vrot.slane %v142, %v711
    %v714 = vunpack.c.l.s4 269488144
    %v715 = vunpack.c.0.s8 %v714
    %v716 = vlaneseq
    %v717 = vshrl.u32 %v716, 7
    %v718 = vsub.s32 %v715, %v717
    %v719 = vrot.slane %v145, %v718
    %v721 = vunpack.c.l.s4 842150450
    %v722 = vunpack.c.0.s8 %v721
    %v723 = vlaneseq
    %v724 = vshrl.u32 %v723, 7
    %v725 = vsub.s32 %v722, %v724
    %v726 = vrot.slane %v145, %v725
    %v728 = vunpack.c.l.s4 1414812756
    %v729 = vunpack.c.0.s8 %v728
    %v730 = vlaneseq
    %v731 = vshrl.u32 %v730, 7
    %v732 = vsub.s32 %v729, %v731
    %v733 = vrot.slane %v145, %v732
    %v735 = vunpack.c.l.s4 1987475062
    %v736 = vunpack.c.0.s8 %v735
    %v737 = vlaneseq
    %v738 = vshrl.u32 %v737, 7
    %v739 = vsub.s32 %v736, %v738
    %v740 = vrot.slane %v145, %v739
    %v742 = vunpack.c.l.s4 269488144
    %v743 = vunpack.c.0.s8 %v742
    %v744 = vlaneseq
    %v745 = vshrl.u32 %v744, 7
    %v746 = vsub.s32 %v743, %v745
    %v747 = vrot.slane %v148, %v746
    %v749 = vunpack.c.l.s4 842150450
    %v750 = vunpack.c.0.s8 %v749
    %v751 = vlaneseq
    %v752 = vshrl.u32 %v751, 7
    %v753 = vsub.s32 %v750, %v752
    %v754 = vrot.slane %v148, %v753
    %v756 = vunpack.c.l.s4 1414812756
    %v757 = vunpack.c.0.s8 %v756
    %v758 = vlaneseq
    %v759 = vshrl.u32 %v758, 7
    %v760 = vsub.s32 %v757, %v759
    %v761 = vrot.slane %v148, %v760
    %v763 = vunpack.c.l.s4 1987475062
    %v764 = vunpack.c.0.s8 %v763
    %v765 = vlaneseq
    %v766 = vshrl.u32 %v765, 7
    %v767 = vsub.s32 %v764, %v766
    %v768 = vrot.slane %v148, %v767
    %v770 = vunpack.c.l.s4 269488144
    %v771 = vunpack.c.0.s8 %v770
    %v772 = vlaneseq
    %v773 = vshrl.u32 %v772, 7
    %v774 = vsub.s32 %v771, %v773
    %v775 = vrot.slane %v151, %v774
    %v777 = vunpack.c.l.s4 842150450
    %v778 = vunpack.c.0.s8 %v777
    %v779 = vlaneseq
    %v780 = vshrl.u32 %v779, 7
    %v781 = vsub.s32 %v778, %v780
    %v782 = vrot.slane %v151, %v781
    %v784 = vunpack.c.l.s4 1414812756
    %v785 = vunpack.c.0.s8 %v784
    %v786 = vlaneseq
    %v787 = vshrl.u32 %v786, 7
    %v788 = vsub.s32 %v785, %v787
    %v789 = vrot.slane %v151, %v788
    %v791 = vunpack.c.l.s4 1987475062
    %v792 = vunpack.c.0.s8 %v791
    %v793 = vlaneseq
    %v794 = vshrl.u32 %v793, 7
    %v795 = vsub.s32 %v792, %v794
    %v796 = vrot.slane %v151, %v795
    %v798 = vunpack.c.l.s4 269488144
    %v799 = vunpack.c.0.s8 %v798
    %v800 = vlaneseq
    %v801 = vshrl.u32 %v800, 7
    %v802 = vsub.s32 %v799, %v801
    %v803 = vrot.slane %v154, %v802
    %v805 = vunpack.c.l.s4 842150450
    %v806 = vunpack.c.0.s8 %v805
    %v807 = vlaneseq
    %v808 = vshrl.u32 %v807, 7
    %v809 = vsub.s32 %v806, %v808
    %v810 = vrot.slane %v154, %v809
    %v812 = vunpack.c.l.s4 1414812756
    %v813 = vunpack.c.0.s8 %v812
    %v814 = vlaneseq
    %v815 = vshrl.u32 %v814, 7
    %v816 = vsub.s32 %v813, %v815
    %v817 = vrot.slane %v154, %v816
    %v819 = vunpack.c.l.s4 1987475062
    %v820 = vunpack.c.0.s8 %v819
    %v821 = vlaneseq
    %v822 = vshrl.u32 %v821, 7
    %v823 = vsub.s32 %v820, %v822
    %v824 = vrot.slane %v154, %v823
    %v826 = vunpack.c.l.s4 269488144
    %v827 = vunpack.c.0.s8 %v826
    %v828 = vlaneseq
    %v829 = vshrl.u32 %v828, 7
    %v830 = vsub.s32 %v827, %v829
    %v831 = vrot.slane %v157, %v830
    %v833 = vunpack.c.l.s4 842150450
    %v834 = vunpack.c.0.s8 %v833
    %v835 = vlaneseq
    %v836 = vshrl.u32 %v835, 7
    %v837 = vsub.s32 %v834, %v836
    %v838 = vrot.slane %v157, %v837
    %v840 = vunpack.c.l.s4 1414812756
    %v841 = vunpack.c.0.s8 %v840
    %v842 = vlaneseq
    %v843 = vshrl.u32 %v842, 7
    %v844 = vsub.s32 %v841, %v843
    %v845 = vrot.slane %v157, %v844
    %v847 = vunpack.c.l.s4 1987475062
    %v848 = vunpack.c.0.s8 %v847
    %v849 = vlaneseq
    %v850 = vshrl.u32 %v849, 7
    %v851 = vsub.s32 %v848, %v850
    %v852 = vrot.slane %v157, %v851
    %v854 = vunpack.c.l.s4 269488144
    %v855 = vunpack.c.0.s8 %v854
    %v856 = vlaneseq
    %v857 = vshrl.u32 %v856, 7
    %v858 = vsub.s32 %v855, %v857
    %v859 = vrot.slane %v160, %v858
    %v861 = vunpack.c.l.s4 842150450
    %v862 = vunpack.c.0.s8 %v861
    %v863 = vlaneseq
    %v864 = vshrl.u32 %v863, 7
    %v865 = vsub.s32 %v862, %v864
    %v866 = vrot.slane %v160, %v865
    %v868 = vunpack.c.l.s4 1414812756
    %v869 = vunpack.c.0.s8 %v868
    %v870 = vlaneseq
    %v871 = vshrl.u32 %v870, 7
    %v872 = vsub.s32 %v869, %v871
    %v873 = vrot.slane %v160, %v872
    %v875 = vunpack.c.l.s4 1987475062
    %v876 = vunpack.c.0.s8 %v875
    %v877 = vlaneseq
    %v878 = vshrl.u32 %v877, 7
    %v879 = vsub.s32 %v876, %v878
    %v880 = vrot.slane %v160, %v879
    %v882 = vunpack.c.l.s4 269488144
    %v883 = vunpack.c.0.s8 %v882
    %v884 = vlaneseq
    %v885 = vshrl.u32 %v884, 7
    %v886 = vsub.s32 %v883, %v885
    %v887 = vrot.slane %v163, %v886
    %v889 = vunpack.c.l.s4 842150450
    %v890 = vunpack.c.0.s8 %v889
    %v891 = vlaneseq
    %v892 = vshrl.u32 %v891, 7
    %v893 = vsub.s32 %v890, %v892
    %v894 = vrot.slane %v163, %v893
    %v896 = vunpack.c.l.s4 1414812756
    %v897 = vunpack.c.0.s8 %v896
    %v898 = vlaneseq
    %v899 = vshrl.u32 %v898, 7
    %v900 = vsub.s32 %v897, %v899
    %v901 = vrot.slane %v163, %v900
    %v903 = vunpack.c.l.s4 1987475062
    %v904 = vunpack.c.0.s8 %v903
    %v905 = vlaneseq
    %v906 = vshrl.u32 %v905, 7
    %v907 = vsub.s32 %v904, %v906
    %v908 = vrot.slane %v163, %v907
    %v910 = vunpack.c.l.s4 269488144
    %v911 = vunpack.c.0.s8 %v910
    %v912 = vlaneseq
    %v913 = vshrl.u32 %v912, 7
    %v914 = vsub.s32 %v911, %v913
    %v915 = vrot.slane %v166, %v914
    %v917 = vunpack.c.l.s4 842150450
    %v918 = vunpack.c.0.s8 %v917
    %v919 = vlaneseq
    %v920 = vshrl.u32 %v919, 7
    %v921 = vsub.s32 %v918, %v920
    %v922 = vrot.slane %v166, %v921
    %v924 = vunpack.c.l.s4 1414812756
    %v925 = vunpack.c.0.s8 %v924
    %v926 = vlaneseq
    %v927 = vshrl.u32 %v926, 7
    %v928 = vsub.s32 %v925, %v927
    %v929 = vrot.slane %v166, %v928
    %v931 = vunpack.c.l.s4 1987475062
    %v932 = vunpack.c.0.s8 %v931
    %v933 = vlaneseq
    %v934 = vshrl.u32 %v933, 7
    %v935 = vsub.s32 %v932, %v934
    %v936 = vrot.slane %v166, %v935
    %v938 = vunpack.c.l.s4 269488144
    %v939 = vunpack.c.0.s8 %v938
    %v940 = vlaneseq
    %v941 = vshrl.u32 %v940, 7
    %v942 = vsub.s32 %v939, %v941
    %v943 = vrot.slane %v169, %v942
    %v945 = vunpack.c.l.s4 842150450
    %v946 = vunpack.c.0.s8 %v945
    %v947 = vlaneseq
    %v948 = vshrl.u32 %v947, 7
    %v949 = vsub.s32 %v946, %v948
    %v950 = vrot.slane %v169, %v949
    %v952 = vunpack.c.l.s4 1414812756
    %v953 = vunpack.c.0.s8 %v952
    %v954 = vlaneseq
    %v955 = vshrl.u32 %v954, 7
    %v956 = vsub.s32 %v953, %v955
    %v957 = vrot.slane %v169, %v956
    %v959 = vunpack.c.l.s4 1987475062
    %v960 = vunpack.c.0.s8 %v959
    %v961 = vlaneseq
    %v962 = vshrl.u32 %v961, 7
    %v963 = vsub.s32 %v960, %v962
    %v964 = vrot.slane %v169, %v963
    %v966 = vunpack.c.l.s4 269488144
    %v967 = vunpack.c.0.s8 %v966
    %v968 = vlaneseq
    %v969 = vshrl.u32 %v968, 7
    %v970 = vsub.s32 %v967, %v969
    %v971 = vrot.slane %v172, %v970
    %v973 = vunpack.c.l.s4 842150450
    %v974 = vunpack.c.0.s8 %v973
    %v975 = vlaneseq
    %v976 = vshrl.u32 %v975, 7
    %v977 = vsub.s32 %v974, %v976
    %v978 = vrot.slane %v172, %v977
    %v980 = vunpack.c.l.s4 1414812756
    %v981 = vunpack.c.0.s8 %v980
    %v982 = vlaneseq
    %v983 = vshrl.u32 %v982, 7
    %v984 = vsub.s32 %v981, %v983
    %v985 = vrot.slane %v172, %v984
    %v987 = vunpack.c.l.s4 1987475062
    %v988 = vunpack.c.0.s8 %v987
    %v989 = vlaneseq
    %v990 = vshrl.u32 %v989, 7
    %v991 = vsub.s32 %v988, %v990
    %v992 = vrot.slane %v172, %v991
    %v994 = vunpack.c.l.s4 269488144
    %v995 = vunpack.c.0.s8 %v994
    %v996 = vlaneseq
    %v997 = vshrl.u32 %v996, 7
    %v998 = vsub.s32 %v995, %v997
    %v999 = vrot.slane %v175, %v998
    %v1001 = vunpack.c.l.s4 842150450
    %v1002 = vunpack.c.0.s8 %v1001
    %v1003 = vlaneseq
    %v1004 = vshrl.u32 %v1003, 7
    %v1005 = vsub.s32 %v1002, %v1004
    %v1006 = vrot.slane %v175, %v1005
    %v1008 = vunpack.c.l.s4 1414812756
    %v1009 = vunpack.c.0.s8 %v1008
    %v1010 = vlaneseq
    %v1011 = vshrl.u32 %v1010, 7
    %v1012 = vsub.s32 %v1009, %v1011
    %v1013 = vrot.slane %v175, %v1012
    %v1015 = vunpack.c.l.s4 1987475062
    %v1016 = vunpack.c.0.s8 %v1015
    %v1017 = vlaneseq
    %v1018 = vshrl.u32 %v1017, 7
    %v1019 = vsub.s32 %v1016, %v1018
    %v1020 = vrot.slane %v175, %v1019
    %v1022 = vunpack.c.l.s4 269488144
    %v1023 = vunpack.c.0.s8 %v1022
    %v1024 = vlaneseq
    %v1025 = vshrl.u32 %v1024, 7
    %v1026 = vsub.s32 %v1023, %v1025
    %v1027 = vrot.slane %v178, %v1026
    %v1029 = vunpack.c.l.s4 842150450
    %v1030 = vunpack.c.0.s8 %v1029
    %v1031 = vlaneseq
    %v1032 = vshrl.u32 %v1031, 7
    %v1033 = vsub.s32 %v1030, %v1032
    %v1034 = vrot.slane %v178, %v1033
    %v1036 = vunpack.c.l.s4 1414812756
    %v1037 = vunpack.c.0.s8 %v1036
    %v1038 = vlaneseq
    %v1039 = vshrl.u32 %v1038, 7
    %v1040 = vsub.s32 %v1037, %v1039
    %v1041 = vrot.slane %v178, %v1040
    %v1043 = vunpack.c.l.s4 1987475062
    %v1044 = vunpack.c.0.s8 %v1043
    %v1045 = vlaneseq
    %v1046 = vshrl.u32 %v1045, 7
    %v1047 = vsub.s32 %v1044, %v1046
    %v1048 = vrot.slane %v178, %v1047
    %v1050 = vunpack.c.l.s4 269488144
    %v1051 = vunpack.c.0.s8 %v1050
    %v1052 = vlaneseq
    %v1053 = vshrl.u32 %v1052, 7
    %v1054 = vsub.s32 %v1051, %v1053
    %v1055 = vrot.slane %v181, %v1054
    %v1057 = vunpack.c.l.s4 842150450
    %v1058 = vunpack.c.0.s8 %v1057
    %v1059 = vlaneseq
    %v1060 = vshrl.u32 %v1059, 7
    %v1061 = vsub.s32 %v1058, %v1060
    %v1062 = vrot.slane %v181, %v1061
    %v1064 = vunpack.c.l.s4 1414812756
    %v1065 = vunpack.c.0.s8 %v1064
    %v1066 = vlaneseq
    %v1067 = vshrl.u32 %v1066, 7
    %v1068 = vsub.s32 %v1065, %v1067
    %v1069 = vrot.slane %v181, %v1068
    %v1071 = vunpack.c.l.s4 1987475062
    %v1072 = vunpack.c.0.s8 %v1071
    %v1073 = vlaneseq
    %v1074 = vshrl.u32 %v1073, 7
    %v1075 = vsub.s32 %v1072, %v1074
    %v1076 = vrot.slane %v181, %v1075
    %v1078 = vunpack.c.l.s4 269488144
    %v1079 = vunpack.c.0.s8 %v1078
    %v1080 = vlaneseq
    %v1081 = vshrl.u32 %v1080, 7
    %v1082 = vsub.s32 %v1079, %v1081
    %v1083 = vrot.slane %v184, %v1082
    %v1085 = vunpack.c.l.s4 842150450
    %v1086 = vunpack.c.0.s8 %v1085
    %v1087 = vlaneseq
    %v1088 = vshrl.u32 %v1087, 7
    %v1089 = vsub.s32 %v1086, %v1088
    %v1090 = vrot.slane %v184, %v1089
    %v1092 = vunpack.c.l.s4 1414812756
    %v1093 = vunpack.c.0.s8 %v1092
    %v1094 = vlaneseq
    %v1095 = vshrl.u32 %v1094, 7
    %v1096 = vsub.s32 %v1093, %v1095
    %v1097 = vrot.slane %v184, %v1096
    %v1099 = vunpack.c.l.s4 1987475062
    %v1100 = vunpack.c.0.s8 %v1099
    %v1101 = vlaneseq
    %v1102 = vshrl.u32 %v1101, 7
    %v1103 = vsub.s32 %v1100, %v1102
    %v1104 = vrot.slane %v184, %v1103
    %v1106 = vunpack.c.l.s4 269488144
    %v1107 = vunpack.c.0.s8 %v1106
    %v1108 = vlaneseq
    %v1109 = vshrl.u32 %v1108, 7
    %v1110 = vsub.s32 %v1107, %v1109
    %v1111 = vrot.slane %v187, %v1110
    %v1113 = vunpack.c.l.s4 842150450
    %v1114 = vunpack.c.0.s8 %v1113
    %v1115 = vlaneseq
    %v1116 = vshrl.u32 %v1115, 7
    %v1117 = vsub.s32 %v1114, %v1116
    %v1118 = vrot.slane %v187, %v1117
    %v1120 = vunpack.c.l.s4 1414812756
    %v1121 = vunpack.c.0.s8 %v1120
    %v1122 = vlaneseq
    %v1123 = vshrl.u32 %v1122, 7
    %v1124 = vsub.s32 %v1121, %v1123
    %v1125 = vrot.slane %v187, %v1124
    %v1127 = vunpack.c.l.s4 1987475062
    %v1128 = vunpack.c.0.s8 %v1127
    %v1129 = vlaneseq
    %v1130 = vshrl.u32 %v1129, 7
    %v1131 = vsub.s32 %v1128, %v1130
    %v1132 = vrot.slane %v187, %v1131
    %v1134 = vunpack.c.l.s4 269488144
    %v1135 = vunpack.c.0.s8 %v1134
    %v1136 = vlaneseq
    %v1137 = vshrl.u32 %v1136, 7
    %v1138 = vsub.s32 %v1135, %v1137
    %v1139 = vrot.slane %v190, %v1138
    %v1141 = vunpack.c.l.s4 842150450
    %v1142 = vunpack.c.0.s8 %v1141
    %v1143 = vlaneseq
    %v1144 = vshrl.u32 %v1143, 7
    %v1145 = vsub.s32 %v1142, %v1144
    %v1146 = vrot.slane %v190, %v1145
    %v1148 = vunpack.c.l.s4 1414812756
    %v1149 = vunpack.c.0.s8 %v1148
    %v1150 = vlaneseq
    %v1151 = vshrl.u32 %v1150, 7
    %v1152 = vsub.s32 %v1149, %v1151
    %v1153 = vrot.slane %v190, %v1152
    %v1155 = vunpack.c.l.s4 1987475062
    %v1156 = vunpack.c.0.s8 %v1155
    %v1157 = vlaneseq
    %v1158 = vshrl.u32 %v1157, 7
    %v1159 = vsub.s32 %v1156, %v1158
    %v1160 = vrot.slane %v190, %v1159
    %v1162 = vunpack.c.l.s4 269488144
    %v1163 = vunpack.c.0.s8 %v1162
    %v1164 = vlaneseq
    %v1165 = vshrl.u32 %v1164, 7
    %v1166 = vsub.s32 %v1163, %v1165
    %v1167 = vrot.slane %v193, %v1166
    %v1169 = vunpack.c.l.s4 842150450
    %v1170 = vunpack.c.0.s8 %v1169
    %v1171 = vlaneseq
    %v1172 = vshrl.u32 %v1171, 7
    %v1173 = vsub.s32 %v1170, %v1172
    %v1174 = vrot.slane %v193, %v1173
    %v1176 = vunpack.c.l.s4 1414812756
    %v1177 = vunpack.c.0.s8 %v1176
    %v1178 = vlaneseq
    %v1179 = vshrl.u32 %v1178, 7
    %v1180 = vsub.s32 %v1177, %v1179
    %v1181 = vrot.slane %v193, %v1180
    %v1183 = vunpack.c.l.s4 1987475062
    %v1184 = vunpack.c.0.s8 %v1183
    %v1185 = vlaneseq
    %v1186 = vshrl.u32 %v1185, 7
    %v1187 = vsub.s32 %v1184, %v1186
    %v1188 = vrot.slane %v193, %v1187
    %v1190 = vunpack.c.l.s4 269488144
    %v1191 = vunpack.c.0.s8 %v1190
    %v1192 = vlaneseq
    %v1193 = vshrl.u32 %v1192, 7
    %v1194 = vsub.s32 %v1191, %v1193
    %v1195 = vrot.slane %v196, %v1194
    %v1197 = vunpack.c.l.s4 842150450
    %v1198 = vunpack.c.0.s8 %v1197
    %v1199 = vlaneseq
    %v1200 = vshrl.u32 %v1199, 7
    %v1201 = vsub.s32 %v1198, %v1200
    %v1202 = vrot.slane %v196, %v1201
    %v1204 = vunpack.c.l.s4 1414812756
    %v1205 = vunpack.c.0.s8 %v1204
    %v1206 = vlaneseq
    %v1207 = vshrl.u32 %v1206, 7
    %v1208 = vsub.s32 %v1205, %v1207
    %v1209 = vrot.slane %v196, %v1208
    %v1211 = vunpack.c.l.s4 1987475062
    %v1212 = vunpack.c.0.s8 %v1211
    %v1213 = vlaneseq
    %v1214 = vshrl.u32 %v1213, 7
    %v1215 = vsub.s32 %v1212, %v1214
    %v1216 = vrot.slane %v196, %v1215
    %v1218 = vunpack.c.l.s4 269488144
    %v1219 = vunpack.c.0.s8 %v1218
    %v1220 = vlaneseq
    %v1221 = vshrl.u32 %v1220, 7
    %v1222 = vsub.s32 %v1219, %v1221
    %v1223 = vrot.slane %v199, %v1222
    %v1225 = vunpack.c.l.s4 842150450
    %v1226 = vunpack.c.0.s8 %v1225
    %v1227 = vlaneseq
    %v1228 = vshrl.u32 %v1227, 7
    %v1229 = vsub.s32 %v1226, %v1228
    %v1230 = vrot.slane %v199, %v1229
    %v1232 = vunpack.c.l.s4 1414812756
    %v1233 = vunpack.c.0.s8 %v1232
    %v1234 = vlaneseq
    %v1235 = vshrl.u32 %v1234, 7
    %v1236 = vsub.s32 %v1233, %v1235
    %v1237 = vrot.slane %v199, %v1236
    %v1239 = vunpack.c.l.s4 1987475062
    %v1240 = vunpack.c.0.s8 %v1239
    %v1241 = vlaneseq
    %v1242 = vshrl.u32 %v1241, 7
    %v1243 = vsub.s32 %v1240, %v1242
    %v1244 = vrot.slane %v199, %v1243
    %v1246 = vunpack.c.l.s4 269488144
    %v1247 = vunpack.c.0.s8 %v1246
    %v1248 = vlaneseq
    %v1249 = vshrl.u32 %v1248, 7
    %v1250 = vsub.s32 %v1247, %v1249
    %v1251 = vrot.slane %v202, %v1250
    %v1253 = vunpack.c.l.s4 842150450
    %v1254 = vunpack.c.0.s8 %v1253
    %v1255 = vlaneseq
    %v1256 = vshrl.u32 %v1255, 7
    %v1257 = vsub.s32 %v1254, %v1256
    %v1258 = vrot.slane %v202, %v1257
    %v1260 = vunpack.c.l.s4 1414812756
    %v1261 = vunpack.c.0.s8 %v1260
    %v1262 = vlaneseq
    %v1263 = vshrl.u32 %v1262, 7
    %v1264 = vsub.s32 %v1261, %v1263
    %v1265 = vrot.slane %v202, %v1264
    %v1267 = vunpack.c.l.s4 1987475062
    %v1268 = vunpack.c.0.s8 %v1267
    %v1269 = vlaneseq
    %v1270 = vshrl.u32 %v1269, 7
    %v1271 = vsub.s32 %v1268, %v1270
    %v1272 = vrot.slane %v202, %v1271
    %v1274 = vunpack.c.l.s4 269488144
    %v1275 = vunpack.c.0.s8 %v1274
    %v1276 = vlaneseq
    %v1277 = vshrl.u32 %v1276, 7
    %v1278 = vsub.s32 %v1275, %v1277
    %v1279 = vrot.slane %v205, %v1278
    %v1281 = vunpack.c.l.s4 842150450
    %v1282 = vunpack.c.0.s8 %v1281
    %v1283 = vlaneseq
    %v1284 = vshrl.u32 %v1283, 7
    %v1285 = vsub.s32 %v1282, %v1284
    %v1286 = vrot.slane %v205, %v1285
    %v1288 = vunpack.c.l.s4 1414812756
    %v1289 = vunpack.c.0.s8 %v1288
    %v1290 = vlaneseq
    %v1291 = vshrl.u32 %v1290, 7
    %v1292 = vsub.s32 %v1289, %v1291
    %v1293 = vrot.slane %v205, %v1292
    %v1295 = vunpack.c.l.s4 1987475062
    %v1296 = vunpack.c.0.s8 %v1295
    %v1297 = vlaneseq
    %v1298 = vshrl.u32 %v1297, 7
    %v1299 = vsub.s32 %v1296, %v1298
    %v1300 = vrot.slane %v205, %v1299
    %v1302 = vunpack.c.l.s4 269488144
    %v1303 = vunpack.c.0.s8 %v1302
    %v1304 = vlaneseq
    %v1305 = vshrl.u32 %v1304, 7
    %v1306 = vsub.s32 %v1303, %v1305
    %v1307 = vrot.slane %v208, %v1306
    %v1309 = vunpack.c.l.s4 842150450
    %v1310 = vunpack.c.0.s8 %v1309
    %v1311 = vlaneseq
    %v1312 = vshrl.u32 %v1311, 7
    %v1313 = vsub.s32 %v1310, %v1312
    %v1314 = vrot.slane %v208, %v1313
    %v1316 = vunpack.c.l.s4 1414812756
    %v1317 = vunpack.c.0.s8 %v1316
    %v1318 = vlaneseq
    %v1319 = vshrl.u32 %v1318, 7
    %v1320 = vsub.s32 %v1317, %v1319
    %v1321 = vrot.slane %v208, %v1320
    %v1323 = vunpack.c.l.s4 1987475062
    %v1324 = vunpack.c.0.s8 %v1323
    %v1325 = vlaneseq
    %v1326 = vshrl.u32 %v1325, 7
    %v1327 = vsub.s32 %v1324, %v1326
    %v1328 = vrot.slane %v208, %v1327
    %v1330 = vunpack.c.l.s4 269488144
    %v1331 = vunpack.c.0.s8 %v1330
    %v1332 = vlaneseq
    %v1333 = vshrl.u32 %v1332, 7
    %v1334 = vsub.s32 %v1331, %v1333
    %v1335 = vrot.slane %v211, %v1334
    %v1337 = vunpack.c.l.s4 842150450
    %v1338 = vunpack.c.0.s8 %v1337
    %v1339 = vlaneseq
    %v1340 = vshrl.u32 %v1339, 7
    %v1341 = vsub.s32 %v1338, %v1340
    %v1342 = vrot.slane %v211, %v1341
    %v1344 = vunpack.c.l.s4 1414812756
    %v1345 = vunpack.c.0.s8 %v1344
    %v1346 = vlaneseq
    %v1347 = vshrl.u32 %v1346, 7
    %v1348 = vsub.s32 %v1345, %v1347
    %v1349 = vrot.slane %v211, %v1348
    %v1351 = vunpack.c.l.s4 1987475062
    %v1352 = vunpack.c.0.s8 %v1351
    %v1353 = vlaneseq
    %v1354 = vshrl.u32 %v1353, 7
    %v1355 = vsub.s32 %v1352, %v1354
    %v1356 = vrot.slane %v211, %v1355
    %v1358 = vunpack.c.l.s4 269488144
    %v1359 = vunpack.c.0.s8 %v1358
    %v1360 = vlaneseq
    %v1361 = vshrl.u32 %v1360, 7
    %v1362 = vsub.s32 %v1359, %v1361
    %v1363 = vrot.slane %v214, %v1362
    %v1365 = vunpack.c.l.s4 842150450
    %v1366 = vunpack.c.0.s8 %v1365
    %v1367 = vlaneseq
    %v1368 = vshrl.u32 %v1367, 7
    %v1369 = vsub.s32 %v1366, %v1368
    %v1370 = vrot.slane %v214, %v1369
    %v1372 = vunpack.c.l.s4 1414812756
    %v1373 = vunpack.c.0.s8 %v1372
    %v1374 = vlaneseq
    %v1375 = vshrl.u32 %v1374, 7
    %v1376 = vsub.s32 %v1373, %v1375
    %v1377 = vrot.slane %v214, %v1376
    %v1379 = vunpack.c.l.s4 1987475062
    %v1380 = vunpack.c.0.s8 %v1379
    %v1381 = vlaneseq
    %v1382 = vshrl.u32 %v1381, 7
    %v1383 = vsub.s32 %v1380, %v1382
    %v1384 = vrot.slane %v214, %v1383
    %v1386 = vunpack.c.l.s4 269488144
    %v1387 = vunpack.c.0.s8 %v1386
    %v1388 = vlaneseq
    %v1389 = vshrl.u32 %v1388, 7
    %v1390 = vsub.s32 %v1387, %v1389
    %v1391 = vrot.slane %v217, %v1390
    %v1393 = vunpack.c.l.s4 842150450
    %v1394 = vunpack.c.0.s8 %v1393
    %v1395 = vlaneseq
    %v1396 = vshrl.u32 %v1395, 7
    %v1397 = vsub.s32 %v1394, %v1396
    %v1398 = vrot.slane %v217, %v1397
    %v1400 = vunpack.c.l.s4 1414812756
    %v1401 = vunpack.c.0.s8 %v1400
    %v1402 = vlaneseq
    %v1403 = vshrl.u32 %v1402, 7
    %v1404 = vsub.s32 %v1401, %v1403
    %v1405 = vrot.slane %v217, %v1404
    %v1407 = vunpack.c.l.s4 1987475062
    %v1408 = vunpack.c.0.s8 %v1407
    %v1409 = vlaneseq
    %v1410 = vshrl.u32 %v1409, 7
    %v1411 = vsub.s32 %v1408, %v1410
    %v1412 = vrot.slane %v217, %v1411
    %v1414 = vunpack.c.l.s4 269488144
    %v1415 = vunpack.c.0.s8 %v1414
    %v1416 = vlaneseq
    %v1417 = vshrl.u32 %v1416, 7
    %v1418 = vsub.s32 %v1415, %v1417
    %v1419 = vrot.slane %v220, %v1418
    %v1421 = vunpack.c.l.s4 842150450
    %v1422 = vunpack.c.0.s8 %v1421
    %v1423 = vlaneseq
    %v1424 = vshrl.u32 %v1423, 7
    %v1425 = vsub.s32 %v1422, %v1424
    %v1426 = vrot.slane %v220, %v1425
    %v1428 = vunpack.c.l.s4 1414812756
    %v1429 = vunpack.c.0.s8 %v1428
    %v1430 = vlaneseq
    %v1431 = vshrl.u32 %v1430, 7
    %v1432 = vsub.s32 %v1429, %v1431
    %v1433 = vrot.slane %v220, %v1432
    %v1435 = vunpack.c.l.s4 1987475062
    %v1436 = vunpack.c.0.s8 %v1435
    %v1437 = vlaneseq
    %v1438 = vshrl.u32 %v1437, 7
    %v1439 = vsub.s32 %v1436, %v1438
    %v1440 = vrot.slane %v220, %v1439
    %v1442 = vunpack.c.l.s4 269488144
    %v1443 = vunpack.c.0.s8 %v1442
    %v1444 = vlaneseq
    %v1445 = vshrl.u32 %v1444, 7
    %v1446 = vsub.s32 %v1443, %v1445
    %v1447 = vrot.slane %v223, %v1446
    %v1449 = vunpack.c.l.s4 842150450
    %v1450 = vunpack.c.0.s8 %v1449
    %v1451 = vlaneseq
    %v1452 = vshrl.u32 %v1451, 7
    %v1453 = vsub.s32 %v1450, %v1452
    %v1454 = vrot.slane %v223, %v1453
    %v1456 = vunpack.c.l.s4 1414812756
    %v1457 = vunpack.c.0.s8 %v1456
    %v1458 = vlaneseq
    %v1459 = vshrl.u32 %v1458, 7
    %v1460 = vsub.s32 %v1457, %v1459
    %v1461 = vrot.slane %v223, %v1460
    %v1463 = vunpack.c.l.s4 1987475062
    %v1464 = vunpack.c.0.s8 %v1463
    %v1465 = vlaneseq
    %v1466 = vshrl.u32 %v1465, 7
    %v1467 = vsub.s32 %v1464, %v1466
    %v1468 = vrot.slane %v223, %v1467
    %v1470 = vunpack.c.l.s4 269488144
    %v1471 = vunpack.c.0.s8 %v1470
    %v1472 = vlaneseq
    %v1473 = vshrl.u32 %v1472, 7
    %v1474 = vsub.s32 %v1471, %v1473
    %v1475 = vrot.slane %v226, %v1474
    %v1477 = vunpack.c.l.s4 842150450
    %v1478 = vunpack.c.0.s8 %v1477
    %v1479 = vlaneseq
    %v1480 = vshrl.u32 %v1479, 7
    %v1481 = vsub.s32 %v1478, %v1480
    %v1482 = vrot.slane %v226, %v1481
    %v1484 = vunpack.c.l.s4 1414812756
    %v1485 = vunpack.c.0.s8 %v1484
    %v1486 = vlaneseq
    %v1487 = vshrl.u32 %v1486, 7
    %v1488 = vsub.s32 %v1485, %v1487
    %v1489 = vrot.slane %v226, %v1488
    %v1491 = vunpack.c.l.s4 1987475062
    %v1492 = vunpack.c.0.s8 %v1491
    %v1493 = vlaneseq
    %v1494 = vshrl.u32 %v1493, 7
    %v1495 = vsub.s32 %v1492, %v1494
    %v1496 = vrot.slane %v226, %v1495
    %v1498 = vunpack.c.l.s4 269488144
    %v1499 = vunpack.c.0.s8 %v1498
    %v1500 = vlaneseq
    %v1501 = vshrl.u32 %v1500, 7
    %v1502 = vsub.s32 %v1499, %v1501
    %v1503 = vrot.slane %v229, %v1502
    %v1505 = vunpack.c.l.s4 842150450
    %v1506 = vunpack.c.0.s8 %v1505
    %v1507 = vlaneseq
    %v1508 = vshrl.u32 %v1507, 7
    %v1509 = vsub.s32 %v1506, %v1508
    %v1510 = vrot.slane %v229, %v1509
    %v1512 = vunpack.c.l.s4 1414812756
    %v1513 = vunpack.c.0.s8 %v1512
    %v1514 = vlaneseq
    %v1515 = vshrl.u32 %v1514, 7
    %v1516 = vsub.s32 %v1513, %v1515
    %v1517 = vrot.slane %v229, %v1516
    %v1519 = vunpack.c.l.s4 1987475062
    %v1520 = vunpack.c.0.s8 %v1519
    %v1521 = vlaneseq
    %v1522 = vshrl.u32 %v1521, 7
    %v1523 = vsub.s32 %v1520, %v1522
    %v1524 = vrot.slane %v229, %v1523
    %v1526 = vunpack.c.l.s4 269488144
    %v1527 = vunpack.c.0.s8 %v1526
    %v1528 = vlaneseq
    %v1529 = vshrl.u32 %v1528, 7
    %v1530 = vsub.s32 %v1527, %v1529
    %v1531 = vrot.slane %v232, %v1530
    %v1533 = vunpack.c.l.s4 842150450
    %v1534 = vunpack.c.0.s8 %v1533
    %v1535 = vlaneseq
    %v1536 = vshrl.u32 %v1535, 7
    %v1537 = vsub.s32 %v1534, %v1536
    %v1538 = vrot.slane %v232, %v1537
    %v1540 = vunpack.c.l.s4 1414812756
    %v1541 = vunpack.c.0.s8 %v1540
    %v1542 = vlaneseq
    %v1543 = vshrl.u32 %v1542, 7
    %v1544 = vsub.s32 %v1541, %v1543
    %v1545 = vrot.slane %v232, %v1544
    %v1547 = vunpack.c.l.s4 1987475062
    %v1548 = vunpack.c.0.s8 %v1547
    %v1549 = vlaneseq
    %v1550 = vshrl.u32 %v1549, 7
    %v1551 = vsub.s32 %v1548, %v1550
    %v1552 = vrot.slane %v232, %v1551
    %v1554 = vunpack.c.l.s4 269488144
    %v1555 = vunpack.c.0.s8 %v1554
    %v1556 = vlaneseq
    %v1557 = vshrl.u32 %v1556, 7
    %v1558 = vsub.s32 %v1555, %v1557
    %v1559 = vrot.slane %v235, %v1558
    %v1561 = vunpack.c.l.s4 842150450
    %v1562 = vunpack.c.0.s8 %v1561
    %v1563 = vlaneseq
    %v1564 = vshrl.u32 %v1563, 7
    %v1565 = vsub.s32 %v1562, %v1564
    %v1566 = vrot.slane %v235, %v1565
    %v1568 = vunpack.c.l.s4 1414812756
    %v1569 = vunpack.c.0.s8 %v1568
    %v1570 = vlaneseq
    %v1571 = vshrl.u32 %v1570, 7
    %v1572 = vsub.s32 %v1569, %v1571
    %v1573 = vrot.slane %v235, %v1572
    %v1575 = vunpack.c.l.s4 1987475062
    %v1576 = vunpack.c.0.s8 %v1575
    %v1577 = vlaneseq
    %v1578 = vshrl.u32 %v1577, 7
    %v1579 = vsub.s32 %v1576, %v1578
    %v1580 = vrot.slane %v235, %v1579
    %v1582 = vunpack.c.l.s4 269488144
    %v1583 = vunpack.c.0.s8 %v1582
    %v1584 = vlaneseq
    %v1585 = vshrl.u32 %v1584, 7
    %v1586 = vsub.s32 %v1583, %v1585
    %v1587 = vrot.slane %v238, %v1586
    %v1589 = vunpack.c.l.s4 842150450
    %v1590 = vunpack.c.0.s8 %v1589
    %v1591 = vlaneseq
    %v1592 = vshrl.u32 %v1591, 7
    %v1593 = vsub.s32 %v1590, %v1592
    %v1594 = vrot.slane %v238, %v1593
    %v1596 = vunpack.c.l.s4 1414812756
    %v1597 = vunpack.c.0.s8 %v1596
    %v1598 = vlaneseq
    %v1599 = vshrl.u32 %v1598, 7
    %v1600 = vsub.s32 %v1597, %v1599
    %v1601 = vrot.slane %v238, %v1600
    %v1603 = vunpack.c.l.s4 1987475062
    %v1604 = vunpack.c.0.s8 %v1603
    %v1605 = vlaneseq
    %v1606 = vshrl.u32 %v1605, 7
    %v1607 = vsub.s32 %v1604, %v1606
    %v1608 = vrot.slane %v238, %v1607
    %v1610 = vunpack.c.l.s4 269488144
    %v1611 = vunpack.c.0.s8 %v1610
    %v1612 = vlaneseq
    %v1613 = vshrl.u32 %v1612, 7
    %v1614 = vsub.s32 %v1611, %v1613
    %v1615 = vrot.slane %v241, %v1614
    %v1617 = vunpack.c.l.s4 842150450
    %v1618 = vunpack.c.0.s8 %v1617
    %v1619 = vlaneseq
    %v1620 = vshrl.u32 %v1619, 7
    %v1621 = vsub.s32 %v1618, %v1620
    %v1622 = vrot.slane %v241, %v1621
    %v1624 = vunpack.c.l.s4 1414812756
    %v1625 = vunpack.c.0.s8 %v1624
    %v1626 = vlaneseq
    %v1627 = vshrl.u32 %v1626, 7
    %v1628 = vsub.s32 %v1625, %v1627
    %v1629 = vrot.slane %v241, %v1628
    %v1631 = vunpack.c.l.s4 1987475062
    %v1632 = vunpack.c.0.s8 %v1631
    %v1633 = vlaneseq
    %v1634 = vshrl.u32 %v1633, 7
    %v1635 = vsub.s32 %v1632, %v1634
    %v1636 = vrot.slane %v241, %v1635
    %v1638 = vunpack.c.l.s4 269488144
    %v1639 = vunpack.c.0.s8 %v1638
    %v1640 = vlaneseq
    %v1641 = vshrl.u32 %v1640, 7
    %v1642 = vsub.s32 %v1639, %v1641
    %v1643 = vrot.slane %v244, %v1642
    %v1645 = vunpack.c.l.s4 842150450
    %v1646 = vunpack.c.0.s8 %v1645
    %v1647 = vlaneseq
    %v1648 = vshrl.u32 %v1647, 7
    %v1649 = vsub.s32 %v1646, %v1648
    %v1650 = vrot.slane %v244, %v1649
    %v1652 = vunpack.c.l.s4 1414812756
    %v1653 = vunpack.c.0.s8 %v1652
    %v1654 = vlaneseq
    %v1655 = vshrl.u32 %v1654, 7
    %v1656 = vsub.s32 %v1653, %v1655
    %v1657 = vrot.slane %v244, %v1656
    %v1659 = vunpack.c.l.s4 1987475062
    %v1660 = vunpack.c.0.s8 %v1659
    %v1661 = vlaneseq
    %v1662 = vshrl.u32 %v1661, 7
    %v1663 = vsub.s32 %v1660, %v1662
    %v1664 = vrot.slane %v244, %v1663
    %v1666 = vunpack.c.l.s4 269488144
    %v1667 = vunpack.c.0.s8 %v1666
    %v1668 = vlaneseq
    %v1669 = vshrl.u32 %v1668, 7
    %v1670 = vsub.s32 %v1667, %v1669
    %v1671 = vrot.slane %v247, %v1670
    %v1673 = vunpack.c.l.s4 842150450
    %v1674 = vunpack.c.0.s8 %v1673
    %v1675 = vlaneseq
    %v1676 = vshrl.u32 %v1675, 7
    %v1677 = vsub.s32 %v1674, %v1676
    %v1678 = vrot.slane %v247, %v1677
    %v1680 = vunpack.c.l.s4 1414812756
    %v1681 = vunpack.c.0.s8 %v1680
    %v1682 = vlaneseq
    %v1683 = vshrl.u32 %v1682, 7
    %v1684 = vsub.s32 %v1681, %v1683
    %v1685 = vrot.slane %v247, %v1684
    %v1687 = vunpack.c.l.s4 1987475062
    %v1688 = vunpack.c.0.s8 %v1687
    %v1689 = vlaneseq
    %v1690 = vshrl.u32 %v1689, 7
    %v1691 = vsub.s32 %v1688, %v1690
    %v1692 = vrot.slane %v247, %v1691
    %v1694 = vunpack.c.l.s4 269488144
    %v1695 = vunpack.c.0.s8 %v1694
    %v1696 = vlaneseq
    %v1697 = vshrl.u32 %v1696, 7
    %v1698 = vsub.s32 %v1695, %v1697
    %v1699 = vrot.slane %v250, %v1698
    %v1701 = vunpack.c.l.s4 842150450
    %v1702 = vunpack.c.0.s8 %v1701
    %v1703 = vlaneseq
    %v1704 = vshrl.u32 %v1703, 7
    %v1705 = vsub.s32 %v1702, %v1704
    %v1706 = vrot.slane %v250, %v1705
    %v1708 = vunpack.c.l.s4 1414812756
    %v1709 = vunpack.c.0.s8 %v1708
    %v1710 = vlaneseq
    %v1711 = vshrl.u32 %v1710, 7
    %v1712 = vsub.s32 %v1709, %v1711
    %v1713 = vrot.slane %v250, %v1712
    %v1715 = vunpack.c.l.s4 1987475062
    %v1716 = vunpack.c.0.s8 %v1715
    %v1717 = vlaneseq
    %v1718 = vshrl.u32 %v1717, 7
    %v1719 = vsub.s32 %v1716, %v1718
    %v1720 = vrot.slane %v250, %v1719
    %v1722 = vunpack.c.l.s4 269488144
    %v1723 = vunpack.c.0.s8 %v1722
    %v1724 = vlaneseq
    %v1725 = vshrl.u32 %v1724, 7
    %v1726 = vsub.s32 %v1723, %v1725
    %v1727 = vrot.slane %v253, %v1726
    %v1729 = vunpack.c.l.s4 842150450
    %v1730 = vunpack.c.0.s8 %v1729
    %v1731 = vlaneseq
    %v1732 = vshrl.u32 %v1731, 7
    %v1733 = vsub.s32 %v1730, %v1732
    %v1734 = vrot.slane %v253, %v1733
    %v1736 = vunpack.c.l.s4 1414812756
    %v1737 = vunpack.c.0.s8 %v1736
    %v1738 = vlaneseq
    %v1739 = vshrl.u32 %v1738, 7
    %v1740 = vsub.s32 %v1737, %v1739
    %v1741 = vrot.slane %v253, %v1740
    %v1743 = vunpack.c.l.s4 1987475062
    %v1744 = vunpack.c.0.s8 %v1743
    %v1745 = vlaneseq
    %v1746 = vshrl.u32 %v1745, 7
    %v1747 = vsub.s32 %v1744, %v1746
    %v1748 = vrot.slane %v253, %v1747
    %v1750 = vunpack.c.l.s4 269488144
    %v1751 = vunpack.c.0.s8 %v1750
    %v1752 = vlaneseq
    %v1753 = vshrl.u32 %v1752, 7
    %v1754 = vsub.s32 %v1751, %v1753
    %v1755 = vrot.slane %v256, %v1754
    %v1757 = vunpack.c.l.s4 842150450
    %v1758 = vunpack.c.0.s8 %v1757
    %v1759 = vlaneseq
    %v1760 = vshrl.u32 %v1759, 7
    %v1761 = vsub.s32 %v1758, %v1760
    %v1762 = vrot.slane %v256, %v1761
    %v1764 = vunpack.c.l.s4 1414812756
    %v1765 = vunpack.c.0.s8 %v1764
    %v1766 = vlaneseq
    %v1767 = vshrl.u32 %v1766, 7
    %v1768 = vsub.s32 %v1765, %v1767
    %v1769 = vrot.slane %v256, %v1768
    %v1771 = vunpack.c.l.s4 1987475062
    %v1772 = vunpack.c.0.s8 %v1771
    %v1773 = vlaneseq
    %v1774 = vshrl.u32 %v1773, 7
    %v1775 = vsub.s32 %v1772, %v1774
    %v1776 = vrot.slane %v256, %v1775
    %v1778 = vunpack.c.l.s4 269488144
    %v1779 = vunpack.c.0.s8 %v1778
    %v1780 = vlaneseq
    %v1781 = vshrl.u32 %v1780, 7
    %v1782 = vsub.s32 %v1779, %v1781
    %v1783 = vrot.slane %v259, %v1782
    %v1785 = vunpack.c.l.s4 842150450
    %v1786 = vunpack.c.0.s8 %v1785
    %v1787 = vlaneseq
    %v1788 = vshrl.u32 %v1787, 7
    %v1789 = vsub.s32 %v1786, %v1788
    %v1790 = vrot.slane %v259, %v1789
    %v1792 = vunpack.c.l.s4 1414812756
    %v1793 = vunpack.c.0.s8 %v1792
    %v1794 = vlaneseq
    %v1795 = vshrl.u32 %v1794, 7
    %v1796 = vsub.s32 %v1793, %v1795
    %v1797 = vrot.slane %v259, %v1796
    %v1799 = vunpack.c.l.s4 1987475062
    %v1800 = vunpack.c.0.s8 %v1799
    %v1801 = vlaneseq
    %v1802 = vshrl.u32 %v1801, 7
    %v1803 = vsub.s32 %v1800, %v1802
    %v1804 = vrot.slane %v259, %v1803
    %v1806 = vunpack.c.l.s4 269488144
    %v1807 = vunpack.c.0.s8 %v1806
    %v1808 = vlaneseq
    %v1809 = vshrl.u32 %v1808, 7
    %v1810 = vsub.s32 %v1807, %v1809
    %v1811 = vrot.slane %v262, %v1810
    %v1813 = vunpack.c.l.s4 842150450
    %v1814 = vunpack.c.0.s8 %v1813
    %v1815 = vlaneseq
    %v1816 = vshrl.u32 %v1815, 7
    %v1817 = vsub.s32 %v1814, %v1816
    %v1818 = vrot.slane %v262, %v1817
    %v1820 = vunpack.c.l.s4 1414812756
    %v1821 = vunpack.c.0.s8 %v1820
    %v1822 = vlaneseq
    %v1823 = vshrl.u32 %v1822, 7
    %v1824 = vsub.s32 %v1821, %v1823
    %v1825 = vrot.slane %v262, %v1824
    %v1827 = vunpack.c.l.s4 1987475062
    %v1828 = vunpack.c.0.s8 %v1827
    %v1829 = vlaneseq
    %v1830 = vshrl.u32 %v1829, 7
    %v1831 = vsub.s32 %v1828, %v1830
    %v1832 = vrot.slane %v262, %v1831
    %v1834 = vunpack.c.l.s4 269488144
    %v1835 = vunpack.c.0.s8 %v1834
    %v1836 = vlaneseq
    %v1837 = vshrl.u32 %v1836, 7
    %v1838 = vsub.s32 %v1835, %v1837
    %v1839 = vrot.slane %v265, %v1838
    %v1841 = vunpack.c.l.s4 842150450
    %v1842 = vunpack.c.0.s8 %v1841
    %v1843 = vlaneseq
    %v1844 = vshrl.u32 %v1843, 7
    %v1845 = vsub.s32 %v1842, %v1844
    %v1846 = vrot.slane %v265, %v1845
    %v1848 = vunpack.c.l.s4 1414812756
    %v1849 = vunpack.c.0.s8 %v1848
    %v1850 = vlaneseq
    %v1851 = vshrl.u32 %v1850, 7
    %v1852 = vsub.s32 %v1849, %v1851
    %v1853 = vrot.slane %v265, %v1852
    %v1855 = vunpack.c.l.s4 1987475062
    %v1856 = vunpack.c.0.s8 %v1855
    %v1857 = vlaneseq
    %v1858 = vshrl.u32 %v1857, 7
    %v1859 = vsub.s32 %v1856, %v1858
    %v1860 = vrot.slane %v265, %v1859
    %v1862 = vunpack.c.l.s4 269488144
    %v1863 = vunpack.c.0.s8 %v1862
    %v1864 = vlaneseq
    %v1865 = vshrl.u32 %v1864, 7
    %v1866 = vsub.s32 %v1863, %v1865
    %v1867 = vrot.slane %v268, %v1866
    %v1869 = vunpack.c.l.s4 842150450
    %v1870 = vunpack.c.0.s8 %v1869
    %v1871 = vlaneseq
    %v1872 = vshrl.u32 %v1871, 7
    %v1873 = vsub.s32 %v1870, %v1872
    %v1874 = vrot.slane %v268, %v1873
    %v1876 = vunpack.c.l.s4 1414812756
    %v1877 = vunpack.c.0.s8 %v1876
    %v1878 = vlaneseq
    %v1879 = vshrl.u32 %v1878, 7
    %v1880 = vsub.s32 %v1877, %v1879
    %v1881 = vrot.slane %v268, %v1880
    %v1883 = vunpack.c.l.s4 1987475062
    %v1884 = vunpack.c.0.s8 %v1883
    %v1885 = vlaneseq
    %v1886 = vshrl.u32 %v1885, 7
    %v1887 = vsub.s32 %v1884, %v1886
    %v1888 = vrot.slane %v268, %v1887
    %v1890 = vunpack.c.l.s4 269488144
    %v1891 = vunpack.c.0.s8 %v1890
    %v1892 = vlaneseq
    %v1893 = vshrl.u32 %v1892, 7
    %v1894 = vsub.s32 %v1891, %v1893
    %v1895 = vrot.slane %v271, %v1894
    %v1897 = vunpack.c.l.s4 842150450
    %v1898 = vunpack.c.0.s8 %v1897
    %v1899 = vlaneseq
    %v1900 = vshrl.u32 %v1899, 7
    %v1901 = vsub.s32 %v1898, %v1900
    %v1902 = vrot.slane %v271, %v1901
    %v1904 = vunpack.c.l.s4 1414812756
    %v1905 = vunpack.c.0.s8 %v1904
    %v1906 = vlaneseq
    %v1907 = vshrl.u32 %v1906, 7
    %v1908 = vsub.s32 %v1905, %v1907
    %v1909 = vrot.slane %v271, %v1908
    %v1911 = vunpack.c.l.s4 1987475062
    %v1912 = vunpack.c.0.s8 %v1911
    %v1913 = vlaneseq
    %v1914 = vshrl.u32 %v1913, 7
    %v1915 = vsub.s32 %v1912, %v1914
    %v1916 = vrot.slane %v271, %v1915
    %v1918 = vunpack.c.l.s4 269488144
    %v1919 = vunpack.c.0.s8 %v1918
    %v1920 = vlaneseq
    %v1921 = vshrl.u32 %v1920, 7
    %v1922 = vsub.s32 %v1919, %v1921
    %v1923 = vrot.slane %v274, %v1922
    %v1925 = vunpack.c.l.s4 842150450
    %v1926 = vunpack.c.0.s8 %v1925
    %v1927 = vlaneseq
    %v1928 = vshrl.u32 %v1927, 7
    %v1929 = vsub.s32 %v1926, %v1928
    %v1930 = vrot.slane %v274, %v1929
    %v1932 = vunpack.c.l.s4 1414812756
    %v1933 = vunpack.c.0.s8 %v1932
    %v1934 = vlaneseq
    %v1935 = vshrl.u32 %v1934, 7
    %v1936 = vsub.s32 %v1933, %v1935
    %v1937 = vrot.slane %v274, %v1936
    %v1939 = vunpack.c.l.s4 1987475062
    %v1940 = vunpack.c.0.s8 %v1939
    %v1941 = vlaneseq
    %v1942 = vshrl.u32 %v1941, 7
    %v1943 = vsub.s32 %v1940, %v1942
    %v1944 = vrot.slane %v274, %v1943
    %v1946 = vunpack.c.l.s4 269488144
    %v1947 = vunpack.c.0.s8 %v1946
    %v1948 = vlaneseq
    %v1949 = vshrl.u32 %v1948, 7
    %v1950 = vsub.s32 %v1947, %v1949
    %v1951 = vrot.slane %v277, %v1950
    %v1953 = vunpack.c.l.s4 842150450
    %v1954 = vunpack.c.0.s8 %v1953
    %v1955 = vlaneseq
    %v1956 = vshrl.u32 %v1955, 7
    %v1957 = vsub.s32 %v1954, %v1956
    %v1958 = vrot.slane %v277, %v1957
    %v1960 = vunpack.c.l.s4 1414812756
    %v1961 = vunpack.c.0.s8 %v1960
    %v1962 = vlaneseq
    %v1963 = vshrl.u32 %v1962, 7
    %v1964 = vsub.s32 %v1961, %v1963
    %v1965 = vrot.slane %v277, %v1964
    %v1967 = vunpack.c.l.s4 1987475062
    %v1968 = vunpack.c.0.s8 %v1967
    %v1969 = vlaneseq
    %v1970 = vshrl.u32 %v1969, 7
    %v1971 = vsub.s32 %v1968, %v1970
    %v1972 = vrot.slane %v277, %v1971
    %v1974 = vunpack.c.l.s4 269488144
    %v1975 = vunpack.c.0.s8 %v1974
    %v1976 = vlaneseq
    %v1977 = vshrl.u32 %v1976, 7
    %v1978 = vsub.s32 %v1975, %v1977
    %v1979 = vrot.slane %v280, %v1978
    %v1981 = vunpack.c.l.s4 842150450
    %v1982 = vunpack.c.0.s8 %v1981
    %v1983 = vlaneseq
    %v1984 = vshrl.u32 %v1983, 7
    %v1985 = vsub.s32 %v1982, %v1984
    %v1986 = vrot.slane %v280, %v1985
    %v1988 = vunpack.c.l.s4 1414812756
    %v1989 = vunpack.c.0.s8 %v1988
    %v1990 = vlaneseq
    %v1991 = vshrl.u32 %v1990, 7
    %v1992 = vsub.s32 %v1989, %v1991
    %v1993 = vrot.slane %v280, %v1992
    %v1995 = vunpack.c.l.s4 1987475062
    %v1996 = vunpack.c.0.s8 %v1995
    %v1997 = vlaneseq
    %v1998 = vshrl.u32 %v1997, 7
    %v1999 = vsub.s32 %v1996, %v1998
    %v2000 = vrot.slane %v280, %v1999
    %v2002 = vunpack.c.l.s4 269488144
    %v2003 = vunpack.c.0.s8 %v2002
    %v2004 = vlaneseq
    %v2005 = vshrl.u32 %v2004, 7
    %v2006 = vsub.s32 %v2003, %v2005
    %v2007 = vrot.slane %v283, %v2006
    %v2009 = vunpack.c.l.s4 842150450
    %v2010 = vunpack.c.0.s8 %v2009
    %v2011 = vlaneseq
    %v2012 = vshrl.u32 %v2011, 7
    %v2013 = vsub.s32 %v2010, %v2012
    %v2014 = vrot.slane %v283, %v2013
    %v2016 = vunpack.c.l.s4 1414812756
    %v2017 = vunpack.c.0.s8 %v2016
    %v2018 = vlaneseq
    %v2019 = vshrl.u32 %v2018, 7
    %v2020 = vsub.s32 %v2017, %v2019
    %v2021 = vrot.slane %v283, %v2020
    %v2023 = vunpack.c.l.s4 1987475062
    %v2024 = vunpack.c.0.s8 %v2023
    %v2025 = vlaneseq
    %v2026 = vshrl.u32 %v2025, 7
    %v2027 = vsub.s32 %v2024, %v2026
    %v2028 = vrot.slane %v283, %v2027
    %v2030 = vunpack.c.l.s4 269488144
    %v2031 = vunpack.c.0.s8 %v2030
    %v2032 = vlaneseq
    %v2033 = vshrl.u32 %v2032, 7
    %v2034 = vsub.s32 %v2031, %v2033
    %v2035 = vrot.slane %v286, %v2034
    %v2037 = vunpack.c.l.s4 842150450
    %v2038 = vunpack.c.0.s8 %v2037
    %v2039 = vlaneseq
    %v2040 = vshrl.u32 %v2039, 7
    %v2041 = vsub.s32 %v2038, %v2040
    %v2042 = vrot.slane %v286, %v2041
    %v2044 = vunpack.c.l.s4 1414812756
    %v2045 = vunpack.c.0.s8 %v2044
    %v2046 = vlaneseq
    %v2047 = vshrl.u32 %v2046, 7
    %v2048 = vsub.s32 %v2045, %v2047
    %v2049 = vrot.slane %v286, %v2048
    %v2051 = vunpack.c.l.s4 1987475062
    %v2052 = vunpack.c.0.s8 %v2051
    %v2053 = vlaneseq
    %v2054 = vshrl.u32 %v2053, 7
    %v2055 = vsub.s32 %v2052, %v2054
    %v2056 = vrot.slane %v286, %v2055
    %v2058 = vunpack.c.l.s4 269488144
    %v2059 = vunpack.c.0.s8 %v2058
    %v2060 = vlaneseq
    %v2061 = vshrl.u32 %v2060, 7
    %v2062 = vsub.s32 %v2059, %v2061
    %v2063 = vrot.slane %v289, %v2062
    %v2065 = vunpack.c.l.s4 842150450
    %v2066 = vunpack.c.0.s8 %v2065
    %v2067 = vlaneseq
    %v2068 = vshrl.u32 %v2067, 7
    %v2069 = vsub.s32 %v2066, %v2068
    %v2070 = vrot.slane %v289, %v2069
    %v2072 = vunpack.c.l.s4 1414812756
    %v2073 = vunpack.c.0.s8 %v2072
    %v2074 = vlaneseq
    %v2075 = vshrl.u32 %v2074, 7
    %v2076 = vsub.s32 %v2073, %v2075
    %v2077 = vrot.slane %v289, %v2076
    %v2079 = vunpack.c.l.s4 1987475062
    %v2080 = vunpack.c.0.s8 %v2079
    %v2081 = vlaneseq
    %v2082 = vshrl.u32 %v2081, 7
    %v2083 = vsub.s32 %v2080, %v2082
    %v2084 = vrot.slane %v289, %v2083
    %v2086 = vunpack.c.l.s4 269488144
    %v2087 = vunpack.c.0.s8 %v2086
    %v2088 = vlaneseq
    %v2089 = vshrl.u32 %v2088, 7
    %v2090 = vsub.s32 %v2087, %v2089
    %v2091 = vrot.slane %v292, %v2090
    %v2093 = vunpack.c.l.s4 842150450
    %v2094 = vunpack.c.0.s8 %v2093
    %v2095 = vlaneseq
    %v2096 = vshrl.u32 %v2095, 7
    %v2097 = vsub.s32 %v2094, %v2096
    %v2098 = vrot.slane %v292, %v2097
    %v2100 = vunpack.c.l.s4 1414812756
    %v2101 = vunpack.c.0.s8 %v2100
    %v2102 = vlaneseq
    %v2103 = vshrl.u32 %v2102, 7
    %v2104 = vsub.s32 %v2101, %v2103
    %v2105 = vrot.slane %v292, %v2104
    %v2107 = vunpack.c.l.s4 1987475062
    %v2108 = vunpack.c.0.s8 %v2107
    %v2109 = vlaneseq
    %v2110 = vshrl.u32 %v2109, 7
    %v2111 = vsub.s32 %v2108, %v2110
    %v2112 = vrot.slane %v292, %v2111
    %v2114 = vunpack.c.l.s4 269488144
    %v2115 = vunpack.c.0.s8 %v2114
    %v2116 = vlaneseq
    %v2117 = vshrl.u32 %v2116, 7
    %v2118 = vsub.s32 %v2115, %v2117
    %v2119 = vrot.slane %v295, %v2118
    %v2121 = vunpack.c.l.s4 842150450
    %v2122 = vunpack.c.0.s8 %v2121
    %v2123 = vlaneseq
    %v2124 = vshrl.u32 %v2123, 7
    %v2125 = vsub.s32 %v2122, %v2124
    %v2126 = vrot.slane %v295, %v2125
    %v2128 = vunpack.c.l.s4 1414812756
    %v2129 = vunpack.c.0.s8 %v2128
    %v2130 = vlaneseq
    %v2131 = vshrl.u32 %v2130, 7
    %v2132 = vsub.s32 %v2129, %v2131
    %v2133 = vrot.slane %v295, %v2132
    %v2135 = vunpack.c.l.s4 1987475062
    %v2136 = vunpack.c.0.s8 %v2135
    %v2137 = vlaneseq
    %v2138 = vshrl.u32 %v2137, 7
    %v2139 = vsub.s32 %v2136, %v2138
    %v2140 = vrot.slane %v295, %v2139
    %v2142 = vunpack.c.l.s4 269488144
    %v2143 = vunpack.c.0.s8 %v2142
    %v2144 = vlaneseq
    %v2145 = vshrl.u32 %v2144, 7
    %v2146 = vsub.s32 %v2143, %v2145
    %v2147 = vrot.slane %v298, %v2146
    %v2149 = vunpack.c.l.s4 842150450
    %v2150 = vunpack.c.0.s8 %v2149
    %v2151 = vlaneseq
    %v2152 = vshrl.u32 %v2151, 7
    %v2153 = vsub.s32 %v2150, %v2152
    %v2154 = vrot.slane %v298, %v2153
    %v2156 = vunpack.c.l.s4 1414812756
    %v2157 = vunpack.c.0.s8 %v2156
    %v2158 = vlaneseq
    %v2159 = vshrl.u32 %v2158, 7
    %v2160 = vsub.s32 %v2157, %v2159
    %v2161 = vrot.slane %v298, %v2160
    %v2163 = vunpack.c.l.s4 1987475062
    %v2164 = vunpack.c.0.s8 %v2163
    %v2165 = vlaneseq
    %v2166 = vshrl.u32 %v2165, 7
    %v2167 = vsub.s32 %v2164, %v2166
    %v2168 = vrot.slane %v298, %v2167
    %v2170 = vunpack.c.l.s4 269488144
    %v2171 = vunpack.c.0.s8 %v2170
    %v2172 = vlaneseq
    %v2173 = vshrl.u32 %v2172, 7
    %v2174 = vsub.s32 %v2171, %v2173
    %v2175 = vrot.slane %v301, %v2174
    %v2177 = vunpack.c.l.s4 842150450
    %v2178 = vunpack.c.0.s8 %v2177
    %v2179 = vlaneseq
    %v2180 = vshrl.u32 %v2179, 7
    %v2181 = vsub.s32 %v2178, %v2180
    %v2182 = vrot.slane %v301, %v2181
    %v2184 = vunpack.c.l.s4 1414812756
    %v2185 = vunpack.c.0.s8 %v2184
    %v2186 = vlaneseq
    %v2187 = vshrl.u32 %v2186, 7
    %v2188 = vsub.s32 %v2185, %v2187
    %v2189 = vrot.slane %v301, %v2188
    %v2191 = vunpack.c.l.s4 1987475062
    %v2192 = vunpack.c.0.s8 %v2191
    %v2193 = vlaneseq
    %v2194 = vshrl.u32 %v2193, 7
    %v2195 = vsub.s32 %v2192, %v2194
    %v2196 = vrot.slane %v301, %v2195
    %v2198 = vunpack.c.l.s4 269488144
    %v2199 = vunpack.c.0.s8 %v2198
    %v2200 = vlaneseq
    %v2201 = vshrl.u32 %v2200, 7
    %v2202 = vsub.s32 %v2199, %v2201
    %v2203 = vrot.slane %v304, %v2202
    %v2205 = vunpack.c.l.s4 842150450
    %v2206 = vunpack.c.0.s8 %v2205
    %v2207 = vlaneseq
    %v2208 = vshrl.u32 %v2207, 7
    %v2209 = vsub.s32 %v2206, %v2208
    %v2210 = vrot.slane %v304, %v2209
    %v2212 = vunpack.c.l.s4 1414812756
    %v2213 = vunpack.c.0.s8 %v2212
    %v2214 = vlaneseq
    %v2215 = vshrl.u32 %v2214, 7
    %v2216 = vsub.s32 %v2213, %v2215
    %v2217 = vrot.slane %v304, %v2216
    %v2219 = vunpack.c.l.s4 1987475062
    %v2220 = vunpack.c.0.s8 %v2219
    %v2221 = vlaneseq
    %v2222 = vshrl.u32 %v2221, 7
    %v2223 = vsub.s32 %v2220, %v2222
    %v2224 = vrot.slane %v304, %v2223
    %v2226 = vunpack.c.l.s4 269488144
    %v2227 = vunpack.c.0.s8 %v2226
    %v2228 = vlaneseq
    %v2229 = vshrl.u32 %v2228, 7
    %v2230 = vsub.s32 %v2227, %v2229
    %v2231 = vrot.slane %v307, %v2230
    %v2233 = vunpack.c.l.s4 842150450
    %v2234 = vunpack.c.0.s8 %v2233
    %v2235 = vlaneseq
    %v2236 = vshrl.u32 %v2235, 7
    %v2237 = vsub.s32 %v2234, %v2236
    %v2238 = vrot.slane %v307, %v2237
    %v2240 = vunpack.c.l.s4 1414812756
    %v2241 = vunpack.c.0.s8 %v2240
    %v2242 = vlaneseq
    %v2243 = vshrl.u32 %v2242, 7
    %v2244 = vsub.s32 %v2241, %v2243
    %v2245 = vrot.slane %v307, %v2244
    %v2247 = vunpack.c.l.s4 1987475062
    %v2248 = vunpack.c.0.s8 %v2247
    %v2249 = vlaneseq
    %v2250 = vshrl.u32 %v2249, 7
    %v2251 = vsub.s32 %v2248, %v2250
    %v2252 = vrot.slane %v307, %v2251
    %v2254 = vunpack.c.l.s4 269488144
    %v2255 = vunpack.c.0.s8 %v2254
    %v2256 = vlaneseq
    %v2257 = vshrl.u32 %v2256, 7
    %v2258 = vsub.s32 %v2255, %v2257
    %v2259 = vrot.slane %v310, %v2258
    %v2261 = vunpack.c.l.s4 842150450
    %v2262 = vunpack.c.0.s8 %v2261
    %v2263 = vlaneseq
    %v2264 = vshrl.u32 %v2263, 7
    %v2265 = vsub.s32 %v2262, %v2264
    %v2266 = vrot.slane %v310, %v2265
    %v2268 = vunpack.c.l.s4 1414812756
    %v2269 = vunpack.c.0.s8 %v2268
    %v2270 = vlaneseq
    %v2271 = vshrl.u32 %v2270, 7
    %v2272 = vsub.s32 %v2269, %v2271
    %v2273 = vrot.slane %v310, %v2272
    %v2275 = vunpack.c.l.s4 1987475062
    %v2276 = vunpack.c.0.s8 %v2275
    %v2277 = vlaneseq
    %v2278 = vshrl.u32 %v2277, 7
    %v2279 = vsub.s32 %v2276, %v2278
    %v2280 = vrot.slane %v310, %v2279
    %v2282 = vunpack.c.l.s4 269488144
    %v2283 = vunpack.c.0.s8 %v2282
    %v2284 = vlaneseq
    %v2285 = vshrl.u32 %v2284, 7
    %v2286 = vsub.s32 %v2283, %v2285
    %v2287 = vrot.slane %v313, %v2286
    %v2289 = vunpack.c.l.s4 842150450
    %v2290 = vunpack.c.0.s8 %v2289
    %v2291 = vlaneseq
    %v2292 = vshrl.u32 %v2291, 7
    %v2293 = vsub.s32 %v2290, %v2292
    %v2294 = vrot.slane %v313, %v2293
    %v2296 = vunpack.c.l.s4 1414812756
    %v2297 = vunpack.c.0.s8 %v2296
    %v2298 = vlaneseq
    %v2299 = vshrl.u32 %v2298, 7
    %v2300 = vsub.s32 %v2297, %v2299
    %v2301 = vrot.slane %v313, %v2300
    %v2303 = vunpack.c.l.s4 1987475062
    %v2304 = vunpack.c.0.s8 %v2303
    %v2305 = vlaneseq
    %v2306 = vshrl.u32 %v2305, 7
    %v2307 = vsub.s32 %v2304, %v2306
    %v2308 = vrot.slane %v313, %v2307
    %v2310 = vunpack.c.l.s4 269488144
    %v2311 = vunpack.c.0.s8 %v2310
    %v2312 = vlaneseq
    %v2313 = vshrl.u32 %v2312, 7
    %v2314 = vsub.s32 %v2311, %v2313
    %v2315 = vrot.slane %v316, %v2314
    %v2317 = vunpack.c.l.s4 842150450
    %v2318 = vunpack.c.0.s8 %v2317
    %v2319 = vlaneseq
    %v2320 = vshrl.u32 %v2319, 7
    %v2321 = vsub.s32 %v2318, %v2320
    %v2322 = vrot.slane %v316, %v2321
    %v2324 = vunpack.c.l.s4 1414812756
    %v2325 = vunpack.c.0.s8 %v2324
    %v2326 = vlaneseq
    %v2327 = vshrl.u32 %v2326, 7
    %v2328 = vsub.s32 %v2325, %v2327
    %v2329 = vrot.slane %v316, %v2328
    %v2331 = vunpack.c.l.s4 1987475062
    %v2332 = vunpack.c.0.s8 %v2331
    %v2333 = vlaneseq
    %v2334 = vshrl.u32 %v2333, 7
    %v2335 = vsub.s32 %v2332, %v2334
    %v2336 = vrot.slane %v316, %v2335
    %v2338 = vunpack.c.l.s4 269488144
    %v2339 = vunpack.c.0.s8 %v2338
    %v2340 = vlaneseq
    %v2341 = vshrl.u32 %v2340, 7
    %v2342 = vsub.s32 %v2339, %v2341
    %v2343 = vrot.slane %v319, %v2342
    %v2345 = vunpack.c.l.s4 842150450
    %v2346 = vunpack.c.0.s8 %v2345
    %v2347 = vlaneseq
    %v2348 = vshrl.u32 %v2347, 7
    %v2349 = vsub.s32 %v2346, %v2348
    %v2350 = vrot.slane %v319, %v2349
    %v2352 = vunpack.c.l.s4 1414812756
    %v2353 = vunpack.c.0.s8 %v2352
    %v2354 = vlaneseq
    %v2355 = vshrl.u32 %v2354, 7
    %v2356 = vsub.s32 %v2353, %v2355
    %v2357 = vrot.slane %v319, %v2356
    %v2359 = vunpack.c.l.s4 1987475062
    %v2360 = vunpack.c.0.s8 %v2359
    %v2361 = vlaneseq
    %v2362 = vshrl.u32 %v2361, 7
    %v2363 = vsub.s32 %v2360, %v2362
    %v2364 = vrot.slane %v319, %v2363
    %v2366 = vunpack.c.l.s4 269488144
    %v2367 = vunpack.c.0.s8 %v2366
    %v2368 = vlaneseq
    %v2369 = vshrl.u32 %v2368, 7
    %v2370 = vsub.s32 %v2367, %v2369
    %v2371 = vrot.slane %v322, %v2370
    %v2373 = vunpack.c.l.s4 842150450
    %v2374 = vunpack.c.0.s8 %v2373
    %v2375 = vlaneseq
    %v2376 = vshrl.u32 %v2375, 7
    %v2377 = vsub.s32 %v2374, %v2376
    %v2378 = vrot.slane %v322, %v2377
    %v2380 = vunpack.c.l.s4 1414812756
    %v2381 = vunpack.c.0.s8 %v2380
    %v2382 = vlaneseq
    %v2383 = vshrl.u32 %v2382, 7
    %v2384 = vsub.s32 %v2381, %v2383
    %v2385 = vrot.slane %v322, %v2384
    %v2387 = vunpack.c.l.s4 1987475062
    %v2388 = vunpack.c.0.s8 %v2387
    %v2389 = vlaneseq
    %v2390 = vshrl.u32 %v2389, 7
    %v2391 = vsub.s32 %v2388, %v2390
    %v2392 = vrot.slane %v322, %v2391
    %v2394 = vunpack.c.l.s4 269488144
    %v2395 = vunpack.c.0.s8 %v2394
    %v2396 = vlaneseq
    %v2397 = vshrl.u32 %v2396, 7
    %v2398 = vsub.s32 %v2395, %v2397
    %v2399 = vrot.slane %v325, %v2398
    %v2401 = vunpack.c.l.s4 842150450
    %v2402 = vunpack.c.0.s8 %v2401
    %v2403 = vlaneseq
    %v2404 = vshrl.u32 %v2403, 7
    %v2405 = vsub.s32 %v2402, %v2404
    %v2406 = vrot.slane %v325, %v2405
    %v2408 = vunpack.c.l.s4 1414812756
    %v2409 = vunpack.c.0.s8 %v2408
    %v2410 = vlaneseq
    %v2411 = vshrl.u32 %v2410, 7
    %v2412 = vsub.s32 %v2409, %v2411
    %v2413 = vrot.slane %v325, %v2412
    %v2415 = vunpack.c.l.s4 1987475062
    %v2416 = vunpack.c.0.s8 %v2415
    %v2417 = vlaneseq
    %v2418 = vshrl.u32 %v2417, 7
    %v2419 = vsub.s32 %v2416, %v2418
    %v2420 = vrot.slane %v325, %v2419
    %v2422 = vunpack.c.l.s4 269488144
    %v2423 = vunpack.c.0.s8 %v2422
    %v2424 = vlaneseq
    %v2425 = vshrl.u32 %v2424, 7
    %v2426 = vsub.s32 %v2423, %v2425
    %v2427 = vrot.slane %v328, %v2426
    %v2429 = vunpack.c.l.s4 842150450
    %v2430 = vunpack.c.0.s8 %v2429
    %v2431 = vlaneseq
    %v2432 = vshrl.u32 %v2431, 7
    %v2433 = vsub.s32 %v2430, %v2432
    %v2434 = vrot.slane %v328, %v2433
    %v2436 = vunpack.c.l.s4 1414812756
    %v2437 = vunpack.c.0.s8 %v2436
    %v2438 = vlaneseq
    %v2439 = vshrl.u32 %v2438, 7
    %v2440 = vsub.s32 %v2437, %v2439
    %v2441 = vrot.slane %v328, %v2440
    %v2443 = vunpack.c.l.s4 1987475062
    %v2444 = vunpack.c.0.s8 %v2443
    %v2445 = vlaneseq
    %v2446 = vshrl.u32 %v2445, 7
    %v2447 = vsub.s32 %v2444, %v2446
    %v2448 = vrot.slane %v328, %v2447
    %v2450 = vunpack.c.l.s4 269488144
    %v2451 = vunpack.c.0.s8 %v2450
    %v2452 = vlaneseq
    %v2453 = vshrl.u32 %v2452, 7
    %v2454 = vsub.s32 %v2451, %v2453
    %v2455 = vrot.slane %v331, %v2454
    %v2457 = vunpack.c.l.s4 842150450
    %v2458 = vunpack.c.0.s8 %v2457
    %v2459 = vlaneseq
    %v2460 = vshrl.u32 %v2459, 7
    %v2461 = vsub.s32 %v2458, %v2460
    %v2462 = vrot.slane %v331, %v2461
    %v2464 = vunpack.c.l.s4 1414812756
    %v2465 = vunpack.c.0.s8 %v2464
    %v2466 = vlaneseq
    %v2467 = vshrl.u32 %v2466, 7
    %v2468 = vsub.s32 %v2465, %v2467
    %v2469 = vrot.slane %v331, %v2468
    %v2471 = vunpack.c.l.s4 1987475062
    %v2472 = vunpack.c.0.s8 %v2471
    %v2473 = vlaneseq
    %v2474 = vshrl.u32 %v2473, 7
    %v2475 = vsub.s32 %v2472, %v2474
    %v2476 = vrot.slane %v331, %v2475
    %v2478 = vunpack.c.l.s4 269488144
    %v2479 = vunpack.c.0.s8 %v2478
    %v2480 = vlaneseq
    %v2481 = vshrl.u32 %v2480, 7
    %v2482 = vsub.s32 %v2479, %v2481
    %v2483 = vrot.slane %v334, %v2482
    %v2485 = vunpack.c.l.s4 842150450
    %v2486 = vunpack.c.0.s8 %v2485
    %v2487 = vlaneseq
    %v2488 = vshrl.u32 %v2487, 7
    %v2489 = vsub.s32 %v2486, %v2488
    %v2490 = vrot.slane %v334, %v2489
    %v2492 = vunpack.c.l.s4 1414812756
    %v2493 = vunpack.c.0.s8 %v2492
    %v2494 = vlaneseq
    %v2495 = vshrl.u32 %v2494, 7
    %v2496 = vsub.s32 %v2493, %v2495
    %v2497 = vrot.slane %v334, %v2496
    %v2499 = vunpack.c.l.s4 1987475062
    %v2500 = vunpack.c.0.s8 %v2499
    %v2501 = vlaneseq
    %v2502 = vshrl.u32 %v2501, 7
    %v2503 = vsub.s32 %v2500, %v2502
    %v2504 = vrot.slane %v334, %v2503
    %v2506 = vunpack.c.l.s4 269488144
    %v2507 = vunpack.c.0.s8 %v2506
    %v2508 = vlaneseq
    %v2509 = vshrl.u32 %v2508, 7
    %v2510 = vsub.s32 %v2507, %v2509
    %v2511 = vrot.slane %v337, %v2510
    %v2513 = vunpack.c.l.s4 842150450
    %v2514 = vunpack.c.0.s8 %v2513
    %v2515 = vlaneseq
    %v2516 = vshrl.u32 %v2515, 7
    %v2517 = vsub.s32 %v2514, %v2516
    %v2518 = vrot.slane %v337, %v2517
    %v2520 = vunpack.c.l.s4 1414812756
    %v2521 = vunpack.c.0.s8 %v2520
    %v2522 = vlaneseq
    %v2523 = vshrl.u32 %v2522, 7
    %v2524 = vsub.s32 %v2521, %v2523
    %v2525 = vrot.slane %v337, %v2524
    %v2527 = vunpack.c.l.s4 1987475062
    %v2528 = vunpack.c.0.s8 %v2527
    %v2529 = vlaneseq
    %v2530 = vshrl.u32 %v2529, 7
    %v2531 = vsub.s32 %v2528, %v2530
    %v2532 = vrot.slane %v337, %v2531
    %v2534 = vunpack.c.l.s4 269488144
    %v2535 = vunpack.c.0.s8 %v2534
    %v2536 = vlaneseq
    %v2537 = vshrl.u32 %v2536, 7
    %v2538 = vsub.s32 %v2535, %v2537
    %v2539 = vrot.slane %v340, %v2538
    %v2541 = vunpack.c.l.s4 842150450
    %v2542 = vunpack.c.0.s8 %v2541
    %v2543 = vlaneseq
    %v2544 = vshrl.u32 %v2543, 7
    %v2545 = vsub.s32 %v2542, %v2544
    %v2546 = vrot.slane %v340, %v2545
    %v2548 = vunpack.c.l.s4 1414812756
    %v2549 = vunpack.c.0.s8 %v2548
    %v2550 = vlaneseq
    %v2551 = vshrl.u32 %v2550, 7
    %v2552 = vsub.s32 %v2549, %v2551
    %v2553 = vrot.slane %v340, %v2552
    %v2555 = vunpack.c.l.s4 1987475062
    %v2556 = vunpack.c.0.s8 %v2555
    %v2557 = vlaneseq
    %v2558 = vshrl.u32 %v2557, 7
    %v2559 = vsub.s32 %v2556, %v2558
    %v2560 = vrot.slane %v340, %v2559
    %v2562 = vunpack.c.l.s4 269488144
    %v2563 = vunpack.c.0.s8 %v2562
    %v2564 = vlaneseq
    %v2565 = vshrl.u32 %v2564, 7
    %v2566 = vsub.s32 %v2563, %v2565
    %v2567 = vrot.slane %v343, %v2566
    %v2569 = vunpack.c.l.s4 842150450
    %v2570 = vunpack.c.0.s8 %v2569
    %v2571 = vlaneseq
    %v2572 = vshrl.u32 %v2571, 7
    %v2573 = vsub.s32 %v2570, %v2572
    %v2574 = vrot.slane %v343, %v2573
    %v2576 = vunpack.c.l.s4 1414812756
    %v2577 = vunpack.c.0.s8 %v2576
    %v2578 = vlaneseq
    %v2579 = vshrl.u32 %v2578, 7
    %v2580 = vsub.s32 %v2577, %v2579
    %v2581 = vrot.slane %v343, %v2580
    %v2583 = vunpack.c.l.s4 1987475062
    %v2584 = vunpack.c.0.s8 %v2583
    %v2585 = vlaneseq
    %v2586 = vshrl.u32 %v2585, 7
    %v2587 = vsub.s32 %v2584, %v2586
    %v2588 = vrot.slane %v343, %v2587
    %v2590 = vunpack.c.l.s4 269488144
    %v2591 = vunpack.c.0.s8 %v2590
    %v2592 = vlaneseq
    %v2593 = vshrl.u32 %v2592, 7
    %v2594 = vsub.s32 %v2591, %v2593
    %v2595 = vrot.slane %v346, %v2594
    %v2597 = vunpack.c.l.s4 842150450
    %v2598 = vunpack.c.0.s8 %v2597
    %v2599 = vlaneseq
    %v2600 = vshrl.u32 %v2599, 7
    %v2601 = vsub.s32 %v2598, %v2600
    %v2602 = vrot.slane %v346, %v2601
    %v2604 = vunpack.c.l.s4 1414812756
    %v2605 = vunpack.c.0.s8 %v2604
    %v2606 = vlaneseq
    %v2607 = vshrl.u32 %v2606, 7
    %v2608 = vsub.s32 %v2605, %v2607
    %v2609 = vrot.slane %v346, %v2608
    %v2611 = vunpack.c.l.s4 1987475062
    %v2612 = vunpack.c.0.s8 %v2611
    %v2613 = vlaneseq
    %v2614 = vshrl.u32 %v2613, 7
    %v2615 = vsub.s32 %v2612, %v2614
    %v2616 = vrot.slane %v346, %v2615
    %v2618 = vunpack.c.l.s4 269488144
    %v2619 = vunpack.c.0.s8 %v2618
    %v2620 = vlaneseq
    %v2621 = vshrl.u32 %v2620, 7
    %v2622 = vsub.s32 %v2619, %v2621
    %v2623 = vrot.slane %v349, %v2622
    %v2625 = vunpack.c.l.s4 842150450
    %v2626 = vunpack.c.0.s8 %v2625
    %v2627 = vlaneseq
    %v2628 = vshrl.u32 %v2627, 7
    %v2629 = vsub.s32 %v2626, %v2628
    %v2630 = vrot.slane %v349, %v2629
    %v2632 = vunpack.c.l.s4 1414812756
    %v2633 = vunpack.c.0.s8 %v2632
    %v2634 = vlaneseq
    %v2635 = vshrl.u32 %v2634, 7
    %v2636 = vsub.s32 %v2633, %v2635
    %v2637 = vrot.slane %v349, %v2636
    %v2639 = vunpack.c.l.s4 1987475062
    %v2640 = vunpack.c.0.s8 %v2639
    %v2641 = vlaneseq
    %v2642 = vshrl.u32 %v2641, 7
    %v2643 = vsub.s32 %v2640, %v2642
    %v2644 = vrot.slane %v349, %v2643
    %v2646 = vunpack.c.l.s4 269488144
    %v2647 = vunpack.c.0.s8 %v2646
    %v2648 = vlaneseq
    %v2649 = vshrl.u32 %v2648, 7
    %v2650 = vsub.s32 %v2647, %v2649
    %v2651 = vrot.slane %v352, %v2650
    %v2653 = vunpack.c.l.s4 842150450
    %v2654 = vunpack.c.0.s8 %v2653
    %v2655 = vlaneseq
    %v2656 = vshrl.u32 %v2655, 7
    %v2657 = vsub.s32 %v2654, %v2656
    %v2658 = vrot.slane %v352, %v2657
    %v2660 = vunpack.c.l.s4 1414812756
    %v2661 = vunpack.c.0.s8 %v2660
    %v2662 = vlaneseq
    %v2663 = vshrl.u32 %v2662, 7
    %v2664 = vsub.s32 %v2661, %v2663
    %v2665 = vrot.slane %v352, %v2664
    %v2667 = vunpack.c.l.s4 1987475062
    %v2668 = vunpack.c.0.s8 %v2667
    %v2669 = vlaneseq
    %v2670 = vshrl.u32 %v2669, 7
    %v2671 = vsub.s32 %v2668, %v2670
    %v2672 = vrot.slane %v352, %v2671
    %v2673 = vcombine.low %v439, %v446
    %v2674 = vcombine.low %v453, %v460
    %v2676 = vunpack.c.l.s4 1983009808
    %v2677 = vunpack.c.0.s8 %v2676
    %v2678 = vlaneseq
    %v2679 = vshrl.u32 %v2678, 7
    %v2680 = vsub.s32 %v2677, %v2679
    %v2681 = vrot.slane %v2673, %v2680
    %v2683 = vunpack.c.l.s4 1983009808
    %v2684 = vunpack.c.0.s8 %v2683
    %v2685 = vlaneseq
    %v2686 = vshrl.u32 %v2685, 7
    %v2687 = vsub.s32 %v2684, %v2686
    %v2688 = vrot.slane %v2674, %v2687
    %v2689 = vcombine.low %v2681, %v2688
    %v2690 = vcombine.low %v467, %v474
    %v2691 = vcombine.low %v481, %v488
    %v2693 = vunpack.c.l.s4 1983009808
    %v2694 = vunpack.c.0.s8 %v2693
    %v2695 = vlaneseq
    %v2696 = vshrl.u32 %v2695, 7
    %v2697 = vsub.s32 %v2694, %v2696
    %v2698 = vrot.slane %v2690, %v2697
    %v2700 = vunpack.c.l.s4 1983009808
    %v2701 = vunpack.c.0.s8 %v2700
    %v2702 = vlaneseq
    %v2703 = vshrl.u32 %v2702, 7
    %v2704 = vsub.s32 %v2701, %v2703
    %v2705 = vrot.slane %v2691, %v2704
    %v2706 = vcombine.low %v2698, %v2705
    %v2707 = vcombine.low %v495, %v502
    %v2708 = vcombine.low %v509, %v516
    %v2710 = vunpack.c.l.s4 1983009808
    %v2711 = vunpack.c.0.s8 %v2710
    %v2712 = vlaneseq
    %v2713 = vshrl.u32 %v2712, 7
    %v2714 = vsub.s32 %v2711, %v2713
    %v2715 = vrot.slane %v2707, %v2714
    %v2717 = vunpack.c.l.s4 1983009808
    %v2718 = vunpack.c.0.s8 %v2717
    %v2719 = vlaneseq
    %v2720 = vshrl.u32 %v2719, 7
    %v2721 = vsub.s32 %v2718, %v2720
    %v2722 = vrot.slane %v2708, %v2721
    %v2723 = vcombine.low %v2715, %v2722
    %v2724 = vcombine.low %v523, %v530
    %v2725 = vcombine.low %v537, %v544
    %v2727 = vunpack.c.l.s4 1983009808
    %v2728 = vunpack.c.0.s8 %v2727
    %v2729 = vlaneseq
    %v2730 = vshrl.u32 %v2729, 7
    %v2731 = vsub.s32 %v2728, %v2730
    %v2732 = vrot.slane %v2724, %v2731
    %v2734 = vunpack.c.l.s4 1983009808
    %v2735 = vunpack.c.0.s8 %v2734
    %v2736 = vlaneseq
    %v2737 = vshrl.u32 %v2736, 7
    %v2738 = vsub.s32 %v2735, %v2737
    %v2739 = vrot.slane %v2725, %v2738
    %v2740 = vcombine.low %v2732, %v2739
    %v2741 = vcombine.low %v551, %v558
    %v2742 = vcombine.low %v565, %v572
    %v2744 = vunpack.c.l.s4 1983009808
    %v2745 = vunpack.c.0.s8 %v2744
    %v2746 = vlaneseq
    %v2747 = vshrl.u32 %v2746, 7
    %v2748 = vsub.s32 %v2745, %v2747
    %v2749 = vrot.slane %v2741, %v2748
    %v2751 = vunpack.c.l.s4 1983009808
    %v2752 = vunpack.c.0.s8 %v2751
    %v2753 = vlaneseq
    %v2754 = vshrl.u32 %v2753, 7
    %v2755 = vsub.s32 %v2752, %v2754
    %v2756 = vrot.slane %v2742, %v2755
    %v2757 = vcombine.low %v2749, %v2756
    %v2758 = vcombine.low %v579, %v586
    %v2759 = vcombine.low %v593, %v600
    %v2761 = vunpack.c.l.s4 1983009808
    %v2762 = vunpack.c.0.s8 %v2761
    %v2763 = vlaneseq
    %v2764 = vshrl.u32 %v2763, 7
    %v2765 = vsub.s32 %v2762, %v2764
    %v2766 = vrot.slane %v2758, %v2765
    %v2768 = vunpack.c.l.s4 1983009808
    %v2769 = vunpack.c.0.s8 %v2768
    %v2770 = vlaneseq
    %v2771 = vshrl.u32 %v2770, 7
    %v2772 = vsub.s32 %v2769, %v2771
    %v2773 = vrot.slane %v2759, %v2772
    %v2774 = vcombine.low %v2766, %v2773
    %v2775 = vcombine.low %v607, %v614
    %v2776 = vcombine.low %v621, %v628
    %v2778 = vunpack.c.l.s4 1983009808
    %v2779 = vunpack.c.0.s8 %v2778
    %v2780 = vlaneseq
    %v2781 = vshrl.u32 %v2780, 7
    %v2782 = vsub.s32 %v2779, %v2781
    %v2783 = vrot.slane %v2775, %v2782
    %v2785 = vunpack.c.l.s4 1983009808
    %v2786 = vunpack.c.0.s8 %v2785
    %v2787 = vlaneseq
    %v2788 = vshrl.u32 %v2787, 7
    %v2789 = vsub.s32 %v2786, %v2788
    %v2790 = vrot.slane %v2776, %v2789
    %v2791 = vcombine.low %v2783, %v2790
    %v2792 = vcombine.low %v635, %v642
    %v2793 = vcombine.low %v649, %v656
    %v2795 = vunpack.c.l.s4 1983009808
    %v2796 = vunpack.c.0.s8 %v2795
    %v2797 = vlaneseq
    %v2798 = vshrl.u32 %v2797, 7
    %v2799 = vsub.s32 %v2796, %v2798
    %v2800 = vrot.slane %v2792, %v2799
    %v2802 = vunpack.c.l.s4 1983009808
    %v2803 = vunpack.c.0.s8 %v2802
    %v2804 = vlaneseq
    %v2805 = vshrl.u32 %v2804, 7
    %v2806 = vsub.s32 %v2803, %v2805
    %v2807 = vrot.slane %v2793, %v2806
    %v2808 = vcombine.low %v2800, %v2807
    %v2809 = vcombine.low %v663, %v670
    %v2810 = vcombine.low %v677, %v684
    %v2812 = vunpack.c.l.s4 1983009808
    %v2813 = vunpack.c.0.s8 %v2812
    %v2814 = vlaneseq
    %v2815 = vshrl.u32 %v2814, 7
    %v2816 = vsub.s32 %v2813, %v2815
    %v2817 = vrot.slane %v2809, %v2816
    %v2819 = vunpack.c.l.s4 1983009808
    %v2820 = vunpack.c.0.s8 %v2819
    %v2821 = vlaneseq
    %v2822 = vshrl.u32 %v2821, 7
    %v2823 = vsub.s32 %v2820, %v2822
    %v2824 = vrot.slane %v2810, %v2823
    %v2825 = vcombine.low %v2817, %v2824
    %v2826 = vcombine.low %v691, %v698
    %v2827 = vcombine.low %v705, %v712
    %v2829 = vunpack.c.l.s4 1983009808
    %v2830 = vunpack.c.0.s8 %v2829
    %v2831 = vlaneseq
    %v2832 = vshrl.u32 %v2831, 7
    %v2833 = vsub.s32 %v2830, %v2832
    %v2834 = vrot.slane %v2826, %v2833
    %v2836 = vunpack.c.l.s4 1983009808
    %v2837 = vunpack.c.0.s8 %v2836
    %v2838 = vlaneseq
    %v2839 = vshrl.u32 %v2838, 7
    %v2840 = vsub.s32 %v2837, %v2839
    %v2841 = vrot.slane %v2827, %v2840
    %v2842 = vcombine.low %v2834, %v2841
    %v2843 = vcombine.low %v719, %v726
    %v2844 = vcombine.low %v733, %v740
    %v2846 = vunpack.c.l.s4 1983009808
    %v2847 = vunpack.c.0.s8 %v2846
    %v2848 = vlaneseq
    %v2849 = vshrl.u32 %v2848, 7
    %v2850 = vsub.s32 %v2847, %v2849
    %v2851 = vrot.slane %v2843, %v2850
    %v2853 = vunpack.c.l.s4 1983009808
    %v2854 = vunpack.c.0.s8 %v2853
    %v2855 = vlaneseq
    %v2856 = vshrl.u32 %v2855, 7
    %v2857 = vsub.s32 %v2854, %v2856
    %v2858 = vrot.slane %v2844, %v2857
    %v2859 = vcombine.low %v2851, %v2858
    %v2860 = vcombine.low %v747, %v754
    %v2861 = vcombine.low %v761, %v768
    %v2863 = vunpack.c.l.s4 1983009808
    %v2864 = vunpack.c.0.s8 %v2863
    %v2865 = vlaneseq
    %v2866 = vshrl.u32 %v2865, 7
    %v2867 = vsub.s32 %v2864, %v2866
    %v2868 = vrot.slane %v2860, %v2867
    %v2870 = vunpack.c.l.s4 1983009808
    %v2871 = vunpack.c.0.s8 %v2870
    %v2872 = vlaneseq
    %v2873 = vshrl.u32 %v2872, 7
    %v2874 = vsub.s32 %v2871, %v2873
    %v2875 = vrot.slane %v2861, %v2874
    %v2876 = vcombine.low %v2868, %v2875
    %v2877 = vcombine.low %v775, %v782
    %v2878 = vcombine.low %v789, %v796
    %v2880 = vunpack.c.l.s4 1983009808
    %v2881 = vunpack.c.0.s8 %v2880
    %v2882 = vlaneseq
    %v2883 = vshrl.u32 %v2882, 7
    %v2884 = vsub.s32 %v2881, %v2883
    %v2885 = vrot.slane %v2877, %v2884
    %v2887 = vunpack.c.l.s4 1983009808
    %v2888 = vunpack.c.0.s8 %v2887
    %v2889 = vlaneseq
    %v2890 = vshrl.u32 %v2889, 7
    %v2891 = vsub.s32 %v2888, %v2890
    %v2892 = vrot.slane %v2878, %v2891
    %v2893 = vcombine.low %v2885, %v2892
    %v2894 = vcombine.low %v803, %v810
    %v2895 = vcombine.low %v817, %v824
    %v2897 = vunpack.c.l.s4 1983009808
    %v2898 = vunpack.c.0.s8 %v2897
    %v2899 = vlaneseq
    %v2900 = vshrl.u32 %v2899, 7
    %v2901 = vsub.s32 %v2898, %v2900
    %v2902 = vrot.slane %v2894, %v2901
    %v2904 = vunpack.c.l.s4 1983009808
    %v2905 = vunpack.c.0.s8 %v2904
    %v2906 = vlaneseq
    %v2907 = vshrl.u32 %v2906, 7
    %v2908 = vsub.s32 %v2905, %v2907
    %v2909 = vrot.slane %v2895, %v2908
    %v2910 = vcombine.low %v2902, %v2909
    %v2911 = vcombine.low %v831, %v838
    %v2912 = vcombine.low %v845, %v852
    %v2914 = vunpack.c.l.s4 1983009808
    %v2915 = vunpack.c.0.s8 %v2914
    %v2916 = vlaneseq
    %v2917 = vshrl.u32 %v2916, 7
    %v2918 = vsub.s32 %v2915, %v2917
    %v2919 = vrot.slane %v2911, %v2918
    %v2921 = vunpack.c.l.s4 1983009808
    %v2922 = vunpack.c.0.s8 %v2921
    %v2923 = vlaneseq
    %v2924 = vshrl.u32 %v2923, 7
    %v2925 = vsub.s32 %v2922, %v2924
    %v2926 = vrot.slane %v2912, %v2925
    %v2927 = vcombine.low %v2919, %v2926
    %v2928 = vcombine.low %v859, %v866
    %v2929 = vcombine.low %v873, %v880
    %v2931 = vunpack.c.l.s4 1983009808
    %v2932 = vunpack.c.0.s8 %v2931
    %v2933 = vlaneseq
    %v2934 = vshrl.u32 %v2933, 7
    %v2935 = vsub.s32 %v2932, %v2934
    %v2936 = vrot.slane %v2928, %v2935
    %v2938 = vunpack.c.l.s4 1983009808
    %v2939 = vunpack.c.0.s8 %v2938
    %v2940 = vlaneseq
    %v2941 = vshrl.u32 %v2940, 7
    %v2942 = vsub.s32 %v2939, %v2941
    %v2943 = vrot.slane %v2929, %v2942
    %v2944 = vcombine.low %v2936, %v2943
    %v2945 = vcombine.low %v887, %v894
    %v2946 = vcombine.low %v901, %v908
    %v2948 = vunpack.c.l.s4 1983009808
    %v2949 = vunpack.c.0.s8 %v2948
    %v2950 = vlaneseq
    %v2951 = vshrl.u32 %v2950, 7
    %v2952 = vsub.s32 %v2949, %v2951
    %v2953 = vrot.slane %v2945, %v2952
    %v2955 = vunpack.c.l.s4 1983009808
    %v2956 = vunpack.c.0.s8 %v2955
    %v2957 = vlaneseq
    %v2958 = vshrl.u32 %v2957, 7
    %v2959 = vsub.s32 %v2956, %v2958
    %v2960 = vrot.slane %v2946, %v2959
    %v2961 = vcombine.low %v2953, %v2960
    %v2962 = vcombine.low %v915, %v922
    %v2963 = vcombine.low %v929, %v936
    %v2965 = vunpack.c.l.s4 1983009808
    %v2966 = vunpack.c.0.s8 %v2965
    %v2967 = vlaneseq
    %v2968 = vshrl.u32 %v2967, 7
    %v2969 = vsub.s32 %v2966, %v2968
    %v2970 = vrot.slane %v2962, %v2969
    %v2972 = vunpack.c.l.s4 1983009808
    %v2973 = vunpack.c.0.s8 %v2972
    %v2974 = vlaneseq
    %v2975 = vshrl.u32 %v2974, 7
    %v2976 = vsub.s32 %v2973, %v2975
    %v2977 = vrot.slane %v2963, %v2976
    %v2978 = vcombine.low %v2970, %v2977
    %v2979 = vcombine.low %v943, %v950
    %v2980 = vcombine.low %v957, %v964
    %v2982 = vunpack.c.l.s4 1983009808
    %v2983 = vunpack.c.0.s8 %v2982
    %v2984 = vlaneseq
    %v2985 = vshrl.u32 %v2984, 7
    %v2986 = vsub.s32 %v2983, %v2985
    %v2987 = vrot.slane %v2979, %v2986
    %v2989 = vunpack.c.l.s4 1983009808
    %v2990 = vunpack.c.0.s8 %v2989
    %v2991 = vlaneseq
    %v2992 = vshrl.u32 %v2991, 7
    %v2993 = vsub.s32 %v2990, %v2992
    %v2994 = vrot.slane %v2980, %v2993
    %v2995 = vcombine.low %v2987, %v2994
    %v2996 = vcombine.low %v971, %v978
    %v2997 = vcombine.low %v985, %v992
    %v2999 = vunpack.c.l.s4 1983009808
    %v3000 = vunpack.c.0.s8 %v2999
    %v3001 = vlaneseq
    %v3002 = vshrl.u32 %v3001, 7
    %v3003 = vsub.s32 %v3000, %v3002
    %v3004 = vrot.slane %v2996, %v3003
    %v3006 = vunpack.c.l.s4 1983009808
    %v3007 = vunpack.c.0.s8 %v3006
    %v3008 = vlaneseq
    %v3009 = vshrl.u32 %v3008, 7
    %v3010 = vsub.s32 %v3007, %v3009
    %v3011 = vrot.slane %v2997, %v3010
    %v3012 = vcombine.low %v3004, %v3011
    %v3013 = vcombine.low %v999, %v1006
    %v3014 = vcombine.low %v1013, %v1020
    %v3016 = vunpack.c.l.s4 1983009808
    %v3017 = vunpack.c.0.s8 %v3016
    %v3018 = vlaneseq
    %v3019 = vshrl.u32 %v3018, 7
    %v3020 = vsub.s32 %v3017, %v3019
    %v3021 = vrot.slane %v3013, %v3020
    %v3023 = vunpack.c.l.s4 1983009808
    %v3024 = vunpack.c.0.s8 %v3023
    %v3025 = vlaneseq
    %v3026 = vshrl.u32 %v3025, 7
    %v3027 = vsub.s32 %v3024, %v3026
    %v3028 = vrot.slane %v3014, %v3027
    %v3029 = vcombine.low %v3021, %v3028
    %v3030 = vcombine.low %v1027, %v1034
    %v3031 = vcombine.low %v1041, %v1048
    %v3033 = vunpack.c.l.s4 1983009808
    %v3034 = vunpack.c.0.s8 %v3033
    %v3035 = vlaneseq
    %v3036 = vshrl.u32 %v3035, 7
    %v3037 = vsub.s32 %v3034, %v3036
    %v3038 = vrot.slane %v3030, %v3037
    %v3040 = vunpack.c.l.s4 1983009808
    %v3041 = vunpack.c.0.s8 %v3040
    %v3042 = vlaneseq
    %v3043 = vshrl.u32 %v3042, 7
    %v3044 = vsub.s32 %v3041, %v3043
    %v3045 = vrot.slane %v3031, %v3044
    %v3046 = vcombine.low %v3038, %v3045
    %v3047 = vcombine.low %v1055, %v1062
    %v3048 = vcombine.low %v1069, %v1076
    %v3050 = vunpack.c.l.s4 1983009808
    %v3051 = vunpack.c.0.s8 %v3050
    %v3052 = vlaneseq
    %v3053 = vshrl.u32 %v3052, 7
    %v3054 = vsub.s32 %v3051, %v3053
    %v3055 = vrot.slane %v3047, %v3054
    %v3057 = vunpack.c.l.s4 1983009808
    %v3058 = vunpack.c.0.s8 %v3057
    %v3059 = vlaneseq
    %v3060 = vshrl.u32 %v3059, 7
    %v3061 = vsub.s32 %v3058, %v3060
    %v3062 = vrot.slane %v3048, %v3061
    %v3063 = vcombine.low %v3055, %v3062
    %v3064 = vcombine.low %v1083, %v1090
    %v3065 = vcombine.low %v1097, %v1104
    %v3067 = vunpack.c.l.s4 1983009808
    %v3068 = vunpack.c.0.s8 %v3067
    %v3069 = vlaneseq
    %v3070 = vshrl.u32 %v3069, 7
    %v3071 = vsub.s32 %v3068, %v3070
    %v3072 = vrot.slane %v3064, %v3071
    %v3074 = vunpack.c.l.s4 1983009808
    %v3075 = vunpack.c.0.s8 %v3074
    %v3076 = vlaneseq
    %v3077 = vshrl.u32 %v3076, 7
    %v3078 = vsub.s32 %v3075, %v3077
    %v3079 = vrot.slane %v3065, %v3078
    %v3080 = vcombine.low %v3072, %v3079
    %v3081 = vcombine.low %v1111, %v1118
    %v3082 = vcombine.low %v1125, %v1132
    %v3084 = vunpack.c.l.s4 1983009808
    %v3085 = vunpack.c.0.s8 %v3084
    %v3086 = vlaneseq
    %v3087 = vshrl.u32 %v3086, 7
    %v3088 = vsub.s32 %v3085, %v3087
    %v3089 = vrot.slane %v3081, %v3088
    %v3091 = vunpack.c.l.s4 1983009808
    %v3092 = vunpack.c.0.s8 %v3091
    %v3093 = vlaneseq
    %v3094 = vshrl.u32 %v3093, 7
    %v3095 = vsub.s32 %v3092, %v3094
    %v3096 = vrot.slane %v3082, %v3095
    %v3097 = vcombine.low %v3089, %v3096
    %v3098 = vcombine.low %v1139, %v1146
    %v3099 = vcombine.low %v1153, %v1160
    %v3101 = vunpack.c.l.s4 1983009808
    %v3102 = vunpack.c.0.s8 %v3101
    %v3103 = vlaneseq
    %v3104 = vshrl.u32 %v3103, 7
    %v3105 = vsub.s32 %v3102, %v3104
    %v3106 = vrot.slane %v3098, %v3105
    %v3108 = vunpack.c.l.s4 1983009808
    %v3109 = vunpack.c.0.s8 %v3108
    %v3110 = vlaneseq
    %v3111 = vshrl.u32 %v3110, 7
    %v3112 = vsub.s32 %v3109, %v3111
    %v3113 = vrot.slane %v3099, %v3112
    %v3114 = vcombine.low %v3106, %v3113
    %v3115 = vcombine.low %v1167, %v1174
    %v3116 = vcombine.low %v1181, %v1188
    %v3118 = vunpack.c.l.s4 1983009808
    %v3119 = vunpack.c.0.s8 %v3118
    %v3120 = vlaneseq
    %v3121 = vshrl.u32 %v3120, 7
    %v3122 = vsub.s32 %v3119, %v3121
    %v3123 = vrot.slane %v3115, %v3122
    %v3125 = vunpack.c.l.s4 1983009808
    %v3126 = vunpack.c.0.s8 %v3125
    %v3127 = vlaneseq
    %v3128 = vshrl.u32 %v3127, 7
    %v3129 = vsub.s32 %v3126, %v3128
    %v3130 = vrot.slane %v3116, %v3129
    %v3131 = vcombine.low %v3123, %v3130
    %v3132 = vcombine.low %v1195, %v1202
    %v3133 = vcombine.low %v1209, %v1216
    %v3135 = vunpack.c.l.s4 1983009808
    %v3136 = vunpack.c.0.s8 %v3135
    %v3137 = vlaneseq
    %v3138 = vshrl.u32 %v3137, 7
    %v3139 = vsub.s32 %v3136, %v3138
    %v3140 = vrot.slane %v3132, %v3139
    %v3142 = vunpack.c.l.s4 1983009808
    %v3143 = vunpack.c.0.s8 %v3142
    %v3144 = vlaneseq
    %v3145 = vshrl.u32 %v3144, 7
    %v3146 = vsub.s32 %v3143, %v3145
    %v3147 = vrot.slane %v3133, %v3146
    %v3148 = vcombine.low %v3140, %v3147
    %v3149 = vcombine.low %v1223, %v1230
    %v3150 = vcombine.low %v1237, %v1244
    %v3152 = vunpack.c.l.s4 1983009808
    %v3153 = vunpack.c.0.s8 %v3152
    %v3154 = vlaneseq
    %v3155 = vshrl.u32 %v3154, 7
    %v3156 = vsub.s32 %v3153, %v3155
    %v3157 = vrot.slane %v3149, %v3156
    %v3159 = vunpack.c.l.s4 1983009808
    %v3160 = vunpack.c.0.s8 %v3159
    %v3161 = vlaneseq
    %v3162 = vshrl.u32 %v3161, 7
    %v3163 = vsub.s32 %v3160, %v3162
    %v3164 = vrot.slane %v3150, %v3163
    %v3165 = vcombine.low %v3157, %v3164
    %v3166 = vcombine.low %v1251, %v1258
    %v3167 = vcombine.low %v1265, %v1272
    %v3169 = vunpack.c.l.s4 1983009808
    %v3170 = vunpack.c.0.s8 %v3169
    %v3171 = vlaneseq
    %v3172 = vshrl.u32 %v3171, 7
    %v3173 = vsub.s32 %v3170, %v3172
    %v3174 = vrot.slane %v3166, %v3173
    %v3176 = vunpack.c.l.s4 1983009808
    %v3177 = vunpack.c.0.s8 %v3176
    %v3178 = vlaneseq
    %v3179 = vshrl.u32 %v3178, 7
    %v3180 = vsub.s32 %v3177, %v3179
    %v3181 = vrot.slane %v3167, %v3180
    %v3182 = vcombine.low %v3174, %v3181
    %v3183 = vcombine.low %v1279, %v1286
    %v3184 = vcombine.low %v1293, %v1300
    %v3186 = vunpack.c.l.s4 1983009808
    %v3187 = vunpack.c.0.s8 %v3186
    %v3188 = vlaneseq
    %v3189 = vshrl.u32 %v3188, 7
    %v3190 = vsub.s32 %v3187, %v3189
    %v3191 = vrot.slane %v3183, %v3190
    %v3193 = vunpack.c.l.s4 1983009808
    %v3194 = vunpack.c.0.s8 %v3193
    %v3195 = vlaneseq
    %v3196 = vshrl.u32 %v3195, 7
    %v3197 = vsub.s32 %v3194, %v3196
    %v3198 = vrot.slane %v3184, %v3197
    %v3199 = vcombine.low %v3191, %v3198
    %v3200 = vcombine.low %v1307, %v1314
    %v3201 = vcombine.low %v1321, %v1328
    %v3203 = vunpack.c.l.s4 1983009808
    %v3204 = vunpack.c.0.s8 %v3203
    %v3205 = vlaneseq
    %v3206 = vshrl.u32 %v3205, 7
    %v3207 = vsub.s32 %v3204, %v3206
    %v3208 = vrot.slane %v3200, %v3207
    %v3210 = vunpack.c.l.s4 1983009808
    %v3211 = vunpack.c.0.s8 %v3210
    %v3212 = vlaneseq
    %v3213 = vshrl.u32 %v3212, 7
    %v3214 = vsub.s32 %v3211, %v3213
    %v3215 = vrot.slane %v3201, %v3214
    %v3216 = vcombine.low %v3208, %v3215
    %v3217 = vcombine.low %v1335, %v1342
    %v3218 = vcombine.low %v1349, %v1356
    %v3220 = vunpack.c.l.s4 1983009808
    %v3221 = vunpack.c.0.s8 %v3220
    %v3222 = vlaneseq
    %v3223 = vshrl.u32 %v3222, 7
    %v3224 = vsub.s32 %v3221, %v3223
    %v3225 = vrot.slane %v3217, %v3224
    %v3227 = vunpack.c.l.s4 1983009808
    %v3228 = vunpack.c.0.s8 %v3227
    %v3229 = vlaneseq
    %v3230 = vshrl.u32 %v3229, 7
    %v3231 = vsub.s32 %v3228, %v3230
    %v3232 = vrot.slane %v3218, %v3231
    %v3233 = vcombine.low %v3225, %v3232
    %v3234 = vcombine.low %v1363, %v1370
    %v3235 = vcombine.low %v1377, %v1384
    %v3237 = vunpack.c.l.s4 1983009808
    %v3238 = vunpack.c.0.s8 %v3237
    %v3239 = vlaneseq
    %v3240 = vshrl.u32 %v3239, 7
    %v3241 = vsub.s32 %v3238, %v3240
    %v3242 = vrot.slane %v3234, %v3241
    %v3244 = vunpack.c.l.s4 1983009808
    %v3245 = vunpack.c.0.s8 %v3244
    %v3246 = vlaneseq
    %v3247 = vshrl.u32 %v3246, 7
    %v3248 = vsub.s32 %v3245, %v3247
    %v3249 = vrot.slane %v3235, %v3248
    %v3250 = vcombine.low %v3242, %v3249
    %v3251 = vcombine.low %v1391, %v1398
    %v3252 = vcombine.low %v1405, %v1412
    %v3254 = vunpack.c.l.s4 1983009808
    %v3255 = vunpack.c.0.s8 %v3254
    %v3256 = vlaneseq
    %v3257 = vshrl.u32 %v3256, 7
    %v3258 = vsub.s32 %v3255, %v3257
    %v3259 = vrot.slane %v3251, %v3258
    %v3261 = vunpack.c.l.s4 1983009808
    %v3262 = vunpack.c.0.s8 %v3261
    %v3263 = vlaneseq
    %v3264 = vshrl.u32 %v3263, 7
    %v3265 = vsub.s32 %v3262, %v3264
    %v3266 = vrot.slane %v3252, %v3265
    %v3267 = vcombine.low %v3259, %v3266
    %v3268 = vcombine.low %v1419, %v1426
    %v3269 = vcombine.low %v1433, %v1440
    %v3271 = vunpack.c.l.s4 1983009808
    %v3272 = vunpack.c.0.s8 %v3271
    %v3273 = vlaneseq
    %v3274 = vshrl.u32 %v3273, 7
    %v3275 = vsub.s32 %v3272, %v3274
    %v3276 = vrot.slane %v3268, %v3275
    %v3278 = vunpack.c.l.s4 1983009808
    %v3279 = vunpack.c.0.s8 %v3278
    %v3280 = vlaneseq
    %v3281 = vshrl.u32 %v3280, 7
    %v3282 = vsub.s32 %v3279, %v3281
    %v3283 = vrot.slane %v3269, %v3282
    %v3284 = vcombine.low %v3276, %v3283
    %v3285 = vcombine.low %v1447, %v1454
    %v3286 = vcombine.low %v1461, %v1468
    %v3288 = vunpack.c.l.s4 1983009808
    %v3289 = vunpack.c.0.s8 %v3288
    %v3290 = vlaneseq
    %v3291 = vshrl.u32 %v3290, 7
    %v3292 = vsub.s32 %v3289, %v3291
    %v3293 = vrot.slane %v3285, %v3292
    %v3295 = vunpack.c.l.s4 1983009808
    %v3296 = vunpack.c.0.s8 %v3295
    %v3297 = vlaneseq
    %v3298 = vshrl.u32 %v3297, 7
    %v3299 = vsub.s32 %v3296, %v3298
    %v3300 = vrot.slane %v3286, %v3299
    %v3301 = vcombine.low %v3293, %v3300
    %v3302 = vcombine.low %v1475, %v1482
    %v3303 = vcombine.low %v1489, %v1496
    %v3305 = vunpack.c.l.s4 1983009808
    %v3306 = vunpack.c.0.s8 %v3305
    %v3307 = vlaneseq
    %v3308 = vshrl.u32 %v3307, 7
    %v3309 = vsub.s32 %v3306, %v3308
    %v3310 = vrot.slane %v3302, %v3309
    %v3312 = vunpack.c.l.s4 1983009808
    %v3313 = vunpack.c.0.s8 %v3312
    %v3314 = vlaneseq
    %v3315 = vshrl.u32 %v3314, 7
    %v3316 = vsub.s32 %v3313, %v3315
    %v3317 = vrot.slane %v3303, %v3316
    %v3318 = vcombine.low %v3310, %v3317
    %v3319 = vcombine.low %v1503, %v1510
    %v3320 = vcombine.low %v1517, %v1524
    %v3322 = vunpack.c.l.s4 1983009808
    %v3323 = vunpack.c.0.s8 %v3322
    %v3324 = vlaneseq
    %v3325 = vshrl.u32 %v3324, 7
    %v3326 = vsub.s32 %v3323, %v3325
    %v3327 = vrot.slane %v3319, %v3326
    %v3329 = vunpack.c.l.s4 1983009808
    %v3330 = vunpack.c.0.s8 %v3329
    %v3331 = vlaneseq
    %v3332 = vshrl.u32 %v3331, 7
    %v3333 = vsub.s32 %v3330, %v3332
    %v3334 = vrot.slane %v3320, %v3333
    %v3335 = vcombine.low %v3327, %v3334
    %v3336 = vcombine.low %v1531, %v1538
    %v3337 = vcombine.low %v1545, %v1552
    %v3339 = vunpack.c.l.s4 1983009808
    %v3340 = vunpack.c.0.s8 %v3339
    %v3341 = vlaneseq
    %v3342 = vshrl.u32 %v3341, 7
    %v3343 = vsub.s32 %v3340, %v3342
    %v3344 = vrot.slane %v3336, %v3343
    %v3346 = vunpack.c.l.s4 1983009808
    %v3347 = vunpack.c.0.s8 %v3346
    %v3348 = vlaneseq
    %v3349 = vshrl.u32 %v3348, 7
    %v3350 = vsub.s32 %v3347, %v3349
    %v3351 = vrot.slane %v3337, %v3350
    %v3352 = vcombine.low %v3344, %v3351
    %v3353 = vcombine.low %v1559, %v1566
    %v3354 = vcombine.low %v1573, %v1580
    %v3356 = vunpack.c.l.s4 1983009808
    %v3357 = vunpack.c.0.s8 %v3356
    %v3358 = vlaneseq
    %v3359 = vshrl.u32 %v3358, 7
    %v3360 = vsub.s32 %v3357, %v3359
    %v3361 = vrot.slane %v3353, %v3360
    %v3363 = vunpack.c.l.s4 1983009808
    %v3364 = vunpack.c.0.s8 %v3363
    %v3365 = vlaneseq
    %v3366 = vshrl.u32 %v3365, 7
    %v3367 = vsub.s32 %v3364, %v3366
    %v3368 = vrot.slane %v3354, %v3367
    %v3369 = vcombine.low %v3361, %v3368
    %v3370 = vcombine.low %v1587, %v1594
    %v3371 = vcombine.low %v1601, %v1608
    %v3373 = vunpack.c.l.s4 1983009808
    %v3374 = vunpack.c.0.s8 %v3373
    %v3375 = vlaneseq
    %v3376 = vshrl.u32 %v3375, 7
    %v3377 = vsub.s32 %v3374, %v3376
    %v3378 = vrot.slane %v3370, %v3377
    %v3380 = vunpack.c.l.s4 1983009808
    %v3381 = vunpack.c.0.s8 %v3380
    %v3382 = vlaneseq
    %v3383 = vshrl.u32 %v3382, 7
    %v3384 = vsub.s32 %v3381, %v3383
    %v3385 = vrot.slane %v3371, %v3384
    %v3386 = vcombine.low %v3378, %v3385
    %v3387 = vcombine.low %v1615, %v1622
    %v3388 = vcombine.low %v1629, %v1636
    %v3390 = vunpack.c.l.s4 1983009808
    %v3391 = vunpack.c.0.s8 %v3390
    %v3392 = vlaneseq
    %v3393 = vshrl.u32 %v3392, 7
    %v3394 = vsub.s32 %v3391, %v3393
    %v3395 = vrot.slane %v3387, %v3394
    %v3397 = vunpack.c.l.s4 1983009808
    %v3398 = vunpack.c.0.s8 %v3397
    %v3399 = vlaneseq
    %v3400 = vshrl.u32 %v3399, 7
    %v3401 = vsub.s32 %v3398, %v3400
    %v3402 = vrot.slane %v3388, %v3401
    %v3403 = vcombine.low %v3395, %v3402
    %v3404 = vcombine.low %v1643, %v1650
    %v3405 = vcombine.low %v1657, %v1664
    %v3407 = vunpack.c.l.s4 1983009808
    %v3408 = vunpack.c.0.s8 %v3407
    %v3409 = vlaneseq
    %v3410 = vshrl.u32 %v3409, 7
    %v3411 = vsub.s32 %v3408, %v3410
    %v3412 = vrot.slane %v3404, %v3411
    %v3414 = vunpack.c.l.s4 1983009808
    %v3415 = vunpack.c.0.s8 %v3414
    %v3416 = vlaneseq
    %v3417 = vshrl.u32 %v3416, 7
    %v3418 = vsub.s32 %v3415, %v3417
    %v3419 = vrot.slane %v3405, %v3418
    %v3420 = vcombine.low %v3412, %v3419
    %v3421 = vcombine.low %v1671, %v1678
    %v3422 = vcombine.low %v1685, %v1692
    %v3424 = vunpack.c.l.s4 1983009808
    %v3425 = vunpack.c.0.s8 %v3424
    %v3426 = vlaneseq
    %v3427 = vshrl.u32 %v3426, 7
    %v3428 = vsub.s32 %v3425, %v3427
    %v3429 = vrot.slane %v3421, %v3428
    %v3431 = vunpack.c.l.s4 1983009808
    %v3432 = vunpack.c.0.s8 %v3431
    %v3433 = vlaneseq
    %v3434 = vshrl.u32 %v3433, 7
    %v3435 = vsub.s32 %v3432, %v3434
    %v3436 = vrot.slane %v3422, %v3435
    %v3437 = vcombine.low %v3429, %v3436
    %v3438 = vcombine.low %v1699, %v1706
    %v3439 = vcombine.low %v1713, %v1720
    %v3441 = vunpack.c.l.s4 1983009808
    %v3442 = vunpack.c.0.s8 %v3441
    %v3443 = vlaneseq
    %v3444 = vshrl.u32 %v3443, 7
    %v3445 = vsub.s32 %v3442, %v3444
    %v3446 = vrot.slane %v3438, %v3445
    %v3448 = vunpack.c.l.s4 1983009808
    %v3449 = vunpack.c.0.s8 %v3448
    %v3450 = vlaneseq
    %v3451 = vshrl.u32 %v3450, 7
    %v3452 = vsub.s32 %v3449, %v3451
    %v3453 = vrot.slane %v3439, %v3452
    %v3454 = vcombine.low %v3446, %v3453
    %v3455 = vcombine.low %v1727, %v1734
    %v3456 = vcombine.low %v1741, %v1748
    %v3458 = vunpack.c.l.s4 1983009808
    %v3459 = vunpack.c.0.s8 %v3458
    %v3460 = vlaneseq
    %v3461 = vshrl.u32 %v3460, 7
    %v3462 = vsub.s32 %v3459, %v3461
    %v3463 = vrot.slane %v3455, %v3462
    %v3465 = vunpack.c.l.s4 1983009808
    %v3466 = vunpack.c.0.s8 %v3465
    %v3467 = vlaneseq
    %v3468 = vshrl.u32 %v3467, 7
    %v3469 = vsub.s32 %v3466, %v3468
    %v3470 = vrot.slane %v3456, %v3469
    %v3471 = vcombine.low %v3463, %v3470
    %v3472 = vcombine.low %v1755, %v1762
    %v3473 = vcombine.low %v1769, %v1776
    %v3475 = vunpack.c.l.s4 1983009808
    %v3476 = vunpack.c.0.s8 %v3475
    %v3477 = vlaneseq
    %v3478 = vshrl.u32 %v3477, 7
    %v3479 = vsub.s32 %v3476, %v3478
    %v3480 = vrot.slane %v3472, %v3479
    %v3482 = vunpack.c.l.s4 1983009808
    %v3483 = vunpack.c.0.s8 %v3482
    %v3484 = vlaneseq
    %v3485 = vshrl.u32 %v3484, 7
    %v3486 = vsub.s32 %v3483, %v3485
    %v3487 = vrot.slane %v3473, %v3486
    %v3488 = vcombine.low %v3480, %v3487
    %v3489 = vcombine.low %v1783, %v1790
    %v3490 = vcombine.low %v1797, %v1804
    %v3492 = vunpack.c.l.s4 1983009808
    %v3493 = vunpack.c.0.s8 %v3492
    %v3494 = vlaneseq
    %v3495 = vshrl.u32 %v3494, 7
    %v3496 = vsub.s32 %v3493, %v3495
    %v3497 = vrot.slane %v3489, %v3496
    %v3499 = vunpack.c.l.s4 1983009808
    %v3500 = vunpack.c.0.s8 %v3499
    %v3501 = vlaneseq
    %v3502 = vshrl.u32 %v3501, 7
    %v3503 = vsub.s32 %v3500, %v3502
    %v3504 = vrot.slane %v3490, %v3503
    %v3505 = vcombine.low %v3497, %v3504
    %v3506 = vcombine.low %v1811, %v1818
    %v3507 = vcombine.low %v1825, %v1832
    %v3509 = vunpack.c.l.s4 1983009808
    %v3510 = vunpack.c.0.s8 %v3509
    %v3511 = vlaneseq
    %v3512 = vshrl.u32 %v3511, 7
    %v3513 = vsub.s32 %v3510, %v3512
    %v3514 = vrot.slane %v3506, %v3513
    %v3516 = vunpack.c.l.s4 1983009808
    %v3517 = vunpack.c.0.s8 %v3516
    %v3518 = vlaneseq
    %v3519 = vshrl.u32 %v3518, 7
    %v3520 = vsub.s32 %v3517, %v3519
    %v3521 = vrot.slane %v3507, %v3520
    %v3522 = vcombine.low %v3514, %v3521
    %v3523 = vcombine.low %v1839, %v1846
    %v3524 = vcombine.low %v1853, %v1860
    %v3526 = vunpack.c.l.s4 1983009808
    %v3527 = vunpack.c.0.s8 %v3526
    %v3528 = vlaneseq
    %v3529 = vshrl.u32 %v3528, 7
    %v3530 = vsub.s32 %v3527, %v3529
    %v3531 = vrot.slane %v3523, %v3530
    %v3533 = vunpack.c.l.s4 1983009808
    %v3534 = vunpack.c.0.s8 %v3533
    %v3535 = vlaneseq
    %v3536 = vshrl.u32 %v3535, 7
    %v3537 = vsub.s32 %v3534, %v3536
    %v3538 = vrot.slane %v3524, %v3537
    %v3539 = vcombine.low %v3531, %v3538
    %v3540 = vcombine.low %v1867, %v1874
    %v3541 = vcombine.low %v1881, %v1888
    %v3543 = vunpack.c.l.s4 1983009808
    %v3544 = vunpack.c.0.s8 %v3543
    %v3545 = vlaneseq
    %v3546 = vshrl.u32 %v3545, 7
    %v3547 = vsub.s32 %v3544, %v3546
    %v3548 = vrot.slane %v3540, %v3547
    %v3550 = vunpack.c.l.s4 1983009808
    %v3551 = vunpack.c.0.s8 %v3550
    %v3552 = vlaneseq
    %v3553 = vshrl.u32 %v3552, 7
    %v3554 = vsub.s32 %v3551, %v3553
    %v3555 = vrot.slane %v3541, %v3554
    %v3556 = vcombine.low %v3548, %v3555
    %v3557 = vcombine.low %v1895, %v1902
    %v3558 = vcombine.low %v1909, %v1916
    %v3560 = vunpack.c.l.s4 1983009808
    %v3561 = vunpack.c.0.s8 %v3560
    %v3562 = vlaneseq
    %v3563 = vshrl.u32 %v3562, 7
    %v3564 = vsub.s32 %v3561, %v3563
    %v3565 = vrot.slane %v3557, %v3564
    %v3567 = vunpack.c.l.s4 1983009808
    %v3568 = vunpack.c.0.s8 %v3567
    %v3569 = vlaneseq
    %v3570 = vshrl.u32 %v3569, 7
    %v3571 = vsub.s32 %v3568, %v3570
    %v3572 = vrot.slane %v3558, %v3571
    %v3573 = vcombine.low %v3565, %v3572
    %v3574 = vcombine.low %v1923, %v1930
    %v3575 = vcombine.low %v1937, %v1944
    %v3577 = vunpack.c.l.s4 1983009808
    %v3578 = vunpack.c.0.s8 %v3577
    %v3579 = vlaneseq
    %v3580 = vshrl.u32 %v3579, 7
    %v3581 = vsub.s32 %v3578, %v3580
    %v3582 = vrot.slane %v3574, %v3581
    %v3584 = vunpack.c.l.s4 1983009808
    %v3585 = vunpack.c.0.s8 %v3584
    %v3586 = vlaneseq
    %v3587 = vshrl.u32 %v3586, 7
    %v3588 = vsub.s32 %v3585, %v3587
    %v3589 = vrot.slane %v3575, %v3588
    %v3590 = vcombine.low %v3582, %v3589
    %v3591 = vcombine.low %v1951, %v1958
    %v3592 = vcombine.low %v1965, %v1972
    %v3594 = vunpack.c.l.s4 1983009808
    %v3595 = vunpack.c.0.s8 %v3594
    %v3596 = vlaneseq
    %v3597 = vshrl.u32 %v3596, 7
    %v3598 = vsub.s32 %v3595, %v3597
    %v3599 = vrot.slane %v3591, %v3598
    %v3601 = vunpack.c.l.s4 1983009808
    %v3602 = vunpack.c.0.s8 %v3601
    %v3603 = vlaneseq
    %v3604 = vshrl.u32 %v3603, 7
    %v3605 = vsub.s32 %v3602, %v3604
    %v3606 = vrot.slane %v3592, %v3605
    %v3607 = vcombine.low %v3599, %v3606
    %v3608 = vcombine.low %v1979, %v1986
    %v3609 = vcombine.low %v1993, %v2000
    %v3611 = vunpack.c.l.s4 1983009808
    %v3612 = vunpack.c.0.s8 %v3611
    %v3613 = vlaneseq
    %v3614 = vshrl.u32 %v3613, 7
    %v3615 = vsub.s32 %v3612, %v3614
    %v3616 = vrot.slane %v3608, %v3615
    %v3618 = vunpack.c.l.s4 1983009808
    %v3619 = vunpack.c.0.s8 %v3618
    %v3620 = vlaneseq
    %v3621 = vshrl.u32 %v3620, 7
    %v3622 = vsub.s32 %v3619, %v3621
    %v3623 = vrot.slane %v3609, %v3622
    %v3624 = vcombine.low %v3616, %v3623
    %v3625 = vcombine.low %v2007, %v2014
    %v3626 = vcombine.low %v2021, %v2028
    %v3628 = vunpack.c.l.s4 1983009808
    %v3629 = vunpack.c.0.s8 %v3628
    %v3630 = vlaneseq
    %v3631 = vshrl.u32 %v3630, 7
    %v3632 = vsub.s32 %v3629, %v3631
    %v3633 = vrot.slane %v3625, %v3632
    %v3635 = vunpack.c.l.s4 1983009808
    %v3636 = vunpack.c.0.s8 %v3635
    %v3637 = vlaneseq
    %v3638 = vshrl.u32 %v3637, 7
    %v3639 = vsub.s32 %v3636, %v3638
    %v3640 = vrot.slane %v3626, %v3639
    %v3641 = vcombine.low %v3633, %v3640
    %v3642 = vcombine.low %v2035, %v2042
    %v3643 = vcombine.low %v2049, %v2056
    %v3645 = vunpack.c.l.s4 1983009808
    %v3646 = vunpack.c.0.s8 %v3645
    %v3647 = vlaneseq
    %v3648 = vshrl.u32 %v3647, 7
    %v3649 = vsub.s32 %v3646, %v3648
    %v3650 = vrot.slane %v3642, %v3649
    %v3652 = vunpack.c.l.s4 1983009808
    %v3653 = vunpack.c.0.s8 %v3652
    %v3654 = vlaneseq
    %v3655 = vshrl.u32 %v3654, 7
    %v3656 = vsub.s32 %v3653, %v3655
    %v3657 = vrot.slane %v3643, %v3656
    %v3658 = vcombine.low %v3650, %v3657
    %v3659 = vcombine.low %v2063, %v2070
    %v3660 = vcombine.low %v2077, %v2084
    %v3662 = vunpack.c.l.s4 1983009808
    %v3663 = vunpack.c.0.s8 %v3662
    %v3664 = vlaneseq
    %v3665 = vshrl.u32 %v3664, 7
    %v3666 = vsub.s32 %v3663, %v3665
    %v3667 = vrot.slane %v3659, %v3666
    %v3669 = vunpack.c.l.s4 1983009808
    %v3670 = vunpack.c.0.s8 %v3669
    %v3671 = vlaneseq
    %v3672 = vshrl.u32 %v3671, 7
    %v3673 = vsub.s32 %v3670, %v3672
    %v3674 = vrot.slane %v3660, %v3673
    %v3675 = vcombine.low %v3667, %v3674
    %v3676 = vcombine.low %v2091, %v2098
    %v3677 = vcombine.low %v2105, %v2112
    %v3679 = vunpack.c.l.s4 1983009808
    %v3680 = vunpack.c.0.s8 %v3679
    %v3681 = vlaneseq
    %v3682 = vshrl.u32 %v3681, 7
    %v3683 = vsub.s32 %v3680, %v3682
    %v3684 = vrot.slane %v3676, %v3683
    %v3686 = vunpack.c.l.s4 1983009808
    %v3687 = vunpack.c.0.s8 %v3686
    %v3688 = vlaneseq
    %v3689 = vshrl.u32 %v3688, 7
    %v3690 = vsub.s32 %v3687, %v3689
    %v3691 = vrot.slane %v3677, %v3690
    %v3692 = vcombine.low %v3684, %v3691
    %v3693 = vcombine.low %v2119, %v2126
    %v3694 = vcombine.low %v2133, %v2140
    %v3696 = vunpack.c.l.s4 1983009808
    %v3697 = vunpack.c.0.s8 %v3696
    %v3698 = vlaneseq
    %v3699 = vshrl.u32 %v3698, 7
    %v3700 = vsub.s32 %v3697, %v3699
    %v3701 = vrot.slane %v3693, %v3700
    %v3703 = vunpack.c.l.s4 1983009808
    %v3704 = vunpack.c.0.s8 %v3703
    %v3705 = vlaneseq
    %v3706 = vshrl.u32 %v3705, 7
    %v3707 = vsub.s32 %v3704, %v3706
    %v3708 = vrot.slane %v3694, %v3707
    %v3709 = vcombine.low %v3701, %v3708
    %v3710 = vcombine.low %v2147, %v2154
    %v3711 = vcombine.low %v2161, %v2168
    %v3713 = vunpack.c.l.s4 1983009808
    %v3714 = vunpack.c.0.s8 %v3713
    %v3715 = vlaneseq
    %v3716 = vshrl.u32 %v3715, 7
    %v3717 = vsub.s32 %v3714, %v3716
    %v3718 = vrot.slane %v3710, %v3717
    %v3720 = vunpack.c.l.s4 1983009808
    %v3721 = vunpack.c.0.s8 %v3720
    %v3722 = vlaneseq
    %v3723 = vshrl.u32 %v3722, 7
    %v3724 = vsub.s32 %v3721, %v3723
    %v3725 = vrot.slane %v3711, %v3724
    %v3726 = vcombine.low %v3718, %v3725
    %v3727 = vcombine.low %v2175, %v2182
    %v3728 = vcombine.low %v2189, %v2196
    %v3730 = vunpack.c.l.s4 1983009808
    %v3731 = vunpack.c.0.s8 %v3730
    %v3732 = vlaneseq
    %v3733 = vshrl.u32 %v3732, 7
    %v3734 = vsub.s32 %v3731, %v3733
    %v3735 = vrot.slane %v3727, %v3734
    %v3737 = vunpack.c.l.s4 1983009808
    %v3738 = vunpack.c.0.s8 %v3737
    %v3739 = vlaneseq
    %v3740 = vshrl.u32 %v3739, 7
    %v3741 = vsub.s32 %v3738, %v3740
    %v3742 = vrot.slane %v3728, %v3741
    %v3743 = vcombine.low %v3735, %v3742
    %v3744 = vcombine.low %v2203, %v2210
    %v3745 = vcombine.low %v2217, %v2224
    %v3747 = vunpack.c.l.s4 1983009808
    %v3748 = vunpack.c.0.s8 %v3747
    %v3749 = vlaneseq
    %v3750 = vshrl.u32 %v3749, 7
    %v3751 = vsub.s32 %v3748, %v3750
    %v3752 = vrot.slane %v3744, %v3751
    %v3754 = vunpack.c.l.s4 1983009808
    %v3755 = vunpack.c.0.s8 %v3754
    %v3756 = vlaneseq
    %v3757 = vshrl.u32 %v3756, 7
    %v3758 = vsub.s32 %v3755, %v3757
    %v3759 = vrot.slane %v3745, %v3758
    %v3760 = vcombine.low %v3752, %v3759
    %v3761 = vcombine.low %v2231, %v2238
    %v3762 = vcombine.low %v2245, %v2252
    %v3764 = vunpack.c.l.s4 1983009808
    %v3765 = vunpack.c.0.s8 %v3764
    %v3766 = vlaneseq
    %v3767 = vshrl.u32 %v3766, 7
    %v3768 = vsub.s32 %v3765, %v3767
    %v3769 = vrot.slane %v3761, %v3768
    %v3771 = vunpack.c.l.s4 1983009808
    %v3772 = vunpack.c.0.s8 %v3771
    %v3773 = vlaneseq
    %v3774 = vshrl.u32 %v3773, 7
    %v3775 = vsub.s32 %v3772, %v3774
    %v3776 = vrot.slane %v3762, %v3775
    %v3777 = vcombine.low %v3769, %v3776
    %v3778 = vcombine.low %v2259, %v2266
    %v3779 = vcombine.low %v2273, %v2280
    %v3781 = vunpack.c.l.s4 1983009808
    %v3782 = vunpack.c.0.s8 %v3781
    %v3783 = vlaneseq
    %v3784 = vshrl.u32 %v3783, 7
    %v3785 = vsub.s32 %v3782, %v3784
    %v3786 = vrot.slane %v3778, %v3785
    %v3788 = vunpack.c.l.s4 1983009808
    %v3789 = vunpack.c.0.s8 %v3788
    %v3790 = vlaneseq
    %v3791 = vshrl.u32 %v3790, 7
    %v3792 = vsub.s32 %v3789, %v3791
    %v3793 = vrot.slane %v3779, %v3792
    %v3794 = vcombine.low %v3786, %v3793
    %v3795 = vcombine.low %v2287, %v2294
    %v3796 = vcombine.low %v2301, %v2308
    %v3798 = vunpack.c.l.s4 1983009808
    %v3799 = vunpack.c.0.s8 %v3798
    %v3800 = vlaneseq
    %v3801 = vshrl.u32 %v3800, 7
    %v3802 = vsub.s32 %v3799, %v3801
    %v3803 = vrot.slane %v3795, %v3802
    %v3805 = vunpack.c.l.s4 1983009808
    %v3806 = vunpack.c.0.s8 %v3805
    %v3807 = vlaneseq
    %v3808 = vshrl.u32 %v3807, 7
    %v3809 = vsub.s32 %v3806, %v3808
    %v3810 = vrot.slane %v3796, %v3809
    %v3811 = vcombine.low %v3803, %v3810
    %v3812 = vcombine.low %v2315, %v2322
    %v3813 = vcombine.low %v2329, %v2336
    %v3815 = vunpack.c.l.s4 1983009808
    %v3816 = vunpack.c.0.s8 %v3815
    %v3817 = vlaneseq
    %v3818 = vshrl.u32 %v3817, 7
    %v3819 = vsub.s32 %v3816, %v3818
    %v3820 = vrot.slane %v3812, %v3819
    %v3822 = vunpack.c.l.s4 1983009808
    %v3823 = vunpack.c.0.s8 %v3822
    %v3824 = vlaneseq
    %v3825 = vshrl.u32 %v3824, 7
    %v3826 = vsub.s32 %v3823, %v3825
    %v3827 = vrot.slane %v3813, %v3826
    %v3828 = vcombine.low %v3820, %v3827
    %v3829 = vcombine.low %v2343, %v2350
    %v3830 = vcombine.low %v2357, %v2364
    %v3832 = vunpack.c.l.s4 1983009808
    %v3833 = vunpack.c.0.s8 %v3832
    %v3834 = vlaneseq
    %v3835 = vshrl.u32 %v3834, 7
    %v3836 = vsub.s32 %v3833, %v3835
    %v3837 = vrot.slane %v3829, %v3836
    %v3839 = vunpack.c.l.s4 1983009808
    %v3840 = vunpack.c.0.s8 %v3839
    %v3841 = vlaneseq
    %v3842 = vshrl.u32 %v3841, 7
    %v3843 = vsub.s32 %v3840, %v3842
    %v3844 = vrot.slane %v3830, %v3843
    %v3845 = vcombine.low %v3837, %v3844
    %v3846 = vcombine.low %v2371, %v2378
    %v3847 = vcombine.low %v2385, %v2392
    %v3849 = vunpack.c.l.s4 1983009808
    %v3850 = vunpack.c.0.s8 %v3849
    %v3851 = vlaneseq
    %v3852 = vshrl.u32 %v3851, 7
    %v3853 = vsub.s32 %v3850, %v3852
    %v3854 = vrot.slane %v3846, %v3853
    %v3856 = vunpack.c.l.s4 1983009808
    %v3857 = vunpack.c.0.s8 %v3856
    %v3858 = vlaneseq
    %v3859 = vshrl.u32 %v3858, 7
    %v3860 = vsub.s32 %v3857, %v3859
    %v3861 = vrot.slane %v3847, %v3860
    %v3862 = vcombine.low %v3854, %v3861
    %v3863 = vcombine.low %v2399, %v2406
    %v3864 = vcombine.low %v2413, %v2420
    %v3866 = vunpack.c.l.s4 1983009808
    %v3867 = vunpack.c.0.s8 %v3866
    %v3868 = vlaneseq
    %v3869 = vshrl.u32 %v3868, 7
    %v3870 = vsub.s32 %v3867, %v3869
    %v3871 = vrot.slane %v3863, %v3870
    %v3873 = vunpack.c.l.s4 1983009808
    %v3874 = vunpack.c.0.s8 %v3873
    %v3875 = vlaneseq
    %v3876 = vshrl.u32 %v3875, 7
    %v3877 = vsub.s32 %v3874, %v3876
    %v3878 = vrot.slane %v3864, %v3877
    %v3879 = vcombine.low %v3871, %v3878
    %v3880 = vcombine.low %v2427, %v2434
    %v3881 = vcombine.low %v2441, %v2448
    %v3883 = vunpack.c.l.s4 1983009808
    %v3884 = vunpack.c.0.s8 %v3883
    %v3885 = vlaneseq
    %v3886 = vshrl.u32 %v3885, 7
    %v3887 = vsub.s32 %v3884, %v3886
    %v3888 = vrot.slane %v3880, %v3887
    %v3890 = vunpack.c.l.s4 1983009808
    %v3891 = vunpack.c.0.s8 %v3890
    %v3892 = vlaneseq
    %v3893 = vshrl.u32 %v3892, 7
    %v3894 = vsub.s32 %v3891, %v3893
    %v3895 = vrot.slane %v3881, %v3894
    %v3896 = vcombine.low %v3888, %v3895
    %v3897 = vcombine.low %v2455, %v2462
    %v3898 = vcombine.low %v2469, %v2476
    %v3900 = vunpack.c.l.s4 1983009808
    %v3901 = vunpack.c.0.s8 %v3900
    %v3902 = vlaneseq
    %v3903 = vshrl.u32 %v3902, 7
    %v3904 = vsub.s32 %v3901, %v3903
    %v3905 = vrot.slane %v3897, %v3904
    %v3907 = vunpack.c.l.s4 1983009808
    %v3908 = vunpack.c.0.s8 %v3907
    %v3909 = vlaneseq
    %v3910 = vshrl.u32 %v3909, 7
    %v3911 = vsub.s32 %v3908, %v3910
    %v3912 = vrot.slane %v3898, %v3911
    %v3913 = vcombine.low %v3905, %v3912
    %v3914 = vcombine.low %v2483, %v2490
    %v3915 = vcombine.low %v2497, %v2504
    %v3917 = vunpack.c.l.s4 1983009808
    %v3918 = vunpack.c.0.s8 %v3917
    %v3919 = vlaneseq
    %v3920 = vshrl.u32 %v3919, 7
    %v3921 = vsub.s32 %v3918, %v3920
    %v3922 = vrot.slane %v3914, %v3921
    %v3924 = vunpack.c.l.s4 1983009808
    %v3925 = vunpack.c.0.s8 %v3924
    %v3926 = vlaneseq
    %v3927 = vshrl.u32 %v3926, 7
    %v3928 = vsub.s32 %v3925, %v3927
    %v3929 = vrot.slane %v3915, %v3928
    %v3930 = vcombine.low %v3922, %v3929
    %v3931 = vcombine.low %v2511, %v2518
    %v3932 = vcombine.low %v2525, %v2532
    %v3934 = vunpack.c.l.s4 1983009808
    %v3935 = vunpack.c.0.s8 %v3934
    %v3936 = vlaneseq
    %v3937 = vshrl.u32 %v3936, 7
    %v3938 = vsub.s32 %v3935, %v3937
    %v3939 = vrot.slane %v3931, %v3938
    %v3941 = vunpack.c.l.s4 1983009808
    %v3942 = vunpack.c.0.s8 %v3941
    %v3943 = vlaneseq
    %v3944 = vshrl.u32 %v3943, 7
    %v3945 = vsub.s32 %v3942, %v3944
    %v3946 = vrot.slane %v3932, %v3945
    %v3947 = vcombine.low %v3939, %v3946
    %v3948 = vcombine.low %v2539, %v2546
    %v3949 = vcombine.low %v2553, %v2560
    %v3951 = vunpack.c.l.s4 1983009808
    %v3952 = vunpack.c.0.s8 %v3951
    %v3953 = vlaneseq
    %v3954 = vshrl.u32 %v3953, 7
    %v3955 = vsub.s32 %v3952, %v3954
    %v3956 = vrot.slane %v3948, %v3955
    %v3958 = vunpack.c.l.s4 1983009808
    %v3959 = vunpack.c.0.s8 %v3958
    %v3960 = vlaneseq
    %v3961 = vshrl.u32 %v3960, 7
    %v3962 = vsub.s32 %v3959, %v3961
    %v3963 = vrot.slane %v3949, %v3962
    %v3964 = vcombine.low %v3956, %v3963
    %v3965 = vcombine.low %v2567, %v2574
    %v3966 = vcombine.low %v2581, %v2588
    %v3968 = vunpack.c.l.s4 1983009808
    %v3969 = vunpack.c.0.s8 %v3968
    %v3970 = vlaneseq
    %v3971 = vshrl.u32 %v3970, 7
    %v3972 = vsub.s32 %v3969, %v3971
    %v3973 = vrot.slane %v3965, %v3972
    %v3975 = vunpack.c.l.s4 1983009808
    %v3976 = vunpack.c.0.s8 %v3975
    %v3977 = vlaneseq
    %v3978 = vshrl.u32 %v3977, 7
    %v3979 = vsub.s32 %v3976, %v3978
    %v3980 = vrot.slane %v3966, %v3979
    %v3981 = vcombine.low %v3973, %v3980
    %v3982 = vcombine.low %v2595, %v2602
    %v3983 = vcombine.low %v2609, %v2616
    %v3985 = vunpack.c.l.s4 1983009808
    %v3986 = vunpack.c.0.s8 %v3985
    %v3987 = vlaneseq
    %v3988 = vshrl.u32 %v3987, 7
    %v3989 = vsub.s32 %v3986, %v3988
    %v3990 = vrot.slane %v3982, %v3989
    %v3992 = vunpack.c.l.s4 1983009808
    %v3993 = vunpack.c.0.s8 %v3992
    %v3994 = vlaneseq
    %v3995 = vshrl.u32 %v3994, 7
    %v3996 = vsub.s32 %v3993, %v3995
    %v3997 = vrot.slane %v3983, %v3996
    %v3998 = vcombine.low %v3990, %v3997
    %v3999 = vcombine.low %v2623, %v2630
    %v4000 = vcombine.low %v2637, %v2644
    %v4002 = vunpack.c.l.s4 1983009808
    %v4003 = vunpack.c.0.s8 %v4002
    %v4004 = vlaneseq
    %v4005 = vshrl.u32 %v4004, 7
    %v4006 = vsub.s32 %v4003, %v4005
    %v4007 = vrot.slane %v3999, %v4006
    %v4009 = vunpack.c.l.s4 1983009808
    %v4010 = vunpack.c.0.s8 %v4009
    %v4011 = vlaneseq
    %v4012 = vshrl.u32 %v4011, 7
    %v4013 = vsub.s32 %v4010, %v4012
    %v4014 = vrot.slane %v4000, %v4013
    %v4015 = vcombine.low %v4007, %v4014
    %v4016 = vcombine.low %v2651, %v2658
    %v4017 = vcombine.low %v2665, %v2672
    %v4019 = vunpack.c.l.s4 1983009808
    %v4020 = vunpack.c.0.s8 %v4019
    %v4021 = vlaneseq
    %v4022 = vshrl.u32 %v4021, 7
    %v4023 = vsub.s32 %v4020, %v4022
    %v4024 = vrot.slane %v4016, %v4023
    %v4026 = vunpack.c.l.s4 1983009808
    %v4027 = vunpack.c.0.s8 %v4026
    %v4028 = vlaneseq
    %v4029 = vshrl.u32 %v4028, 7
    %v4030 = vsub.s32 %v4027, %v4029
    %v4031 = vrot.slane %v4017, %v4030
    %v4032 = vcombine.low %v4024, %v4031
    %4033 = vset.pattern.permute.xlu0 0
    %4034 = vperm.xlu0 %4033, %v2689
    %v4035 = vpop.permute.xlu0 %4034
    %4036 = vset.pattern.permute.xlu0 0
    %4037 = vperm.xlu0 %4036, %v2706
    %v4038 = vpop.permute.xlu0 %4037
    %4039 = vset.pattern.permute.xlu0 0
    %4040 = vperm.xlu0 %4039, %v2723
    %v4041 = vpop.permute.xlu0 %4040
    %4042 = vset.pattern.permute.xlu0 0
    %4043 = vperm.xlu0 %4042, %v2740
    %v4044 = vpop.permute.xlu0 %4043
    %4045 = vset.pattern.permute.xlu0 0
    %4046 = vperm.xlu0 %4045, %v2757
    %v4047 = vpop.permute.xlu0 %4046
    %4048 = vset.pattern.permute.xlu0 0
    %4049 = vperm.xlu0 %4048, %v2774
    %v4050 = vpop.permute.xlu0 %4049
    %4051 = vset.pattern.permute.xlu0 0
    %4052 = vperm.xlu0 %4051, %v2791
    %v4053 = vpop.permute.xlu0 %4052
    %4054 = vset.pattern.permute.xlu0 0
    %4055 = vperm.xlu0 %4054, %v2808
    %v4056 = vpop.permute.xlu0 %4055
    %4057 = vset.pattern.permute.xlu0 0
    %4058 = vperm.xlu0 %4057, %v2825
    %v4059 = vpop.permute.xlu0 %4058
    %4060 = vset.pattern.permute.xlu0 0
    %4061 = vperm.xlu0 %4060, %v2842
    %v4062 = vpop.permute.xlu0 %4061
    %4063 = vset.pattern.permute.xlu0 0
    %4064 = vperm.xlu0 %4063, %v2859
    %v4065 = vpop.permute.xlu0 %4064
    %4066 = vset.pattern.permute.xlu0 0
    %4067 = vperm.xlu0 %4066, %v2876
    %v4068 = vpop.permute.xlu0 %4067
    %4069 = vset.pattern.permute.xlu0 0
    %4070 = vperm.xlu0 %4069, %v2893
    %v4071 = vpop.permute.xlu0 %4070
    %4072 = vset.pattern.permute.xlu0 0
    %4073 = vperm.xlu0 %4072, %v2910
    %v4074 = vpop.permute.xlu0 %4073
    %4075 = vset.pattern.permute.xlu0 0
    %4076 = vperm.xlu0 %4075, %v2927
    %v4077 = vpop.permute.xlu0 %4076
    %4078 = vset.pattern.permute.xlu0 0
    %4079 = vperm.xlu0 %4078, %v2944
    %v4080 = vpop.permute.xlu0 %4079
    %4081 = vset.pattern.permute.xlu0 0
    %4082 = vperm.xlu0 %4081, %v2961
    %v4083 = vpop.permute.xlu0 %4082
    %4084 = vset.pattern.permute.xlu0 0
    %4085 = vperm.xlu0 %4084, %v2978
    %v4086 = vpop.permute.xlu0 %4085
    %4087 = vset.pattern.permute.xlu0 0
    %4088 = vperm.xlu0 %4087, %v2995
    %v4089 = vpop.permute.xlu0 %4088
    %4090 = vset.pattern.permute.xlu0 0
    %4091 = vperm.xlu0 %4090, %v3012
    %v4092 = vpop.permute.xlu0 %4091
    %4093 = vset.pattern.permute.xlu0 0
    %4094 = vperm.xlu0 %4093, %v3029
    %v4095 = vpop.permute.xlu0 %4094
    %4096 = vset.pattern.permute.xlu0 0
    %4097 = vperm.xlu0 %4096, %v3046
    %v4098 = vpop.permute.xlu0 %4097
    %4099 = vset.pattern.permute.xlu0 0
    %4100 = vperm.xlu0 %4099, %v3063
    %v4101 = vpop.permute.xlu0 %4100
    %4102 = vset.pattern.permute.xlu0 0
    %4103 = vperm.xlu0 %4102, %v3080
    %v4104 = vpop.permute.xlu0 %4103
    %4105 = vset.pattern.permute.xlu0 0
    %4106 = vperm.xlu0 %4105, %v3097
    %v4107 = vpop.permute.xlu0 %4106
    %4108 = vset.pattern.permute.xlu0 0
    %4109 = vperm.xlu0 %4108, %v3114
    %v4110 = vpop.permute.xlu0 %4109
    %4111 = vset.pattern.permute.xlu0 0
    %4112 = vperm.xlu0 %4111, %v3131
    %v4113 = vpop.permute.xlu0 %4112
    %4114 = vset.pattern.permute.xlu0 0
    %4115 = vperm.xlu0 %4114, %v3148
    %v4116 = vpop.permute.xlu0 %4115
    %4117 = vset.pattern.permute.xlu0 0
    %4118 = vperm.xlu0 %4117, %v3165
    %v4119 = vpop.permute.xlu0 %4118
    %4120 = vset.pattern.permute.xlu0 0
    %4121 = vperm.xlu0 %4120, %v3182
    %v4122 = vpop.permute.xlu0 %4121
    %4123 = vset.pattern.permute.xlu0 0
    %4124 = vperm.xlu0 %4123, %v3199
    %v4125 = vpop.permute.xlu0 %4124
    %4126 = vset.pattern.permute.xlu0 0
    %4127 = vperm.xlu0 %4126, %v3216
    %v4128 = vpop.permute.xlu0 %4127
    %4129 = vset.pattern.permute.xlu0 0
    %4130 = vperm.xlu0 %4129, %v3233
    %v4131 = vpop.permute.xlu0 %4130
    %4132 = vset.pattern.permute.xlu0 0
    %4133 = vperm.xlu0 %4132, %v3250
    %v4134 = vpop.permute.xlu0 %4133
    %4135 = vset.pattern.permute.xlu0 0
    %4136 = vperm.xlu0 %4135, %v3267
    %v4137 = vpop.permute.xlu0 %4136
    %4138 = vset.pattern.permute.xlu0 0
    %4139 = vperm.xlu0 %4138, %v3284
    %v4140 = vpop.permute.xlu0 %4139
    %4141 = vset.pattern.permute.xlu0 0
    %4142 = vperm.xlu0 %4141, %v3301
    %v4143 = vpop.permute.xlu0 %4142
    %4144 = vset.pattern.permute.xlu0 0
    %4145 = vperm.xlu0 %4144, %v3318
    %v4146 = vpop.permute.xlu0 %4145
    %4147 = vset.pattern.permute.xlu0 0
    %4148 = vperm.xlu0 %4147, %v3335
    %v4149 = vpop.permute.xlu0 %4148
    %4150 = vset.pattern.permute.xlu0 0
    %4151 = vperm.xlu0 %4150, %v3352
    %v4152 = vpop.permute.xlu0 %4151
    %4153 = vset.pattern.permute.xlu0 0
    %4154 = vperm.xlu0 %4153, %v3369
    %v4155 = vpop.permute.xlu0 %4154
    %4156 = vset.pattern.permute.xlu0 0
    %4157 = vperm.xlu0 %4156, %v3386
    %v4158 = vpop.permute.xlu0 %4157
    %4159 = vset.pattern.permute.xlu0 0
    %4160 = vperm.xlu0 %4159, %v3403
    %v4161 = vpop.permute.xlu0 %4160
    %4162 = vset.pattern.permute.xlu0 0
    %4163 = vperm.xlu0 %4162, %v3420
    %v4164 = vpop.permute.xlu0 %4163
    %4165 = vset.pattern.permute.xlu0 0
    %4166 = vperm.xlu0 %4165, %v3437
    %v4167 = vpop.permute.xlu0 %4166
    %4168 = vset.pattern.permute.xlu0 0
    %4169 = vperm.xlu0 %4168, %v3454
    %v4170 = vpop.permute.xlu0 %4169
    %4171 = vset.pattern.permute.xlu0 0
    %4172 = vperm.xlu0 %4171, %v3471
    %v4173 = vpop.permute.xlu0 %4172
    %4174 = vset.pattern.permute.xlu0 0
    %4175 = vperm.xlu0 %4174, %v3488
    %v4176 = vpop.permute.xlu0 %4175
    %4177 = vset.pattern.permute.xlu0 0
    %4178 = vperm.xlu0 %4177, %v3505
    %v4179 = vpop.permute.xlu0 %4178
    %4180 = vset.pattern.permute.xlu0 0
    %4181 = vperm.xlu0 %4180, %v3522
    %v4182 = vpop.permute.xlu0 %4181
    %4183 = vset.pattern.permute.xlu0 0
    %4184 = vperm.xlu0 %4183, %v3539
    %v4185 = vpop.permute.xlu0 %4184
    %4186 = vset.pattern.permute.xlu0 0
    %4187 = vperm.xlu0 %4186, %v3556
    %v4188 = vpop.permute.xlu0 %4187
    %4189 = vset.pattern.permute.xlu0 0
    %4190 = vperm.xlu0 %4189, %v3573
    %v4191 = vpop.permute.xlu0 %4190
    %4192 = vset.pattern.permute.xlu0 0
    %4193 = vperm.xlu0 %4192, %v3590
    %v4194 = vpop.permute.xlu0 %4193
    %4195 = vset.pattern.permute.xlu0 0
    %4196 = vperm.xlu0 %4195, %v3607
    %v4197 = vpop.permute.xlu0 %4196
    %4198 = vset.pattern.permute.xlu0 0
    %4199 = vperm.xlu0 %4198, %v3624
    %v4200 = vpop.permute.xlu0 %4199
    %4201 = vset.pattern.permute.xlu0 0
    %4202 = vperm.xlu0 %4201, %v3641
    %v4203 = vpop.permute.xlu0 %4202
    %4204 = vset.pattern.permute.xlu0 0
    %4205 = vperm.xlu0 %4204, %v3658
    %v4206 = vpop.permute.xlu0 %4205
    %4207 = vset.pattern.permute.xlu0 0
    %4208 = vperm.xlu0 %4207, %v3675
    %v4209 = vpop.permute.xlu0 %4208
    %4210 = vset.pattern.permute.xlu0 0
    %4211 = vperm.xlu0 %4210, %v3692
    %v4212 = vpop.permute.xlu0 %4211
    %4213 = vset.pattern.permute.xlu0 0
    %4214 = vperm.xlu0 %4213, %v3709
    %v4215 = vpop.permute.xlu0 %4214
    %4216 = vset.pattern.permute.xlu0 0
    %4217 = vperm.xlu0 %4216, %v3726
    %v4218 = vpop.permute.xlu0 %4217
    %4219 = vset.pattern.permute.xlu0 0
    %4220 = vperm.xlu0 %4219, %v3743
    %v4221 = vpop.permute.xlu0 %4220
    %4222 = vset.pattern.permute.xlu0 0
    %4223 = vperm.xlu0 %4222, %v3760
    %v4224 = vpop.permute.xlu0 %4223
    %4225 = vset.pattern.permute.xlu0 0
    %4226 = vperm.xlu0 %4225, %v3777
    %v4227 = vpop.permute.xlu0 %4226
    %4228 = vset.pattern.permute.xlu0 0
    %4229 = vperm.xlu0 %4228, %v3794
    %v4230 = vpop.permute.xlu0 %4229
    %4231 = vset.pattern.permute.xlu0 0
    %4232 = vperm.xlu0 %4231, %v3811
    %v4233 = vpop.permute.xlu0 %4232
    %4234 = vset.pattern.permute.xlu0 0
    %4235 = vperm.xlu0 %4234, %v3828
    %v4236 = vpop.permute.xlu0 %4235
    %4237 = vset.pattern.permute.xlu0 0
    %4238 = vperm.xlu0 %4237, %v3845
    %v4239 = vpop.permute.xlu0 %4238
    %4240 = vset.pattern.permute.xlu0 0
    %4241 = vperm.xlu0 %4240, %v3862
    %v4242 = vpop.permute.xlu0 %4241
    %4243 = vset.pattern.permute.xlu0 0
    %4244 = vperm.xlu0 %4243, %v3879
    %v4245 = vpop.permute.xlu0 %4244
    %4246 = vset.pattern.permute.xlu0 0
    %4247 = vperm.xlu0 %4246, %v3896
    %v4248 = vpop.permute.xlu0 %4247
    %4249 = vset.pattern.permute.xlu0 0
    %4250 = vperm.xlu0 %4249, %v3913
    %v4251 = vpop.permute.xlu0 %4250
    %4252 = vset.pattern.permute.xlu0 0
    %4253 = vperm.xlu0 %4252, %v3930
    %v4254 = vpop.permute.xlu0 %4253
    %4255 = vset.pattern.permute.xlu0 0
    %4256 = vperm.xlu0 %4255, %v3947
    %v4257 = vpop.permute.xlu0 %4256
    %4258 = vset.pattern.permute.xlu0 0
    %4259 = vperm.xlu0 %4258, %v3964
    %v4260 = vpop.permute.xlu0 %4259
    %4261 = vset.pattern.permute.xlu0 0
    %4262 = vperm.xlu0 %4261, %v3981
    %v4263 = vpop.permute.xlu0 %4262
    %4264 = vset.pattern.permute.xlu0 0
    %4265 = vperm.xlu0 %4264, %v3998
    %v4266 = vpop.permute.xlu0 %4265
    %4267 = vset.pattern.permute.xlu0 0
    %4268 = vperm.xlu0 %4267, %v4015
    %v4269 = vpop.permute.xlu0 %4268
    %4270 = vset.pattern.permute.xlu0 0
    %4271 = vperm.xlu0 %4270, %v4032
    %v4272 = vpop.permute.xlu0 %4271
    %v4273 = vlaneseq
    %v4274 = vand.u32 %v4273, 127
    %v4275 = vlaneseq
    %v4276 = vshrl.u32 %v4275, 7
    %v4277 = vsub.s32 %v4274, %v4276
    %v4278 = vrot.slane %v4035, %v4277
    %v4279 = vadd.s32 %v4274, 4294967288
    %v4280 = vlaneseq
    %v4281 = vshrl.u32 %v4280, 7
    %v4282 = vsub.s32 %v4279, %v4281
    %v4283 = vrot.slane %v4038, %v4282
    %vm4284 = vcmask 130112
    %v4285 = vsel %vm4284, %v4283, %v4278
    %v4286 = vadd.s32 %v4274, 4294967280
    %v4287 = vlaneseq
    %v4288 = vshrl.u32 %v4287, 7
    %v4289 = vsub.s32 %v4286, %v4288
    %v4290 = vrot.slane %v4041, %v4289
    %vm4291 = vcmask 195712
    %v4292 = vsel %vm4291, %v4290, %v4285
    %v4293 = vadd.s32 %v4274, 4294967272
    %v4294 = vlaneseq
    %v4295 = vshrl.u32 %v4294, 7
    %v4296 = vsub.s32 %v4293, %v4295
    %v4297 = vrot.slane %v4044, %v4296
    %vm4298 = vcmask 261312
    %v4299 = vsel %vm4298, %v4297, %v4292
    %v4300 = vadd.s32 %v4274, 4294967264
    %v4301 = vlaneseq
    %v4302 = vshrl.u32 %v4301, 7
    %v4303 = vsub.s32 %v4300, %v4302
    %v4304 = vrot.slane %v4047, %v4303
    %vm4305 = vcmask 326912
    %v4306 = vsel %vm4305, %v4304, %v4299
    %v4307 = vadd.s32 %v4274, 4294967256
    %v4308 = vlaneseq
    %v4309 = vshrl.u32 %v4308, 7
    %v4310 = vsub.s32 %v4307, %v4309
    %v4311 = vrot.slane %v4050, %v4310
    %vm4312 = vcmask 392512
    %v4313 = vsel %vm4312, %v4311, %v4306
    %v4314 = vadd.s32 %v4274, 4294967248
    %v4315 = vlaneseq
    %v4316 = vshrl.u32 %v4315, 7
    %v4317 = vsub.s32 %v4314, %v4316
    %v4318 = vrot.slane %v4053, %v4317
    %vm4319 = vcmask 458112
    %v4320 = vsel %vm4319, %v4318, %v4313
    %v4321 = vadd.s32 %v4274, 4294967240
    %v4322 = vlaneseq
    %v4323 = vshrl.u32 %v4322, 7
    %v4324 = vsub.s32 %v4321, %v4323
    %v4325 = vrot.slane %v4056, %v4324
    %vm4326 = vcmask 523712
    %v4327 = vsel %vm4326, %v4325, %v4320
    %v4328 = vadd.s32 %v4274, 4294967232
    %v4329 = vlaneseq
    %v4330 = vshrl.u32 %v4329, 7
    %v4331 = vsub.s32 %v4328, %v4330
    %v4332 = vrot.slane %v4059, %v4331
    %vm4333 = vcmask 589312
    %v4334 = vsel %vm4333, %v4332, %v4327
    %v4335 = vadd.s32 %v4274, 4294967224
    %v4336 = vlaneseq
    %v4337 = vshrl.u32 %v4336, 7
    %v4338 = vsub.s32 %v4335, %v4337
    %v4339 = vrot.slane %v4062, %v4338
    %vm4340 = vcmask 654912
    %v4341 = vsel %vm4340, %v4339, %v4334
    %v4342 = vadd.s32 %v4274, 4294967216
    %v4343 = vlaneseq
    %v4344 = vshrl.u32 %v4343, 7
    %v4345 = vsub.s32 %v4342, %v4344
    %v4346 = vrot.slane %v4065, %v4345
    %vm4347 = vcmask 720512
    %v4348 = vsel %vm4347, %v4346, %v4341
    %v4349 = vadd.s32 %v4274, 4294967208
    %v4350 = vlaneseq
    %v4351 = vshrl.u32 %v4350, 7
    %v4352 = vsub.s32 %v4349, %v4351
    %v4353 = vrot.slane %v4068, %v4352
    %vm4354 = vcmask 786112
    %v4355 = vsel %vm4354, %v4353, %v4348
    %v4356 = vadd.s32 %v4274, 4294967200
    %v4357 = vlaneseq
    %v4358 = vshrl.u32 %v4357, 7
    %v4359 = vsub.s32 %v4356, %v4358
    %v4360 = vrot.slane %v4071, %v4359
    %vm4361 = vcmask 851712
    %v4362 = vsel %vm4361, %v4360, %v4355
    %v4363 = vadd.s32 %v4274, 4294967192
    %v4364 = vlaneseq
    %v4365 = vshrl.u32 %v4364, 7
    %v4366 = vsub.s32 %v4363, %v4365
    %v4367 = vrot.slane %v4074, %v4366
    %vm4368 = vcmask 917312
    %v4369 = vsel %vm4368, %v4367, %v4362
    %v4370 = vadd.s32 %v4274, 4294967184
    %v4371 = vlaneseq
    %v4372 = vshrl.u32 %v4371, 7
    %v4373 = vsub.s32 %v4370, %v4372
    %v4374 = vrot.slane %v4077, %v4373
    %vm4375 = vcmask 982912
    %v4376 = vsel %vm4375, %v4374, %v4369
    %v4377 = vadd.s32 %v4274, 4294967176
    %v4378 = vlaneseq
    %v4379 = vshrl.u32 %v4378, 7
    %v4380 = vsub.s32 %v4377, %v4379
    %v4381 = vrot.slane %v4080, %v4380
    %vm4382 = vcmask 1048512
    %v4383 = vsel %vm4382, %v4381, %v4376
    %v4384 = vlaneseq
    %v4385 = vshrl.u32 %v4384, 7
    %v4386 = vsub.s32 %v4274, %v4385
    %v4387 = vrot.slane %v4083, %v4386
    %v4388 = vlaneseq
    %v4389 = vshrl.u32 %v4388, 7
    %v4390 = vsub.s32 %v4279, %v4389
    %v4391 = vrot.slane %v4086, %v4390
    %v4392 = vsel %vm4284, %v4391, %v4387
    %v4393 = vlaneseq
    %v4394 = vshrl.u32 %v4393, 7
    %v4395 = vsub.s32 %v4286, %v4394
    %v4396 = vrot.slane %v4089, %v4395
    %v4397 = vsel %vm4291, %v4396, %v4392
    %v4398 = vlaneseq
    %v4399 = vshrl.u32 %v4398, 7
    %v4400 = vsub.s32 %v4293, %v4399
    %v4401 = vrot.slane %v4092, %v4400
    %v4402 = vsel %vm4298, %v4401, %v4397
    %v4403 = vlaneseq
    %v4404 = vshrl.u32 %v4403, 7
    %v4405 = vsub.s32 %v4300, %v4404
    %v4406 = vrot.slane %v4095, %v4405
    %v4407 = vsel %vm4305, %v4406, %v4402
    %v4408 = vlaneseq
    %v4409 = vshrl.u32 %v4408, 7
    %v4410 = vsub.s32 %v4307, %v4409
    %v4411 = vrot.slane %v4098, %v4410
    %v4412 = vsel %vm4312, %v4411, %v4407
    %v4413 = vlaneseq
    %v4414 = vshrl.u32 %v4413, 7
    %v4415 = vsub.s32 %v4314, %v4414
    %v4416 = vrot.slane %v4101, %v4415
    %v4417 = vsel %vm4319, %v4416, %v4412
    %v4418 = vlaneseq
    %v4419 = vshrl.u32 %v4418, 7
    %v4420 = vsub.s32 %v4321, %v4419
    %v4421 = vrot.slane %v4104, %v4420
    %v4422 = vsel %vm4326, %v4421, %v4417
    %v4423 = vlaneseq
    %v4424 = vshrl.u32 %v4423, 7
    %v4425 = vsub.s32 %v4328, %v4424
    %v4426 = vrot.slane %v4107, %v4425
    %v4427 = vsel %vm4333, %v4426, %v4422
    %v4428 = vlaneseq
    %v4429 = vshrl.u32 %v4428, 7
    %v4430 = vsub.s32 %v4335, %v4429
    %v4431 = vrot.slane %v4110, %v4430
    %v4432 = vsel %vm4340, %v4431, %v4427
    %v4433 = vlaneseq
    %v4434 = vshrl.u32 %v4433, 7
    %v4435 = vsub.s32 %v4342, %v4434
    %v4436 = vrot.slane %v4113, %v4435
    %v4437 = vsel %vm4347, %v4436, %v4432
    %v4438 = vlaneseq
    %v4439 = vshrl.u32 %v4438, 7
    %v4440 = vsub.s32 %v4349, %v4439
    %v4441 = vrot.slane %v4116, %v4440
    %v4442 = vsel %vm4354, %v4441, %v4437
    %v4443 = vlaneseq
    %v4444 = vshrl.u32 %v4443, 7
    %v4445 = vsub.s32 %v4356, %v4444
    %v4446 = vrot.slane %v4119, %v4445
    %v4447 = vsel %vm4361, %v4446, %v4442
    %v4448 = vlaneseq
    %v4449 = vshrl.u32 %v4448, 7
    %v4450 = vsub.s32 %v4363, %v4449
    %v4451 = vrot.slane %v4122, %v4450
    %v4452 = vsel %vm4368, %v4451, %v4447
    %v4453 = vlaneseq
    %v4454 = vshrl.u32 %v4453, 7
    %v4455 = vsub.s32 %v4370, %v4454
    %v4456 = vrot.slane %v4125, %v4455
    %v4457 = vsel %vm4375, %v4456, %v4452
    %v4458 = vlaneseq
    %v4459 = vshrl.u32 %v4458, 7
    %v4460 = vsub.s32 %v4377, %v4459
    %v4461 = vrot.slane %v4128, %v4460
    %v4462 = vsel %vm4382, %v4461, %v4457
    %v4463 = vlaneseq
    %v4464 = vshrl.u32 %v4463, 7
    %v4465 = vsub.s32 %v4274, %v4464
    %v4466 = vrot.slane %v4131, %v4465
    %v4467 = vlaneseq
    %v4468 = vshrl.u32 %v4467, 7
    %v4469 = vsub.s32 %v4279, %v4468
    %v4470 = vrot.slane %v4134, %v4469
    %v4471 = vsel %vm4284, %v4470, %v4466
    %v4472 = vlaneseq
    %v4473 = vshrl.u32 %v4472, 7
    %v4474 = vsub.s32 %v4286, %v4473
    %v4475 = vrot.slane %v4137, %v4474
    %v4476 = vsel %vm4291, %v4475, %v4471
    %v4477 = vlaneseq
    %v4478 = vshrl.u32 %v4477, 7
    %v4479 = vsub.s32 %v4293, %v4478
    %v4480 = vrot.slane %v4140, %v4479
    %v4481 = vsel %vm4298, %v4480, %v4476
    %v4482 = vlaneseq
    %v4483 = vshrl.u32 %v4482, 7
    %v4484 = vsub.s32 %v4300, %v4483
    %v4485 = vrot.slane %v4143, %v4484
    %v4486 = vsel %vm4305, %v4485, %v4481
    %v4487 = vlaneseq
    %v4488 = vshrl.u32 %v4487, 7
    %v4489 = vsub.s32 %v4307, %v4488
    %v4490 = vrot.slane %v4146, %v4489
    %v4491 = vsel %vm4312, %v4490, %v4486
    %v4492 = vlaneseq
    %v4493 = vshrl.u32 %v4492, 7
    %v4494 = vsub.s32 %v4314, %v4493
    %v4495 = vrot.slane %v4149, %v4494
    %v4496 = vsel %vm4319, %v4495, %v4491
    %v4497 = vlaneseq
    %v4498 = vshrl.u32 %v4497, 7
    %v4499 = vsub.s32 %v4321, %v4498
    %v4500 = vrot.slane %v4152, %v4499
    %v4501 = vsel %vm4326, %v4500, %v4496
    %v4502 = vlaneseq
    %v4503 = vshrl.u32 %v4502, 7
    %v4504 = vsub.s32 %v4274, %v4503
    %v4505 = vrot.slane %v4155, %v4504
    %v4506 = vlaneseq
    %v4507 = vshrl.u32 %v4506, 7
    %v4508 = vsub.s32 %v4279, %v4507
    %v4509 = vrot.slane %v4158, %v4508
    %v4510 = vsel %vm4284, %v4509, %v4505
    %v4511 = vlaneseq
    %v4512 = vshrl.u32 %v4511, 7
    %v4513 = vsub.s32 %v4286, %v4512
    %v4514 = vrot.slane %v4161, %v4513
    %v4515 = vsel %vm4291, %v4514, %v4510
    %v4516 = vlaneseq
    %v4517 = vshrl.u32 %v4516, 7
    %v4518 = vsub.s32 %v4293, %v4517
    %v4519 = vrot.slane %v4164, %v4518
    %v4520 = vsel %vm4298, %v4519, %v4515
    %v4521 = vlaneseq
    %v4522 = vshrl.u32 %v4521, 7
    %v4523 = vsub.s32 %v4300, %v4522
    %v4524 = vrot.slane %v4167, %v4523
    %v4525 = vsel %vm4305, %v4524, %v4520
    %v4526 = vlaneseq
    %v4527 = vshrl.u32 %v4526, 7
    %v4528 = vsub.s32 %v4307, %v4527
    %v4529 = vrot.slane %v4170, %v4528
    %v4530 = vsel %vm4312, %v4529, %v4525
    %v4531 = vlaneseq
    %v4532 = vshrl.u32 %v4531, 7
    %v4533 = vsub.s32 %v4314, %v4532
    %v4534 = vrot.slane %v4173, %v4533
    %v4535 = vsel %vm4319, %v4534, %v4530
    %v4536 = vlaneseq
    %v4537 = vshrl.u32 %v4536, 7
    %v4538 = vsub.s32 %v4321, %v4537
    %v4539 = vrot.slane %v4176, %v4538
    %v4540 = vsel %vm4326, %v4539, %v4535
    %v4541 = vlaneseq
    %v4542 = vshrl.u32 %v4541, 7
    %v4543 = vsub.s32 %v4328, %v4542
    %v4544 = vrot.slane %v4179, %v4543
    %v4545 = vsel %vm4333, %v4544, %v4540
    %v4546 = vlaneseq
    %v4547 = vshrl.u32 %v4546, 7
    %v4548 = vsub.s32 %v4335, %v4547
    %v4549 = vrot.slane %v4182, %v4548
    %v4550 = vsel %vm4340, %v4549, %v4545
    %v4551 = vlaneseq
    %v4552 = vshrl.u32 %v4551, 7
    %v4553 = vsub.s32 %v4342, %v4552
    %v4554 = vrot.slane %v4185, %v4553
    %v4555 = vsel %vm4347, %v4554, %v4550
    %v4556 = vlaneseq
    %v4557 = vshrl.u32 %v4556, 7
    %v4558 = vsub.s32 %v4349, %v4557
    %v4559 = vrot.slane %v4188, %v4558
    %v4560 = vsel %vm4354, %v4559, %v4555
    %v4561 = vlaneseq
    %v4562 = vshrl.u32 %v4561, 7
    %v4563 = vsub.s32 %v4356, %v4562
    %v4564 = vrot.slane %v4191, %v4563
    %v4565 = vsel %vm4361, %v4564, %v4560
    %v4566 = vlaneseq
    %v4567 = vshrl.u32 %v4566, 7
    %v4568 = vsub.s32 %v4363, %v4567
    %v4569 = vrot.slane %v4194, %v4568
    %v4570 = vsel %vm4368, %v4569, %v4565
    %v4571 = vlaneseq
    %v4572 = vshrl.u32 %v4571, 7
    %v4573 = vsub.s32 %v4370, %v4572
    %v4574 = vrot.slane %v4197, %v4573
    %v4575 = vsel %vm4375, %v4574, %v4570
    %v4576 = vlaneseq
    %v4577 = vshrl.u32 %v4576, 7
    %v4578 = vsub.s32 %v4377, %v4577
    %v4579 = vrot.slane %v4200, %v4578
    %v4580 = vsel %vm4382, %v4579, %v4575
    %v4581 = vlaneseq
    %v4582 = vshrl.u32 %v4581, 7
    %v4583 = vsub.s32 %v4274, %v4582
    %v4584 = vrot.slane %v4203, %v4583
    %v4585 = vlaneseq
    %v4586 = vshrl.u32 %v4585, 7
    %v4587 = vsub.s32 %v4279, %v4586
    %v4588 = vrot.slane %v4206, %v4587
    %v4589 = vsel %vm4284, %v4588, %v4584
    %v4590 = vlaneseq
    %v4591 = vshrl.u32 %v4590, 7
    %v4592 = vsub.s32 %v4286, %v4591
    %v4593 = vrot.slane %v4209, %v4592
    %v4594 = vsel %vm4291, %v4593, %v4589
    %v4595 = vlaneseq
    %v4596 = vshrl.u32 %v4595, 7
    %v4597 = vsub.s32 %v4293, %v4596
    %v4598 = vrot.slane %v4212, %v4597
    %v4599 = vsel %vm4298, %v4598, %v4594
    %v4600 = vlaneseq
    %v4601 = vshrl.u32 %v4600, 7
    %v4602 = vsub.s32 %v4300, %v4601
    %v4603 = vrot.slane %v4215, %v4602
    %v4604 = vsel %vm4305, %v4603, %v4599
    %v4605 = vlaneseq
    %v4606 = vshrl.u32 %v4605, 7
    %v4607 = vsub.s32 %v4307, %v4606
    %v4608 = vrot.slane %v4218, %v4607
    %v4609 = vsel %vm4312, %v4608, %v4604
    %v4610 = vlaneseq
    %v4611 = vshrl.u32 %v4610, 7
    %v4612 = vsub.s32 %v4314, %v4611
    %v4613 = vrot.slane %v4221, %v4612
    %v4614 = vsel %vm4319, %v4613, %v4609
    %v4615 = vlaneseq
    %v4616 = vshrl.u32 %v4615, 7
    %v4617 = vsub.s32 %v4321, %v4616
    %v4618 = vrot.slane %v4224, %v4617
    %v4619 = vsel %vm4326, %v4618, %v4614
    %v4620 = vlaneseq
    %v4621 = vshrl.u32 %v4620, 7
    %v4622 = vsub.s32 %v4328, %v4621
    %v4623 = vrot.slane %v4227, %v4622
    %v4624 = vsel %vm4333, %v4623, %v4619
    %v4625 = vlaneseq
    %v4626 = vshrl.u32 %v4625, 7
    %v4627 = vsub.s32 %v4335, %v4626
    %v4628 = vrot.slane %v4230, %v4627
    %v4629 = vsel %vm4340, %v4628, %v4624
    %v4630 = vlaneseq
    %v4631 = vshrl.u32 %v4630, 7
    %v4632 = vsub.s32 %v4342, %v4631
    %v4633 = vrot.slane %v4233, %v4632
    %v4634 = vsel %vm4347, %v4633, %v4629
    %v4635 = vlaneseq
    %v4636 = vshrl.u32 %v4635, 7
    %v4637 = vsub.s32 %v4349, %v4636
    %v4638 = vrot.slane %v4236, %v4637
    %v4639 = vsel %vm4354, %v4638, %v4634
    %v4640 = vlaneseq
    %v4641 = vshrl.u32 %v4640, 7
    %v4642 = vsub.s32 %v4356, %v4641
    %v4643 = vrot.slane %v4239, %v4642
    %v4644 = vsel %vm4361, %v4643, %v4639
    %v4645 = vlaneseq
    %v4646 = vshrl.u32 %v4645, 7
    %v4647 = vsub.s32 %v4363, %v4646
    %v4648 = vrot.slane %v4242, %v4647
    %v4649 = vsel %vm4368, %v4648, %v4644
    %v4650 = vlaneseq
    %v4651 = vshrl.u32 %v4650, 7
    %v4652 = vsub.s32 %v4370, %v4651
    %v4653 = vrot.slane %v4245, %v4652
    %v4654 = vsel %vm4375, %v4653, %v4649
    %v4655 = vlaneseq
    %v4656 = vshrl.u32 %v4655, 7
    %v4657 = vsub.s32 %v4377, %v4656
    %v4658 = vrot.slane %v4248, %v4657
    %v4659 = vsel %vm4382, %v4658, %v4654
    %v4660 = vlaneseq
    %v4661 = vshrl.u32 %v4660, 7
    %v4662 = vsub.s32 %v4274, %v4661
    %v4663 = vrot.slane %v4251, %v4662
    %v4664 = vlaneseq
    %v4665 = vshrl.u32 %v4664, 7
    %v4666 = vsub.s32 %v4279, %v4665
    %v4667 = vrot.slane %v4254, %v4666
    %v4668 = vsel %vm4284, %v4667, %v4663
    %v4669 = vlaneseq
    %v4670 = vshrl.u32 %v4669, 7
    %v4671 = vsub.s32 %v4286, %v4670
    %v4672 = vrot.slane %v4257, %v4671
    %v4673 = vsel %vm4291, %v4672, %v4668
    %v4674 = vlaneseq
    %v4675 = vshrl.u32 %v4674, 7
    %v4676 = vsub.s32 %v4293, %v4675
    %v4677 = vrot.slane %v4260, %v4676
    %v4678 = vsel %vm4298, %v4677, %v4673
    %v4679 = vlaneseq
    %v4680 = vshrl.u32 %v4679, 7
    %v4681 = vsub.s32 %v4300, %v4680
    %v4682 = vrot.slane %v4263, %v4681
    %v4683 = vsel %vm4305, %v4682, %v4678
    %v4684 = vlaneseq
    %v4685 = vshrl.u32 %v4684, 7
    %v4686 = vsub.s32 %v4307, %v4685
    %v4687 = vrot.slane %v4266, %v4686
    %v4688 = vsel %vm4312, %v4687, %v4683
    %v4689 = vlaneseq
    %v4690 = vshrl.u32 %v4689, 7
    %v4691 = vsub.s32 %v4314, %v4690
    %v4692 = vrot.slane %v4269, %v4691
    %v4693 = vsel %vm4319, %v4692, %v4688
    %v4694 = vlaneseq
    %v4695 = vshrl.u32 %v4694, 7
    %v4696 = vsub.s32 %v4321, %v4695
    %v4697 = vrot.slane %v4272, %v4696
    %v4698 = vsel %vm4326, %v4697, %v4693
    %vm4699 = vcmask 1041409
    %v4700 = vsel %vm4699, %v4580, %v4383
    %v4701 = vsel %vm4699, %v4659, %v4462
    %v4702 = vsel %vm4699, %v4698, %v4501
    %v4703 = vcombine.low %v4700, %v4701
    %v4705 = vunpack.c.l.s4 1983009808
    %v4706 = vunpack.c.0.s8 %v4705
    %v4707 = vlaneseq
    %v4708 = vshrl.u32 %v4707, 7
    %v4709 = vsub.s32 %v4706, %v4708
    %v4710 = vrot.slane %v4703, %v4709
    %v4712 = vunpack.c.l.s4 1983009808
    %v4713 = vunpack.c.0.s8 %v4712
    %v4714 = vlaneseq
    %v4715 = vshrl.u32 %v4714, 7
    %v4716 = vsub.s32 %v4713, %v4715
    %v4717 = vrot.slane %v4702, %v4716
    %v4718 = vcombine.low %v4710, %v4717
    %v4720 = vadd.f32 %v111, %v4718
    %vm4721 = vcmask 1041408
    %vm4722 = vcmask 1043458
    %vm4723 = vmor %vm4722, %vm4721
    %vm4724 = vcmask 521220
    %vm4725 = vmor %vm4724, %vm4723
    %4726 = vst.msk [vmem:[#allocation2] sm:$0x3f] %vm4725, %v4720
    // Predicated region
    $region26: #{tpu_custom_call.1} parent=1 // pred_check
      %p4727 = pneg %p21
    $region27: #{tpu_custom_call.1} parent=1 // pred_check_branch
      %4729 = sbr.rel (%p4727) target = $region29
    $region28: #{tpu_custom_call.1} parent=1 // pred_region
      %v4730 = vld [vmem:[#allocation2] sm:$0x3f]
      %v4731 = vmul.f32 %v4730, 0.015625
      %v4732 = vld [vmem:[%s1] sm:$0xff]
      %v4733 = vld [vmem:[%s1 + $0x8] sm:$0xff]
      %v4734 = vld [vmem:[%s1 + $0x10] sm:$0xff]
      %v4735 = vld [vmem:[%s1 + $0x18] sm:$0xff]
      %v4736 = vld [vmem:[%s1 + $0x20] sm:$0xff]
      %v4737 = vld [vmem:[%s1 + $0x28] sm:$0xff]
      %v4738 = vld [vmem:[%s1 + $0x30] sm:$0xff]
      %v4739 = vld [vmem:[%s1 + $0x38] sm:$0xff]
      %v4740 = vld [vmem:[%s1 + $0x40] sm:$0xff]
      %v4741 = vld [vmem:[%s1 + $0x48] sm:$0xff]
      %v4742 = vld [vmem:[%s1 + $0x50] sm:$0xff]
      %v4743 = vld [vmem:[%s1 + $0x58] sm:$0xff]
      %v4744 = vld [vmem:[%s1 + $0x60] sm:$0xff]
      %v4745 = vld [vmem:[%s1 + $0x68] sm:$0xff]
      %v4746 = vld [vmem:[%s1 + $0x70] sm:$0xff]
      %v4747 = vld [vmem:[%s1 + $0x78] sm:$0xff]
      %v4748 = vld [vmem:[%s1 + $0x80] sm:$0xff]
      %v4749 = vld [vmem:[%s1 + $0x88] sm:$0xff]
      %v4750 = vld [vmem:[%s1 + $0x90] sm:$0xff]
      %v4751 = vld [vmem:[%s1 + $0x98] sm:$0xff]
      %v4752 = vld [vmem:[%s1 + $0xa0] sm:$0xff]
      %v4753 = vld [vmem:[%s1 + $0xa8] sm:$0xff]
      %v4754 = vld [vmem:[%s1 + $0xb0] sm:$0xff]
      %v4755 = vld [vmem:[%s1 + $0xb8] sm:$0xff]
      %v4756 = vld [vmem:[%s1 + $0xc0] sm:$0xff]
      %v4757 = vld [vmem:[%s1 + $0xc8] sm:$0xff]
      %v4758 = vld [vmem:[%s1 + $0xd0] sm:$0xff]
      %v4759 = vld [vmem:[%s1 + $0xd8] sm:$0xff]
      %v4760 = vld [vmem:[%s1 + $0xe0] sm:$0xff]
      %v4761 = vld [vmem:[%s1 + $0xe8] sm:$0xff]
      %v4762 = vld [vmem:[%s1 + $0xf0] sm:$0xff]
      %v4763 = vld [vmem:[%s1 + $0xf8] sm:$0xff]
      %v4764 = vld [vmem:[%s1 + $0x100] sm:$0xff]
      %v4765 = vld [vmem:[%s1 + $0x108] sm:$0xff]
      %v4766 = vld [vmem:[%s1 + $0x110] sm:$0xff]
      %v4767 = vld [vmem:[%s1 + $0x118] sm:$0xff]
      %v4768 = vld [vmem:[%s1 + $0x120] sm:$0xff]
      %v4769 = vld [vmem:[%s1 + $0x128] sm:$0xff]
      %v4770 = vld [vmem:[%s1 + $0x130] sm:$0xff]
      %v4771 = vld [vmem:[%s1 + $0x138] sm:$0xff]
      %v4772 = vld [vmem:[%s2] sm:$0x1]
      %v4773 = vld [vmem:[%s3] sm:$0xff]
      %v4774 = vld [vmem:[%s3 + $0x8] sm:$0xff]
      %v4775 = vld [vmem:[%s3 + $0x10] sm:$0xff]
      %v4776 = vld [vmem:[%s3 + $0x18] sm:$0xff]
      %v4777 = vld [vmem:[%s3 + $0x20] sm:$0xff]
      %v4778 = vld [vmem:[%s3 + $0x28] sm:$0xff]
      %v4779 = vld [vmem:[%s3 + $0x30] sm:$0xff]
      %v4780 = vld [vmem:[%s3 + $0x38] sm:$0xff]
      %v4781 = vld [vmem:[%s3 + $0x40] sm:$0xff]
      %v4782 = vld [vmem:[%s3 + $0x48] sm:$0xff]
      %v4783 = vld [vmem:[%s3 + $0x50] sm:$0xff]
      %v4784 = vld [vmem:[%s3 + $0x58] sm:$0xff]
      %v4785 = vld [vmem:[%s3 + $0x60] sm:$0xff]
      %v4786 = vld [vmem:[%s3 + $0x68] sm:$0xff]
      %v4787 = vld [vmem:[%s3 + $0x70] sm:$0xff]
      %v4788 = vld [vmem:[%s3 + $0x78] sm:$0xff]
      %v4789 = vld [vmem:[%s4] sm:$0x1]
      %v4791 = vlaneseq
      %v4792 = vshrl.u32 %v4791, 7
      %v4793 = vsub.s32 0, %v4792
      %v4794 = vrot.slane %v4772, %v4793
      %v4797 = vcombine.high %v4731, %v4731
      %v4799 = vunpack.c.l.s4 1983009808
      %v4800 = vunpack.c.0.s8 %v4799
      %v4801 = vlaneseq
      %v4802 = vshrl.u32 %v4801, 7
      %v4803 = vsub.s32 %v4800, %v4802
      %v4804 = vrot.slane %v4731, %v4803
      %v4806 = vunpack.c.l.s4 1983009808
      %v4807 = vunpack.c.0.s8 %v4806
      %v4808 = vlaneseq
      %v4809 = vshrl.u32 %v4808, 7
      %v4810 = vsub.s32 %v4807, %v4809
      %v4811 = vrot.slane %v4797, %v4810
      %v4812 = vcombine.high %v4804, %v4804
      %v4815 = vsel %vm112, %v4811, 0
      %4817 = vmatprep.subr.mxu0 0.0
      %4818 = vmatpush1.msra.mxu0 %v4732
      %4819 = vmatprep.subr.mxu0 0.0
      %4820 = vmatpush1.msra.mxu0 %v4733
      %4821 = vmatprep.subr.mxu0 0.0
      %4822 = vmatpush1.msra.mxu0 %v4734
      %4823 = vmatprep.subr.mxu0 0.0
      %4824 = vmatpush1.msra.mxu0 %v4735
      %4825 = vmatprep.subr.mxu0 0.0
      %4826 = vmatpush1.msra.mxu0 %v4736
      %4827 = vmatprep.subr.mxu0 0.0
      %4828 = vmatpush1.msra.mxu0 %v4737
      %4829 = vmatprep.subr.mxu0 0.0
      %4830 = vmatpush1.msra.mxu0 %v4738
      %4831 = vmatprep.subr.mxu0 0.0
      %4832 = vmatpush1.msra.mxu0 %v4739
      %4833 = vmatprep.subr.mxu0 0.0
      %4834 = vmatpush1.msra.mxu0 %v4740
      %4835 = vmatprep.subr.mxu0 0.0
      %4836 = vmatpush1.msra.mxu0 %v4741
      %4837 = vmatprep.subr.mxu0 0.0
      %4838 = vmatpush1.msra.mxu0 %v4742
      %4839 = vmatprep.subr.mxu0 0.0
      %4840 = vmatpush1.msra.mxu0 %v4743
      %4841 = vmatprep.subr.mxu0 0.0
      %4842 = vmatpush1.msra.mxu0 %v4744
      %4843 = vmatprep.subr.mxu0 0.0
      %4844 = vmatpush1.msra.mxu0 %v4745
      %4845 = vmatprep.subr.mxu0 0.0
      %4846 = vmatpush1.msra.mxu0 %v4746
      %4847 = vmatprep.subr.mxu0 0.0
      %4848 = vmatpush1.msra.mxu0 %v4747
      %4849 = vmatprep.subr.mxu0 0.0
      %4850 = vmatpush1.msra.mxu0 %v4748
      %4851 = vmatprep.subr.mxu0 0.0
      %4852 = vmatpush1.msra.mxu0 %v4749
      %4853 = vmatprep.subr.mxu0 0.0
      %4854 = vmatpush1.msra.mxu0 %v4750
      %4855 = vmatprep.subr.mxu0 0.0
      %4856 = vmatpush1.msra.mxu0 %v4751
      %4857 = vmatprep.subr.mxu0 0.0
      %4858 = vmatpush1.msra.mxu0 %v4752
      %4859 = vmatprep.subr.mxu0 0.0
      %4860 = vmatpush1.msra.mxu0 %v4753
      %4861 = vmatprep.subr.mxu0 0.0
      %4862 = vmatpush1.msra.mxu0 %v4754
      %4863 = vmatprep.subr.mxu0 0.0
      %4864 = vmatpush1.msra.mxu0 %v4755
      %4865 = vmatprep.subr.mxu0 0.0
      %4866 = vmatpush1.msra.mxu0 %v4756
      %4867 = vmatprep.subr.mxu0 0.0
      %4868 = vmatpush1.msra.mxu0 %v4757
      %4869 = vmatprep.subr.mxu0 0.0
      %4870 = vmatpush1.msra.mxu0 %v4758
      %4871 = vmatprep.subr.mxu0 0.0
      %4872 = vmatpush1.msra.mxu0 %v4759
      %4873 = vmatprep.subr.mxu0 0.0
      %4874 = vmatpush1.msra.mxu0 %v4760
      %4875 = vmatprep.subr.mxu0 0.0
      %4876 = vmatpush1.msra.mxu0 %v4761
      %4877 = vmatprep.subr.mxu0 0.0
      %4878 = vmatpush1.msra.mxu0 %v4762
      %4879 = vmatprep.subr.mxu0 0.0
      %4880 = vmatpush1.msra.mxu0 %v4763
      %4881 = vmatprep.mubr.f32.mxu0 %v4812
      %4882 = vmatmul.mubr.f32.gmra.mrb[0].mxu0 %v4804
      %v4883 = vpop.f32.mrb[0].mxu0
      %v4884 = vadd.f32 %v4794, %v4883
      %v4885 = vpop.f32.mrb[0].mxu0
      %4886 = vdwg.mxu0
      %4887 = vmatprep.subr.mxu0 0.0
      %4888 = vmatpush1.msra.mxu0 %v4764
      %4889 = vmatprep.subr.mxu0 0.0
      %4890 = vmatpush1.msra.mxu0 %v4765
      %4891 = vmatprep.subr.mxu0 0.0
      %4892 = vmatpush1.msra.mxu0 %v4766
      %4893 = vmatprep.subr.mxu0 0.0
      %4894 = vmatpush1.msra.mxu0 %v4767
      %4895 = vmatprep.subr.mxu0 0.0
      %4896 = vmatpush1.msra.mxu0 %v4768
      %4897 = vmatprep.subr.mxu0 0.0
      %4898 = vmatpush1.msra.mxu0 %v4769
      %4899 = vmatprep.subr.mxu0 0.0
      %4900 = vmatpush1.msra.mxu0 %v4770
      %4901 = vmatprep.subr.mxu0 0.0
      %4902 = vmatpush1.msra.mxu0 %v4771
      %4903 = vmatprep.subr.mxu0 0.0
      %4904 = vmatpush1.msra.mxu0 0.0
      %4905 = vmatprep.subr.mxu0 0.0
      %4906 = vmatpush1.msra.mxu0 0.0
      %4907 = vmatprep.subr.mxu0 0.0
      %4908 = vmatpush1.msra.mxu0 0.0
      %4909 = vmatprep.subr.mxu0 0.0
      %4910 = vmatpush1.msra.mxu0 0.0
      %4911 = vmatprep.subr.mxu0 0.0
      %4912 = vmatpush1.msra.mxu0 0.0
      %4913 = vmatprep.subr.mxu0 0.0
      %4914 = vmatpush1.msra.mxu0 0.0
      %4915 = vmatprep.subr.mxu0 0.0
      %4916 = vmatpush1.msra.mxu0 0.0
      %4917 = vmatprep.subr.mxu0 0.0
      %4918 = vmatpush1.msra.mxu0 0.0
      %4919 = vmatprep.subr.mxu0 0.0
      %4920 = vmatpush1.msra.mxu0 0.0
      %4921 = vmatprep.subr.mxu0 0.0
      %4922 = vmatpush1.msra.mxu0 0.0
      %4923 = vmatprep.subr.mxu0 0.0
      %4924 = vmatpush1.msra.mxu0 0.0
      %4925 = vmatprep.subr.mxu0 0.0
      %4926 = vmatpush1.msra.mxu0 0.0
      %4927 = vmatprep.subr.mxu0 0.0
      %4928 = vmatpush1.msra.mxu0 0.0
      %4929 = vmatprep.subr.mxu0 0.0
      %4930 = vmatpush1.msra.mxu0 0.0
      %4931 = vmatprep.subr.mxu0 0.0
      %4932 = vmatpush1.msra.mxu0 0.0
      %4933 = vmatprep.subr.mxu0 0.0
      %4934 = vmatpush1.msra.mxu0 0.0
      %4935 = vmatprep.subr.mxu0 0.0
      %4936 = vmatpush1.msra.mxu0 0.0
      %4937 = vmatprep.subr.mxu0 0.0
      %4938 = vmatpush1.msra.mxu0 0.0
      %4939 = vmatprep.subr.mxu0 0.0
      %4940 = vmatpush1.msra.mxu0 0.0
      %4941 = vmatprep.subr.mxu0 0.0
      %4942 = vmatpush1.msra.mxu0 0.0
      %4943 = vmatprep.subr.mxu0 0.0
      %4944 = vmatpush1.msra.mxu0 0.0
      %4945 = vmatprep.subr.mxu0 0.0
      %4946 = vmatpush1.msra.mxu0 0.0
      %4947 = vmatprep.subr.mxu0 0.0
      %4948 = vmatpush1.msra.mxu0 0.0
      %4949 = vmatprep.subr.mxu0 0.0
      %4950 = vmatpush1.msra.mxu0 0.0
      %4951 = vmatprep.mubr.f32.mxu0 0.0
      %4952 = vmatmul.mubr.f32.gmra.mrb[0].mxu0 %v4815
      %v4953 = vpop.f32.mrb[0].mxu0
      %v4954 = vadd.f32 %v4884, %v4953
      %v4955 = vpop.f32.mrb[0].mxu0
      %4956 = vdwg.mxu0
      %v4957 = vmax.f32 %v4954, 0.0
      %v4959 = vlaneseq
      %v4960 = vshrl.u32 %v4959, 7
      %v4961 = vsub.s32 0, %v4960
      %v4962 = vrot.slane %v4789, %v4961
      %4964 = vmatprep.subr.mxu0 0.0
      %4965 = vmatpush1.msra.mxu0 %v4773
      %4966 = vmatprep.subr.mxu0 0.0
      %4967 = vmatpush1.msra.mxu0 %v4774
      %4968 = vmatprep.subr.mxu0 0.0
      %4969 = vmatpush1.msra.mxu0 %v4775
      %4970 = vmatprep.subr.mxu0 0.0
      %4971 = vmatpush1.msra.mxu0 %v4776
      %4972 = vmatprep.subr.mxu0 0.0
      %4973 = vmatpush1.msra.mxu0 %v4777
      %4974 = vmatprep.subr.mxu0 0.0
      %4975 = vmatpush1.msra.mxu0 %v4778
      %4976 = vmatprep.subr.mxu0 0.0
      %4977 = vmatpush1.msra.mxu0 %v4779
      %4978 = vmatprep.subr.mxu0 0.0
      %4979 = vmatpush1.msra.mxu0 %v4780
      %4980 = vmatprep.subr.mxu0 0.0
      %4981 = vmatpush1.msra.mxu0 %v4781
      %4982 = vmatprep.subr.mxu0 0.0
      %4983 = vmatpush1.msra.mxu0 %v4782
      %4984 = vmatprep.subr.mxu0 0.0
      %4985 = vmatpush1.msra.mxu0 %v4783
      %4986 = vmatprep.subr.mxu0 0.0
      %4987 = vmatpush1.msra.mxu0 %v4784
      %4988 = vmatprep.subr.mxu0 0.0
      %4989 = vmatpush1.msra.mxu0 %v4785
      %4990 = vmatprep.subr.mxu0 0.0
      %4991 = vmatpush1.msra.mxu0 %v4786
      %4992 = vmatprep.subr.mxu0 0.0
      %4993 = vmatpush1.msra.mxu0 %v4787
      %4994 = vmatprep.subr.mxu0 0.0
      %4995 = vmatpush1.msra.mxu0 %v4788
      %4996 = vmatprep.subr.mxu0 0.0
      %4997 = vmatpush1.msra.mxu0 0.0
      %4998 = vmatprep.subr.mxu0 0.0
      %4999 = vmatpush1.msra.mxu0 0.0
      %5000 = vmatprep.subr.mxu0 0.0
      %5001 = vmatpush1.msra.mxu0 0.0
      %5002 = vmatprep.subr.mxu0 0.0
      %5003 = vmatpush1.msra.mxu0 0.0
      %5004 = vmatprep.subr.mxu0 0.0
      %5005 = vmatpush1.msra.mxu0 0.0
      %5006 = vmatprep.subr.mxu0 0.0
      %5007 = vmatpush1.msra.mxu0 0.0
      %5008 = vmatprep.subr.mxu0 0.0
      %5009 = vmatpush1.msra.mxu0 0.0
      %5010 = vmatprep.subr.mxu0 0.0
      %5011 = vmatpush1.msra.mxu0 0.0
      %5012 = vmatprep.subr.mxu0 0.0
      %5013 = vmatpush1.msra.mxu0 0.0
      %5014 = vmatprep.subr.mxu0 0.0
      %5015 = vmatpush1.msra.mxu0 0.0
      %5016 = vmatprep.subr.mxu0 0.0
      %5017 = vmatpush1.msra.mxu0 0.0
      %5018 = vmatprep.subr.mxu0 0.0
      %5019 = vmatpush1.msra.mxu0 0.0
      %5020 = vmatprep.subr.mxu0 0.0
      %5021 = vmatpush1.msra.mxu0 0.0
      %5022 = vmatprep.subr.mxu0 0.0
      %5023 = vmatpush1.msra.mxu0 0.0
      %5024 = vmatprep.subr.mxu0 0.0
      %5025 = vmatpush1.msra.mxu0 0.0
      %5026 = vmatprep.subr.mxu0 0.0
      %5027 = vmatpush1.msra.mxu0 0.0
      %5028 = vmatprep.mubr.f32.mxu0 0.0
      %5029 = vmatmul.mubr.f32.gmra.mrb[0].mxu0 %v4957
      %v5030 = vpop.f32.mrb[0].mxu0
      %v5031 = vadd.f32 %v4962, %v5030
      %v5032 = vpop.f32.mrb[0].mxu0
      %5033 = vdwg.mxu0
      %v5036 = vunpack.c.l.s4 1966171168
      %v5037 = vunpack.c.0.s8 %v5036
      %v5038 = vlaneseq
      %v5039 = vshrl.u32 %v5038, 7
      %v5040 = vsub.s32 %v5037, %v5039
      %v5041 = vrot.slane %v5031, %v5040
      %v5042 = vcombine.high %v5041, %v5041
      %v5044 = vunpack.c.l.s4 1966171168
      %v5045 = vunpack.c.0.s8 %v5044
      %v5046 = vlaneseq
      %v5047 = vshrl.u32 %v5046, 7
      %v5048 = vsub.s32 %v5045, %v5047
      %v5049 = vrot.slane %v5041, %v5048
      %v5051 = vunpack.c.l.s4 1966171168
      %v5052 = vunpack.c.0.s8 %v5051
      %v5053 = vlaneseq
      %v5054 = vshrl.u32 %v5053, 7
      %v5055 = vsub.s32 %v5052, %v5054
      %v5056 = vrot.slane %v5042, %v5055
      %vm5059 = vcmask 16384
      %5060 = vst.msk [vmem:[#allocation3] sm:$0x1] %vm5059, %v5049
      %5061 = vst.msk [vmem:[#allocation3 + $0x1] sm:$0x1] %vm5059, %v5056
    $region29: #{tpu_custom_call.1} parent=1 // pred_fallthru
      _
    // Predicated region
    $region30: #{tpu_custom_call.1} parent=1 // pred_check
      _
    $region31: #{tpu_custom_call.1} parent=1 // pred_check_branch
      %5063 = sbr.rel (0) target = $region33
    $region32: #{tpu_custom_call.1} parent=1 // pred_region
      %s5065 = ssub.s32 32, 32
      %5066 = vsyncadd [#allocation4], %s5065
      %s5067 = sshll.u32 [#allocation3], 4
      %s5068 = int_to_ptr.vmem [resolvable:$true] %s5067
      %5073 = dma.vmem_to_hbm [thread:$0]  %s5068, 32, %s5, [#allocation4], 16, 16, 1
    $region33: #{tpu_custom_call.1} parent=1 // pred_fallthru
      _
    // Predicated region
    $region34: #{tpu_custom_call.1} parent=1 // pred_check
      _
    $region35: #{tpu_custom_call.1} parent=1 // pred_check_branch
      %5075 = sbr.rel (0) target = $region37
    $region36: #{tpu_custom_call.1} parent=1 // pred_region
      %5076 = dma.done [#allocation4], 32
    $region37: #{tpu_custom_call.1} parent=1 // pred_fallthru
      _
    %5077 = vsyncpa [#allocation4], 1

</llo_original>
